<compile_context>
chip_gen: v5e
topology: v5e:2x2
jax: 0.10.0
libtpu: 0.0.40
codegen_flags: <defaults>
</compile_context>

<pallas_src>
import jax
import jax.numpy as jnp
from jax import lax
from jax.experimental import pallas as pl
from jax.experimental.pallas import tpu as pltpu


LANES = 128                      # fused conv output channels (32 + 96)
MATMUL_DTYPE = jnp.bfloat16      # MXU operand dtype (accumulation stays f32)


def _round_up(v, m):
    return (v + m - 1) // m * m


def _pad_cols(v, target):
    """Zero-pad axis 1 of a (R, C, K) value up to `target` columns (layout-friendly
    so the following (R, target, K) -> (R*target, K) reshape is a pure re-tiling)."""
    r, c, k = v.shape
    if c == target:
        return v
    return jnp.concatenate([v, jnp.zeros((r, target - c, k), v.dtype)], axis=1)


# ------------------------------ fused kernel -------------------------------- #

def _make_inception_b_kernel(h, w, cin, c1, c2, ho, wo):
    wp = _round_up(w, 8)      # column padding for flattening the stride-1 stages
    wop = _round_up(wo, 8)    # column padding for flattening the stride-2 stage

    def kernel(x_ref, w1_ref, s1_ref, b1_ref, w2_ref, s2_ref, b2_ref,
               w3_ref, w4_ref, scat_ref, bcat_ref, o_ref,
               d1pad_ref, d2_ref, xev_ref, xod_ref, dev_ref, dod_ref):
        # ---- even/odd column split of x (single strided-dim VMEM loads) -------
        xev_ref[...] = x_ref[:, pl.ds(0, wo + 1, stride=2), :]     # cols 0,2,...,2*wo
        xod_ref[...] = x_ref[:, pl.ds(1, wo, stride=2), :]         # cols 1,3,...,2*wo-1

        # ---- branch3x3dbl_1: 1x1 conv as a single big GEMM over the image -----
        xflat = _pad_cols(x_ref[...], wp).reshape(h * wp, cin).astype(MATMUL_DTYPE)
        y1 = jnp.dot(xflat, w1_ref[...], preferred_element_type=jnp.float32)
        y1 = jnp.maximum(y1 * s1_ref[...] + b1_ref[...], 0.0)
        y1 = y1.reshape(h, wp, c1)[:, :w, :]
        # d1 lives in a VMEM scratch with a zero halo (pad=1 for the next conv)
        d1pad_ref[...] = jnp.zeros((h + 2, w + 2, c1), jnp.float32)
        d1pad_ref[1:h + 1, 1:w + 1, :] = y1

        # ---- branch3x3dbl_2: 3x3 pad=1 conv, kw folded into K, M = H*W --------
        acc2 = jnp.zeros((h * wp, c2), jnp.float32)
        for i in range(3):                                       # static unroll
            slab = d1pad_ref[i:i + h, :, :]                      # (h, w+2, c1)
            patch = jnp.concatenate(
                [slab[:, 0:w, :], slab[:, 1:w + 1, :], slab[:, 2:w + 2, :]],
                axis=-1)                                         # (h, w, 3*c1)
            patch = _pad_cols(patch, wp).reshape(h * wp, 3 * c1)
            acc2 = acc2 + jnp.dot(patch.astype(MATMUL_DTYPE), w2_ref[i],
                                  preferred_element_type=jnp.float32)
        y2 = jnp.maximum(acc2 * s2_ref[...] + b2_ref[...], 0.0)
        d2_ref[...] = y2.reshape(h, wp, c2)[:, :w, :]

        # even/odd column split of the d2 activation (VMEM only)
        dev_ref[...] = d2_ref[:, pl.ds(0, wo + 1, stride=2), :]
        dod_ref[...] = d2_ref[:, pl.ds(1, wo, stride=2), :]

        # ---- fused stride-2 stage: branch3x3 + branch3x3dbl_3 + max-pool ------
        # One 128-lane accumulator: branch3x3 -> lanes [0,32), dbl_3 -> [32,128).
        acc3 = jnp.zeros((ho * wop, LANES), jnp.float32)
        pmax = None
        for i in range(3):                                       # static unroll
            xe = xev_ref[pl.ds(i, ho, stride=2)]                 # (ho, wo+1, cin)
            xo = xod_ref[pl.ds(i, ho, stride=2)]                 # (ho, wo,   cin)
            t0, t1, t2 = xe[:, 0:wo, :], xo, xe[:, 1:wo + 1, :]  # taps j = 0,1,2

            # exact f32 max-pool re-using the rows already in registers
            rmax = jnp.maximum(jnp.maximum(t0, t1), t2)
            pmax = rmax if pmax is None else jnp.maximum(pmax, rmax)

            xp = jnp.concatenate([t0, t1, t2], axis=-1)          # (ho, wo, 3*cin)
            xp = _pad_cols(xp, wop).reshape(ho * wop, 3 * cin)
            acc3 = acc3 + jnp.dot(xp.astype(MATMUL_DTYPE), w3_ref[i],
                                  preferred_element_type=jnp.float32)

            de = dev_ref[pl.ds(i, ho, stride=2)]                 # (ho, wo+1, c2)
            do = dod_ref[pl.ds(i, ho, stride=2)]                 # (ho, wo,   c2)
            dp = jnp.concatenate([de[:, 0:wo, :], do, de[:, 1:wo + 1, :]], axis=-1)
            dp = _pad_cols(dp, wop).reshape(ho * wop, 3 * c2)
            acc3 = acc3 + jnp.dot(dp.astype(MATMUL_DTYPE), w4_ref[i],
                                  preferred_element_type=jnp.float32)

        y3 = jnp.maximum(acc3 * scat_ref[...] + bcat_ref[...], 0.0)
        y3 = y3.reshape(ho, wop, LANES)[:, :wo, :]
        o_ref[:, :, 0:LANES] = y3.astype(o_ref.dtype)            # [b3 | dbl] lanes
        o_ref[:, :, LANES:LANES + cin] = pmax.astype(o_ref.dtype)  # pool tail lanes

    return kernel


# --------------------------------- wrapper ----------------------------------- #

def _fold_kw_weight(w_oihw, lane_offset, lanes):
    """(O,C,KH,KW) -> (KH, KW*C, lanes) bf16 with O placed at lane_offset.
    K ordering matches the in-kernel patch concat: [tap j=0 | tap j=1 | tap j=2]."""
    o, c, kh, kw = w_oihw.shape
    assert lane_offset + o <= lanes
    wt = jnp.transpose(w_oihw, (2, 3, 1, 0)).reshape(kh, kw * c, o)
    wt = jnp.pad(wt, ((0, 0), (0, 0), (lane_offset, lanes - lane_offset - o)))
    return wt.astype(MATMUL_DTYPE)


def inception_b_forward(params, x_nchw):
    x = jnp.transpose(x_nchw, (0, 2, 3, 1)).astype(jnp.float32)   # NCHW -> NHWC once
    n, h, w, cin = x.shape
    ho, wo = (h - 3) // 2 + 1, (w - 3) // 2 + 1

    c1 = params["d1"]["w"].shape[0]            # 32
    c2 = params["d2"]["w"].shape[0]            # 64
    cb3 = params["b3"]["w"].shape[0]           # 32
    cd3 = params["d3"]["w"].shape[0]           # 96
    assert cb3 + cd3 == LANES

    w1 = jnp.transpose(params["d1"]["w"][:, :, 0, 0], (1, 0)).astype(MATMUL_DTYPE)
    s1 = params["d1"]["scale"].reshape(1, c1)
    b1 = params["d1"]["bias"].reshape(1, c1)
    w2 = _fold_kw_weight(params["d2"]["w"], 0, c2)                # (3, 3*c1, c2)
    s2 = params["d2"]["scale"].reshape(1, c2)
    b2 = params["d2"]["bias"].reshape(1, c2)
    w3 = _fold_kw_weight(params["b3"]["w"], 0, LANES)             # lanes [0, 32)
    w4 = _fold_kw_weight(params["d3"]["w"], cb3, LANES)           # lanes [32, 128)
    s_cat = jnp.concatenate([params["b3"]["scale"],
                             params["d3"]["scale"]]).reshape(1, LANES)
    b_cat = jnp.concatenate([params["b3"]["bias"],
                             params["d3"]["bias"]]).reshape(1, LANES)

    kernel = _make_inception_b_kernel(h, w, cin, c1, c2, ho, wo)

    out = pl.pallas_call(
        kernel,
        out_shape=jax.ShapeDtypeStruct((n, ho, wo, LANES + cin), jnp.float32),
        grid=(n,),
        in_specs=[
            pl.BlockSpec((None, h, w, cin), lambda b: (b, 0, 0, 0)),   # per-image x
            pl.BlockSpec((cin, c1), lambda b: (0, 0)),                 # resident weights
            pl.BlockSpec((1, c1), lambda b: (0, 0)),
            pl.BlockSpec((1, c1), lambda b: (0, 0)),
            pl.BlockSpec((3, 3 * c1, c2), lambda b: (0, 0, 0)),
            pl.BlockSpec((1, c2), lambda b: (0, 0)),
            pl.BlockSpec((1, c2), lambda b: (0, 0)),
            pl.BlockSpec((3, 3 * cin, LANES), lambda b: (0, 0, 0)),
            pl.BlockSpec((3, 3 * c2, LANES), lambda b: (0, 0, 0)),
            pl.BlockSpec((1, LANES), lambda b: (0, 0)),
            pl.BlockSpec((1, LANES), lambda b: (0, 0)),
        ],
        out_specs=pl.BlockSpec((None, ho, wo, LANES + cin), lambda b: (b, 0, 0, 0)),
        scratch_shapes=[
            pltpu.VMEM((h + 2, w + 2, c1), jnp.float32),   # d1 with zero halo
            pltpu.VMEM((h, w, c2), jnp.float32),           # d2
            pltpu.VMEM((h, wo + 1, cin), jnp.float32),     # x  even columns
            pltpu.VMEM((h, wo, cin), jnp.float32),         # x  odd  columns
            pltpu.VMEM((h, wo + 1, c2), jnp.float32),      # d2 even columns
            pltpu.VMEM((h, wo, c2), jnp.float32),          # d2 odd  columns
        ],
        compiler_params=pltpu.CompilerParams(
            dimension_semantics=("parallel",),             # batch axis -> megacore
            vmem_limit_bytes=64 * 1024 * 1024),
    )(x, w1, s1, b1, w2, s2, b2, w3, w4, s_cat, b_cat)

    # channels are already [branch3x3 | branch3x3dbl | branch_pool]; just go NCHW
    return jnp.transpose(out, (0, 3, 1, 2))


# --------------------------- parameter creation ----------------------------- #

def init_basic_conv(key, cin, cout, k):
    k1, k2, k3, k4, k5 = jax.random.split(key, 5)
    w = 0.1 * jax.random.normal(k1, (cout, cin, k, k), jnp.float32)
    gamma = 1.0 + 0.1 * jax.random.normal(k2, (cout,), jnp.float32)
    beta = 0.1 * jax.random.normal(k3, (cout,), jnp.float32)
    mean = 0.1 * jax.random.normal(k4, (cout,), jnp.float32)
    var = 1.0 + 0.1 * jax.random.uniform(k5, (cout,), jnp.float32)
    eps = 1e-3  # BatchNorm2d(eps=0.001)
    scale = gamma / jnp.sqrt(var + eps)
    bias = beta - mean * scale
    return {"w": w, "scale": scale, "bias": bias}


def init_inception_b(key, in_channels):
    k1, k2, k3, k4 = jax.random.split(key, 4)
    return {
        "b3": init_basic_conv(k1, in_channels, 32, 3),  # 3x3 stride 2
        "d1": init_basic_conv(k2, in_channels, 32, 1),  # 1x1
        "d2": init_basic_conv(k3, 32, 64, 3),           # 3x3 pad 1
        "d3": init_basic_conv(k4, 64, 96, 3),           # 3x3 stride 2
    }


# ------------------------------ pure-JAX refs -------------------------------- #

def _ref_conv_bn_relu(x_nhwc, w_oihw, scale, bias, stride, padding, op_dtype):
    y = lax.conv_general_dilated(
        x_nhwc.astype(op_dtype),
        jnp.transpose(w_oihw, (2, 3, 1, 0)).astype(op_dtype),
        window_strides=(stride, stride),
        padding=[(padding, padding), (padding, padding)],
        dimension_numbers=("NHWC", "HWIO", "NHWC"),
        preferred_element_type=jnp.float32)
    return jnp.maximum(y * scale + bias, 0.0)


def _ref_forward(params, x_nchw, op_dtype):
    x = jnp.transpose(x_nchw, (0, 2, 3, 1)).astype(jnp.float32)
    b3 = _ref_conv_bn_relu(x, params["b3"]["w"], params["b3"]["scale"],
                           params["b3"]["bias"], 2, 0, op_dtype)
    d = _ref_conv_bn_relu(x, params["d1"]["w"], params["d1"]["scale"],
                          params["d1"]["bias"], 1, 0, op_dtype)
    d = _ref_conv_bn_relu(d, params["d2"]["w"], params["d2"]["scale"],
                          params["d2"]["bias"], 1, 1, op_dtype)
    d = _ref_conv_bn_relu(d, params["d3"]["w"], params["d3"]["scale"],
                          params["d3"]["bias"], 2, 0, op_dtype)
    bp = lax.reduce_window(x, -jnp.inf, lax.max,
                           (1, 3, 3, 1), (1, 2, 2, 1), "VALID")
    out = jnp.concatenate([b3, d, bp], axis=-1)
    return jnp.transpose(out, (0, 3, 1, 2))


# ---------------------------------- main ------------------------------------- #

if __name__ == "__main__":
    key = jax.random.PRNGKey(0)
    kx, kp = jax.random.split(key)
    N, C, H, W = 2, 4, 16, 16
    x = jax.random.normal(kx, (N, C, H, W), jnp.float32)
    params = init_inception_b(kp, C)

    out = jax.block_until_ready(jax.jit(inception_b_forward)(params, x))
    assert out.shape == (N, 32 + 96 + C, 7, 7), out.shape

    # Check against a reference that uses the same bf16 MXU operands
    # (verifies indexing / accumulation / BN folding / pooling).
    ref_m = jax.block_until_ready(_ref_forward(params, x, MATMUL_DTYPE))
    err_m = float(jnp.max(jnp.abs(out - ref_m)))
    assert jnp.allclose(out, ref_m, atol=1e-2, rtol=1e-2), err_m

    # Loose check against the full-f32 reference (only bf16 operand rounding differs).
    ref_f = jax.block_until_ready(_ref_forward(params, x, jnp.float32))
    err_f = float(jnp.max(jnp.abs(out - ref_f)))
    assert jnp.allclose(out, ref_f, atol=5e-2, rtol=5e-2), err_f

    print("KERNEL_OK")
</pallas_src>

<mosaic_0001>
module attributes {stable_mosaic.version = 11 : i64} {
  func.func @kernel(%arg0: i32, %arg1: memref<1x16x16x4xf32, #tpu.memory_space<vmem>>, %arg2: memref<4x32xbf16, #tpu.memory_space<vmem>>, %arg3: memref<1x32xf32, #tpu.memory_space<vmem>>, %arg4: memref<1x32xf32, #tpu.memory_space<vmem>>, %arg5: memref<3x96x64xbf16, #tpu.memory_space<vmem>>, %arg6: memref<1x64xf32, #tpu.memory_space<vmem>>, %arg7: memref<1x64xf32, #tpu.memory_space<vmem>>, %arg8: memref<3x12x128xbf16, #tpu.memory_space<vmem>>, %arg9: memref<3x192x128xbf16, #tpu.memory_space<vmem>>, %arg10: memref<1x128xf32, #tpu.memory_space<vmem>>, %arg11: memref<1x128xf32, #tpu.memory_space<vmem>>, %arg12: memref<1x7x7x132xf32, #tpu.memory_space<vmem>>, %arg13: memref<18x18x32xf32, #tpu.memory_space<vmem>>, %arg14: memref<16x16x64xf32, #tpu.memory_space<vmem>>, %arg15: memref<16x8x4xf32, #tpu.memory_space<vmem>>, %arg16: memref<16x7x4xf32, #tpu.memory_space<vmem>>, %arg17: memref<16x8x64xf32, #tpu.memory_space<vmem>>, %arg18: memref<16x7x64xf32, #tpu.memory_space<vmem>>) attributes {dimension_semantics = [#tpu.dimension_semantics<parallel>], iteration_bounds = array<i64: 2>, scalar_prefetch = 0 : i64, scratch_operands = 6 : i64, tpu.core_type = #tpu.core_type<tc>, window_params = [{transform_indices = @transform_0, window_bounds = array<i64: 1, 16, 16, 4>}, {pipeline_mode = #tpu.pipeline_mode<synchronous>, transform_indices = @transform_1, window_bounds = array<i64: 4, 32>}, {pipeline_mode = #tpu.pipeline_mode<synchronous>, transform_indices = @transform_2, window_bounds = array<i64: 1, 32>}, {pipeline_mode = #tpu.pipeline_mode<synchronous>, transform_indices = @transform_3, window_bounds = array<i64: 1, 32>}, {pipeline_mode = #tpu.pipeline_mode<synchronous>, transform_indices = @transform_4, window_bounds = array<i64: 3, 96, 64>}, {pipeline_mode = #tpu.pipeline_mode<synchronous>, transform_indices = @transform_5, window_bounds = array<i64: 1, 64>}, {pipeline_mode = #tpu.pipeline_mode<synchronous>, transform_indices = @transform_6, window_bounds = array<i64: 1, 64>}, {pipeline_mode = #tpu.pipeline_mode<synchronous>, transform_indices = @transform_7, window_bounds = array<i64: 3, 12, 128>}, {pipeline_mode = #tpu.pipeline_mode<synchronous>, transform_indices = @transform_8, window_bounds = array<i64: 3, 192, 128>}, {pipeline_mode = #tpu.pipeline_mode<synchronous>, transform_indices = @transform_9, window_bounds = array<i64: 1, 128>}, {pipeline_mode = #tpu.pipeline_mode<synchronous>, transform_indices = @transform_10, window_bounds = array<i64: 1, 128>}, {transform_indices = @transform_11, window_bounds = array<i64: 1, 7, 7, 132>}]} {
    %c0 = arith.constant 0 : index
    %c0_0 = arith.constant 0 : index
    %c0_1 = arith.constant 0 : index
    %c0_2 = arith.constant 0 : index
    %0 = tpu.strided_load %arg1[%c0, %c0_0, %c0_1, %c0_2] {strides = array<i32: 1, 1, 2, 1>} : memref<1x16x16x4xf32, #tpu.memory_space<vmem>>, vector<1x16x8x4xf32>
    %1 = vector.shape_cast %0 : vector<1x16x8x4xf32> to vector<16x8x4xf32>
    %c0_3 = arith.constant 0 : index
    %c0_4 = arith.constant 0 : index
    %c0_5 = arith.constant 0 : index
    %2 = vector.load %arg15[%c0_3, %c0_4, %c0_5] : memref<16x8x4xf32, #tpu.memory_space<vmem>>, vector<16x8x4xf32>
    tpu.vector_store %arg15[%c0_3, %c0_4, %c0_5], %1 {strides = array<i32>} : memref<16x8x4xf32, #tpu.memory_space<vmem>>, vector<16x8x4xf32>,
    %c0_6 = arith.constant 0 : index
    %c0_7 = arith.constant 0 : index
    %c1 = arith.constant 1 : index
    %c0_8 = arith.constant 0 : index
    %3 = tpu.strided_load %arg1[%c0_6, %c0_7, %c1, %c0_8] {strides = array<i32: 1, 1, 2, 1>} : memref<1x16x16x4xf32, #tpu.memory_space<vmem>>, vector<1x16x7x4xf32>
    %4 = vector.shape_cast %3 : vector<1x16x7x4xf32> to vector<16x7x4xf32>
    %c0_9 = arith.constant 0 : index
    %c0_10 = arith.constant 0 : index
    %c0_11 = arith.constant 0 : index
    %5 = vector.load %arg16[%c0_9, %c0_10, %c0_11] : memref<16x7x4xf32, #tpu.memory_space<vmem>>, vector<16x7x4xf32>
    tpu.vector_store %arg16[%c0_9, %c0_10, %c0_11], %4 {strides = array<i32>} : memref<16x7x4xf32, #tpu.memory_space<vmem>>, vector<16x7x4xf32>,
    %c0_12 = arith.constant 0 : index
    %c0_13 = arith.constant 0 : index
    %c0_14 = arith.constant 0 : index
    %c0_15 = arith.constant 0 : index
    %6 = vector.load %arg1[%c0_12, %c0_13, %c0_14, %c0_15] : memref<1x16x16x4xf32, #tpu.memory_space<vmem>>, vector<1x16x16x4xf32>
    %7 = vector.shape_cast %6 : vector<1x16x16x4xf32> to vector<16x16x4xf32>
    %8 = vector.shape_cast %7 : vector<16x16x4xf32> to vector<256x4xf32>
    %9 = arith.truncf %8 : vector<256x4xf32> to vector<256x4xbf16>
    %c0_16 = arith.constant 0 : index
    %c0_17 = arith.constant 0 : index
    %10 = vector.load %arg2[%c0_16, %c0_17] : memref<4x32xbf16, #tpu.memory_space<vmem>>, vector<4x32xbf16>
    %cst = arith.constant dense<0.000000e+00> : vector<256x32xf32>
    %11 = tpu.matmul %9, %10, %cst {dimension_numbers = #tpu.dot_dimension_numbers<[1], [0], [0], [1], [0, 0, 1, 1], [], []>} : vector<256x4xbf16>, vector<4x32xbf16>, vector<256x32xf32> -> vector<256x32xf32>
    %c0_18 = arith.constant 0 : index
    %c0_19 = arith.constant 0 : index
    %12 = vector.load %arg3[%c0_18, %c0_19] : memref<1x32xf32, #tpu.memory_space<vmem>>, vector<1x32xf32>
    %13 = vector.broadcast %12 : vector<1x32xf32> to vector<256x32xf32>
    %14 = arith.mulf %11, %13 : vector<256x32xf32>
    %c0_20 = arith.constant 0 : index
    %c0_21 = arith.constant 0 : index
    %15 = vector.load %arg4[%c0_20, %c0_21] : memref<1x32xf32, #tpu.memory_space<vmem>>, vector<1x32xf32>
    %16 = vector.broadcast %15 : vector<1x32xf32> to vector<256x32xf32>
    %17 = arith.addf %14, %16 : vector<256x32xf32>
    %cst_22 = arith.constant 0.000000e+00 : f32
    %18 = vector.broadcast %cst_22 : f32 to vector<256x32xf32>
    %19 = arith.maximumf %17, %18 : vector<256x32xf32>
    %20 = vector.shape_cast %19 : vector<256x32xf32> to vector<16x16x32xf32>
    %cst_23 = arith.constant 0.000000e+00 : f32
    %21 = vector.broadcast %cst_23 : f32 to vector<18x18x32xf32>
    %c0_24 = arith.constant 0 : index
    %c0_25 = arith.constant 0 : index
    %c0_26 = arith.constant 0 : index
    %22 = vector.load %arg13[%c0_24, %c0_25, %c0_26] : memref<18x18x32xf32, #tpu.memory_space<vmem>>, vector<18x18x32xf32>
    tpu.vector_store %arg13[%c0_24, %c0_25, %c0_26], %21 {strides = array<i32>} : memref<18x18x32xf32, #tpu.memory_space<vmem>>, vector<18x18x32xf32>,
    %c1_27 = arith.constant 1 : index
    %c1_28 = arith.constant 1 : index
    %c0_29 = arith.constant 0 : index
    %23 = vector.load %arg13[%c1_27, %c1_28, %c0_29] : memref<18x18x32xf32, #tpu.memory_space<vmem>>, vector<16x16x32xf32>
    tpu.vector_store %arg13[%c1_27, %c1_28, %c0_29], %20 {strides = array<i32>} : memref<18x18x32xf32, #tpu.memory_space<vmem>>, vector<16x16x32xf32>,
    %cst_30 = arith.constant 0.000000e+00 : f32
    %24 = vector.broadcast %cst_30 : f32 to vector<256x64xf32>
    %c0_31 = arith.constant 0 : index
    %c0_32 = arith.constant 0 : index
    %c0_33 = arith.constant 0 : index
    %25 = vector.load %arg13[%c0_31, %c0_32, %c0_33] : memref<18x18x32xf32, #tpu.memory_space<vmem>>, vector<16x18x32xf32>
    %26 = vector.extract_strided_slice %25 {offsets = [0, 0, 0], sizes = [16, 16, 32], strides = [1, 1, 1]} : vector<16x18x32xf32> to vector<16x16x32xf32>
    %27 = vector.extract_strided_slice %25 {offsets = [0, 1, 0], sizes = [16, 16, 32], strides = [1, 1, 1]} : vector<16x18x32xf32> to vector<16x16x32xf32>
    %28 = vector.extract_strided_slice %25 {offsets = [0, 2, 0], sizes = [16, 16, 32], strides = [1, 1, 1]} : vector<16x18x32xf32> to vector<16x16x32xf32>
    %29 = tpu.concatenate %26, %27, %28 in 2 : vector<16x16x32xf32>, vector<16x16x32xf32>, vector<16x16x32xf32> -> vector<16x16x96xf32>
    %30 = vector.shape_cast %29 : vector<16x16x96xf32> to vector<256x96xf32>
    %31 = arith.truncf %30 : vector<256x96xf32> to vector<256x96xbf16>
    %c0_34 = arith.constant 0 : index
    %c0_35 = arith.constant 0 : index
    %c0_36 = arith.constant 0 : index
    %32 = vector.load %arg5[%c0_34, %c0_35, %c0_36] : memref<3x96x64xbf16, #tpu.memory_space<vmem>>, vector<1x96x64xbf16>
    %33 = vector.shape_cast %32 : vector<1x96x64xbf16> to vector<96x64xbf16>
    %cst_37 = arith.constant dense<0.000000e+00> : vector<256x64xf32>
    %34 = tpu.matmul %31, %33, %cst_37 {dimension_numbers = #tpu.dot_dimension_numbers<[1], [0], [0], [1], [0, 0, 1, 1], [], []>} : vector<256x96xbf16>, vector<96x64xbf16>, vector<256x64xf32> -> vector<256x64xf32>
    %35 = arith.addf %24, %34 : vector<256x64xf32>
    %c1_38 = arith.constant 1 : index
    %c0_39 = arith.constant 0 : index
    %c0_40 = arith.constant 0 : index
    %36 = vector.load %arg13[%c1_38, %c0_39, %c0_40] : memref<18x18x32xf32, #tpu.memory_space<vmem>>, vector<16x18x32xf32>
    %37 = vector.extract_strided_slice %36 {offsets = [0, 0, 0], sizes = [16, 16, 32], strides = [1, 1, 1]} : vector<16x18x32xf32> to vector<16x16x32xf32>
    %38 = vector.extract_strided_slice %36 {offsets = [0, 1, 0], sizes = [16, 16, 32], strides = [1, 1, 1]} : vector<16x18x32xf32> to vector<16x16x32xf32>
    %39 = vector.extract_strided_slice %36 {offsets = [0, 2, 0], sizes = [16, 16, 32], strides = [1, 1, 1]} : vector<16x18x32xf32> to vector<16x16x32xf32>
    %40 = tpu.concatenate %37, %38, %39 in 2 : vector<16x16x32xf32>, vector<16x16x32xf32>, vector<16x16x32xf32> -> vector<16x16x96xf32>
    %41 = vector.shape_cast %40 : vector<16x16x96xf32> to vector<256x96xf32>
    %42 = arith.truncf %41 : vector<256x96xf32> to vector<256x96xbf16>
    %c1_41 = arith.constant 1 : index
    %c0_42 = arith.constant 0 : index
    %c0_43 = arith.constant 0 : index
    %43 = vector.load %arg5[%c1_41, %c0_42, %c0_43] : memref<3x96x64xbf16, #tpu.memory_space<vmem>>, vector<1x96x64xbf16>
    %44 = vector.shape_cast %43 : vector<1x96x64xbf16> to vector<96x64xbf16>
    %cst_44 = arith.constant dense<0.000000e+00> : vector<256x64xf32>
    %45 = tpu.matmul %42, %44, %cst_44 {dimension_numbers = #tpu.dot_dimension_numbers<[1], [0], [0], [1], [0, 0, 1, 1], [], []>} : vector<256x96xbf16>, vector<96x64xbf16>, vector<256x64xf32> -> vector<256x64xf32>
    %46 = arith.addf %35, %45 : vector<256x64xf32>
    %c2 = arith.constant 2 : index
    %c0_45 = arith.constant 0 : index
    %c0_46 = arith.constant 0 : index
    %47 = vector.load %arg13[%c2, %c0_45, %c0_46] : memref<18x18x32xf32, #tpu.memory_space<vmem>>, vector<16x18x32xf32>
    %48 = vector.extract_strided_slice %47 {offsets = [0, 0, 0], sizes = [16, 16, 32], strides = [1, 1, 1]} : vector<16x18x32xf32> to vector<16x16x32xf32>
    %49 = vector.extract_strided_slice %47 {offsets = [0, 1, 0], sizes = [16, 16, 32], strides = [1, 1, 1]} : vector<16x18x32xf32> to vector<16x16x32xf32>
    %50 = vector.extract_strided_slice %47 {offsets = [0, 2, 0], sizes = [16, 16, 32], strides = [1, 1, 1]} : vector<16x18x32xf32> to vector<16x16x32xf32>
    %51 = tpu.concatenate %48, %49, %50 in 2 : vector<16x16x32xf32>, vector<16x16x32xf32>, vector<16x16x32xf32> -> vector<16x16x96xf32>
    %52 = vector.shape_cast %51 : vector<16x16x96xf32> to vector<256x96xf32>
    %53 = arith.truncf %52 : vector<256x96xf32> to vector<256x96xbf16>
    %c2_47 = arith.constant 2 : index
    %c0_48 = arith.constant 0 : index
    %c0_49 = arith.constant 0 : index
    %54 = vector.load %arg5[%c2_47, %c0_48, %c0_49] : memref<3x96x64xbf16, #tpu.memory_space<vmem>>, vector<1x96x64xbf16>
    %55 = vector.shape_cast %54 : vector<1x96x64xbf16> to vector<96x64xbf16>
    %cst_50 = arith.constant dense<0.000000e+00> : vector<256x64xf32>
    %56 = tpu.matmul %53, %55, %cst_50 {dimension_numbers = #tpu.dot_dimension_numbers<[1], [0], [0], [1], [0, 0, 1, 1], [], []>} : vector<256x96xbf16>, vector<96x64xbf16>, vector<256x64xf32> -> vector<256x64xf32>
    %57 = arith.addf %46, %56 : vector<256x64xf32>
    %c0_51 = arith.constant 0 : index
    %c0_52 = arith.constant 0 : index
    %58 = vector.load %arg6[%c0_51, %c0_52] : memref<1x64xf32, #tpu.memory_space<vmem>>, vector<1x64xf32>
    %59 = vector.broadcast %58 : vector<1x64xf32> to vector<256x64xf32>
    %60 = arith.mulf %57, %59 : vector<256x64xf32>
    %c0_53 = arith.constant 0 : index
    %c0_54 = arith.constant 0 : index
    %61 = vector.load %arg7[%c0_53, %c0_54] : memref<1x64xf32, #tpu.memory_space<vmem>>, vector<1x64xf32>
    %62 = vector.broadcast %61 : vector<1x64xf32> to vector<256x64xf32>
    %63 = arith.addf %60, %62 : vector<256x64xf32>
    %cst_55 = arith.constant 0.000000e+00 : f32
    %64 = vector.broadcast %cst_55 : f32 to vector<256x64xf32>
    %65 = arith.maximumf %63, %64 : vector<256x64xf32>
    %66 = vector.shape_cast %65 : vector<256x64xf32> to vector<16x16x64xf32>
    %c0_56 = arith.constant 0 : index
    %c0_57 = arith.constant 0 : index
    %c0_58 = arith.constant 0 : index
    %67 = vector.load %arg14[%c0_56, %c0_57, %c0_58] : memref<16x16x64xf32, #tpu.memory_space<vmem>>, vector<16x16x64xf32>
    tpu.vector_store %arg14[%c0_56, %c0_57, %c0_58], %66 {strides = array<i32>} : memref<16x16x64xf32, #tpu.memory_space<vmem>>, vector<16x16x64xf32>,
    %c0_59 = arith.constant 0 : index
    %c0_60 = arith.constant 0 : index
    %c0_61 = arith.constant 0 : index
    %68 = tpu.strided_load %arg14[%c0_59, %c0_60, %c0_61] {strides = array<i32: 1, 2, 1>} : memref<16x16x64xf32, #tpu.memory_space<vmem>>, vector<16x8x64xf32>
    %c0_62 = arith.constant 0 : index
    %c0_63 = arith.constant 0 : index
    %c0_64 = arith.constant 0 : index
    %69 = vector.load %arg17[%c0_62, %c0_63, %c0_64] : memref<16x8x64xf32, #tpu.memory_space<vmem>>, vector<16x8x64xf32>
    tpu.vector_store %arg17[%c0_62, %c0_63, %c0_64], %68 {strides = array<i32>} : memref<16x8x64xf32, #tpu.memory_space<vmem>>, vector<16x8x64xf32>,
    %c0_65 = arith.constant 0 : index
    %c1_66 = arith.constant 1 : index
    %c0_67 = arith.constant 0 : index
    %70 = tpu.strided_load %arg14[%c0_65, %c1_66, %c0_67] {strides = array<i32: 1, 2, 1>} : memref<16x16x64xf32, #tpu.memory_space<vmem>>, vector<16x7x64xf32>
    %c0_68 = arith.constant 0 : index
    %c0_69 = arith.constant 0 : index
    %c0_70 = arith.constant 0 : index
    %71 = vector.load %arg18[%c0_68, %c0_69, %c0_70] : memref<16x7x64xf32, #tpu.memory_space<vmem>>, vector<16x7x64xf32>
    tpu.vector_store %arg18[%c0_68, %c0_69, %c0_70], %70 {strides = array<i32>} : memref<16x7x64xf32, #tpu.memory_space<vmem>>, vector<16x7x64xf32>,
    %cst_71 = arith.constant 0.000000e+00 : f32
    %72 = vector.broadcast %cst_71 : f32 to vector<56x128xf32>
    %c0_72 = arith.constant 0 : index
    %c0_73 = arith.constant 0 : index
    %c0_74 = arith.constant 0 : index
    %73 = tpu.strided_load %arg15[%c0_72, %c0_73, %c0_74] {strides = array<i32: 2, 1, 1>} : memref<16x8x4xf32, #tpu.memory_space<vmem>>, vector<7x8x4xf32>
    %c0_75 = arith.constant 0 : index
    %c0_76 = arith.constant 0 : index
    %c0_77 = arith.constant 0 : index
    %74 = tpu.strided_load %arg16[%c0_75, %c0_76, %c0_77] {strides = array<i32: 2, 1, 1>} : memref<16x7x4xf32, #tpu.memory_space<vmem>>, vector<7x7x4xf32>
    %75 = vector.extract_strided_slice %73 {offsets = [0, 0, 0], sizes = [7, 7, 4], strides = [1, 1, 1]} : vector<7x8x4xf32> to vector<7x7x4xf32>
    %76 = vector.extract_strided_slice %73 {offsets = [0, 1, 0], sizes = [7, 7, 4], strides = [1, 1, 1]} : vector<7x8x4xf32> to vector<7x7x4xf32>
    %77 = arith.maximumf %75, %74 : vector<7x7x4xf32>
    %78 = arith.maximumf %77, %76 : vector<7x7x4xf32>
    %79 = tpu.concatenate %75, %74, %76 in 2 : vector<7x7x4xf32>, vector<7x7x4xf32>, vector<7x7x4xf32> -> vector<7x7x12xf32>
    %cst_78 = arith.constant 0.000000e+00 : f32
    %80 = vector.broadcast %cst_78 : f32 to vector<7x1x12xf32>
    %81 = tpu.concatenate %79, %80 in 1 : vector<7x7x12xf32>, vector<7x1x12xf32> -> vector<7x8x12xf32>
    %82 = vector.shape_cast %81 : vector<7x8x12xf32> to vector<56x12xf32>
    %83 = arith.truncf %82 : vector<56x12xf32> to vector<56x12xbf16>
    %c0_79 = arith.constant 0 : index
    %c0_80 = arith.constant 0 : index
    %c0_81 = arith.constant 0 : index
    %84 = vector.load %arg8[%c0_79, %c0_80, %c0_81] : memref<3x12x128xbf16, #tpu.memory_space<vmem>>, vector<1x12x128xbf16>
    %85 = vector.shape_cast %84 : vector<1x12x128xbf16> to vector<12x128xbf16>
    %cst_82 = arith.constant dense<0.000000e+00> : vector<56x128xf32>
    %86 = tpu.matmul %83, %85, %cst_82 {dimension_numbers = #tpu.dot_dimension_numbers<[1], [0], [0], [1], [0, 0, 1, 1], [], []>} : vector<56x12xbf16>, vector<12x128xbf16>, vector<56x128xf32> -> vector<56x128xf32>
    %87 = arith.addf %72, %86 : vector<56x128xf32>
    %c0_83 = arith.constant 0 : index
    %c0_84 = arith.constant 0 : index
    %c0_85 = arith.constant 0 : index
    %88 = tpu.strided_load %arg17[%c0_83, %c0_84, %c0_85] {strides = array<i32: 2, 1, 1>} : memref<16x8x64xf32, #tpu.memory_space<vmem>>, vector<7x8x64xf32>
    %c0_86 = arith.constant 0 : index
    %c0_87 = arith.constant 0 : index
    %c0_88 = arith.constant 0 : index
    %89 = tpu.strided_load %arg18[%c0_86, %c0_87, %c0_88] {strides = array<i32: 2, 1, 1>} : memref<16x7x64xf32, #tpu.memory_space<vmem>>, vector<7x7x64xf32>
    %90 = vector.extract_strided_slice %88 {offsets = [0, 0, 0], sizes = [7, 7, 64], strides = [1, 1, 1]} : vector<7x8x64xf32> to vector<7x7x64xf32>
    %91 = vector.extract_strided_slice %88 {offsets = [0, 1, 0], sizes = [7, 7, 64], strides = [1, 1, 1]} : vector<7x8x64xf32> to vector<7x7x64xf32>
    %92 = tpu.concatenate %90, %89, %91 in 2 : vector<7x7x64xf32>, vector<7x7x64xf32>, vector<7x7x64xf32> -> vector<7x7x192xf32>
    %cst_89 = arith.constant 0.000000e+00 : f32
    %93 = vector.broadcast %cst_89 : f32 to vector<7x1x192xf32>
    %94 = tpu.concatenate %92, %93 in 1 : vector<7x7x192xf32>, vector<7x1x192xf32> -> vector<7x8x192xf32>
    %95 = vector.shape_cast %94 : vector<7x8x192xf32> to vector<56x192xf32>
    %96 = arith.truncf %95 : vector<56x192xf32> to vector<56x192xbf16>
    %c0_90 = arith.constant 0 : index
    %c0_91 = arith.constant 0 : index
    %c0_92 = arith.constant 0 : index
    %97 = vector.load %arg9[%c0_90, %c0_91, %c0_92] : memref<3x192x128xbf16, #tpu.memory_space<vmem>>, vector<1x192x128xbf16>
    %98 = vector.shape_cast %97 : vector<1x192x128xbf16> to vector<192x128xbf16>
    %cst_93 = arith.constant dense<0.000000e+00> : vector<56x128xf32>
    %99 = tpu.matmul %96, %98, %cst_93 {dimension_numbers = #tpu.dot_dimension_numbers<[1], [0], [0], [1], [0, 0, 1, 1], [], []>} : vector<56x192xbf16>, vector<192x128xbf16>, vector<56x128xf32> -> vector<56x128xf32>
    %100 = arith.addf %87, %99 : vector<56x128xf32>
    %c1_94 = arith.constant 1 : index
    %c0_95 = arith.constant 0 : index
    %c0_96 = arith.constant 0 : index
    %101 = tpu.strided_load %arg15[%c1_94, %c0_95, %c0_96] {strides = array<i32: 2, 1, 1>} : memref<16x8x4xf32, #tpu.memory_space<vmem>>, vector<7x8x4xf32>
    %c1_97 = arith.constant 1 : index
    %c0_98 = arith.constant 0 : index
    %c0_99 = arith.constant 0 : index
    %102 = tpu.strided_load %arg16[%c1_97, %c0_98, %c0_99] {strides = array<i32: 2, 1, 1>} : memref<16x7x4xf32, #tpu.memory_space<vmem>>, vector<7x7x4xf32>
    %103 = vector.extract_strided_slice %101 {offsets = [0, 0, 0], sizes = [7, 7, 4], strides = [1, 1, 1]} : vector<7x8x4xf32> to vector<7x7x4xf32>
    %104 = vector.extract_strided_slice %101 {offsets = [0, 1, 0], sizes = [7, 7, 4], strides = [1, 1, 1]} : vector<7x8x4xf32> to vector<7x7x4xf32>
    %105 = arith.maximumf %103, %102 : vector<7x7x4xf32>
    %106 = arith.maximumf %105, %104 : vector<7x7x4xf32>
    %107 = arith.maximumf %78, %106 : vector<7x7x4xf32>
    %108 = tpu.concatenate %103, %102, %104 in 2 : vector<7x7x4xf32>, vector<7x7x4xf32>, vector<7x7x4xf32> -> vector<7x7x12xf32>
    %cst_100 = arith.constant 0.000000e+00 : f32
    %109 = vector.broadcast %cst_100 : f32 to vector<7x1x12xf32>
    %110 = tpu.concatenate %108, %109 in 1 : vector<7x7x12xf32>, vector<7x1x12xf32> -> vector<7x8x12xf32>
    %111 = vector.shape_cast %110 : vector<7x8x12xf32> to vector<56x12xf32>
    %112 = arith.truncf %111 : vector<56x12xf32> to vector<56x12xbf16>
    %c1_101 = arith.constant 1 : index
    %c0_102 = arith.constant 0 : index
    %c0_103 = arith.constant 0 : index
    %113 = vector.load %arg8[%c1_101, %c0_102, %c0_103] : memref<3x12x128xbf16, #tpu.memory_space<vmem>>, vector<1x12x128xbf16>
    %114 = vector.shape_cast %113 : vector<1x12x128xbf16> to vector<12x128xbf16>
    %cst_104 = arith.constant dense<0.000000e+00> : vector<56x128xf32>
    %115 = tpu.matmul %112, %114, %cst_104 {dimension_numbers = #tpu.dot_dimension_numbers<[1], [0], [0], [1], [0, 0, 1, 1], [], []>} : vector<56x12xbf16>, vector<12x128xbf16>, vector<56x128xf32> -> vector<56x128xf32>
    %116 = arith.addf %100, %115 : vector<56x128xf32>
    %c1_105 = arith.constant 1 : index
    %c0_106 = arith.constant 0 : index
    %c0_107 = arith.constant 0 : index
    %117 = tpu.strided_load %arg17[%c1_105, %c0_106, %c0_107] {strides = array<i32: 2, 1, 1>} : memref<16x8x64xf32, #tpu.memory_space<vmem>>, vector<7x8x64xf32>
    %c1_108 = arith.constant 1 : index
    %c0_109 = arith.constant 0 : index
    %c0_110 = arith.constant 0 : index
    %118 = tpu.strided_load %arg18[%c1_108, %c0_109, %c0_110] {strides = array<i32: 2, 1, 1>} : memref<16x7x64xf32, #tpu.memory_space<vmem>>, vector<7x7x64xf32>
    %119 = vector.extract_strided_slice %117 {offsets = [0, 0, 0], sizes = [7, 7, 64], strides = [1, 1, 1]} : vector<7x8x64xf32> to vector<7x7x64xf32>
    %120 = vector.extract_strided_slice %117 {offsets = [0, 1, 0], sizes = [7, 7, 64], strides = [1, 1, 1]} : vector<7x8x64xf32> to vector<7x7x64xf32>
    %121 = tpu.concatenate %119, %118, %120 in 2 : vector<7x7x64xf32>, vector<7x7x64xf32>, vector<7x7x64xf32> -> vector<7x7x192xf32>
    %cst_111 = arith.constant 0.000000e+00 : f32
    %122 = vector.broadcast %cst_111 : f32 to vector<7x1x192xf32>
    %123 = tpu.concatenate %121, %122 in 1 : vector<7x7x192xf32>, vector<7x1x192xf32> -> vector<7x8x192xf32>
    %124 = vector.shape_cast %123 : vector<7x8x192xf32> to vector<56x192xf32>
    %125 = arith.truncf %124 : vector<56x192xf32> to vector<56x192xbf16>
    %c1_112 = arith.constant 1 : index
    %c0_113 = arith.constant 0 : index
    %c0_114 = arith.constant 0 : index
    %126 = vector.load %arg9[%c1_112, %c0_113, %c0_114] : memref<3x192x128xbf16, #tpu.memory_space<vmem>>, vector<1x192x128xbf16>
    %127 = vector.shape_cast %126 : vector<1x192x128xbf16> to vector<192x128xbf16>
    %cst_115 = arith.constant dense<0.000000e+00> : vector<56x128xf32>
    %128 = tpu.matmul %125, %127, %cst_115 {dimension_numbers = #tpu.dot_dimension_numbers<[1], [0], [0], [1], [0, 0, 1, 1], [], []>} : vector<56x192xbf16>, vector<192x128xbf16>, vector<56x128xf32> -> vector<56x128xf32>
    %129 = arith.addf %116, %128 : vector<56x128xf32>
    %c2_116 = arith.constant 2 : index
    %c0_117 = arith.constant 0 : index
    %c0_118 = arith.constant 0 : index
    %130 = tpu.strided_load %arg15[%c2_116, %c0_117, %c0_118] {strides = array<i32: 2, 1, 1>} : memref<16x8x4xf32, #tpu.memory_space<vmem>>, vector<7x8x4xf32>
    %c2_119 = arith.constant 2 : index
    %c0_120 = arith.constant 0 : index
    %c0_121 = arith.constant 0 : index
    %131 = tpu.strided_load %arg16[%c2_119, %c0_120, %c0_121] {strides = array<i32: 2, 1, 1>} : memref<16x7x4xf32, #tpu.memory_space<vmem>>, vector<7x7x4xf32>
    %132 = vector.extract_strided_slice %130 {offsets = [0, 0, 0], sizes = [7, 7, 4], strides = [1, 1, 1]} : vector<7x8x4xf32> to vector<7x7x4xf32>
    %133 = vector.extract_strided_slice %130 {offsets = [0, 1, 0], sizes = [7, 7, 4], strides = [1, 1, 1]} : vector<7x8x4xf32> to vector<7x7x4xf32>
    %134 = arith.maximumf %132, %131 : vector<7x7x4xf32>
    %135 = arith.maximumf %134, %133 : vector<7x7x4xf32>
    %136 = arith.maximumf %107, %135 : vector<7x7x4xf32>
    %137 = tpu.concatenate %132, %131, %133 in 2 : vector<7x7x4xf32>, vector<7x7x4xf32>, vector<7x7x4xf32> -> vector<7x7x12xf32>
    %cst_122 = arith.constant 0.000000e+00 : f32
    %138 = vector.broadcast %cst_122 : f32 to vector<7x1x12xf32>
    %139 = tpu.concatenate %137, %138 in 1 : vector<7x7x12xf32>, vector<7x1x12xf32> -> vector<7x8x12xf32>
    %140 = vector.shape_cast %139 : vector<7x8x12xf32> to vector<56x12xf32>
    %141 = arith.truncf %140 : vector<56x12xf32> to vector<56x12xbf16>
    %c2_123 = arith.constant 2 : index
    %c0_124 = arith.constant 0 : index
    %c0_125 = arith.constant 0 : index
    %142 = vector.load %arg8[%c2_123, %c0_124, %c0_125] : memref<3x12x128xbf16, #tpu.memory_space<vmem>>, vector<1x12x128xbf16>
    %143 = vector.shape_cast %142 : vector<1x12x128xbf16> to vector<12x128xbf16>
    %cst_126 = arith.constant dense<0.000000e+00> : vector<56x128xf32>
    %144 = tpu.matmul %141, %143, %cst_126 {dimension_numbers = #tpu.dot_dimension_numbers<[1], [0], [0], [1], [0, 0, 1, 1], [], []>} : vector<56x12xbf16>, vector<12x128xbf16>, vector<56x128xf32> -> vector<56x128xf32>
    %145 = arith.addf %129, %144 : vector<56x128xf32>
    %c2_127 = arith.constant 2 : index
    %c0_128 = arith.constant 0 : index
    %c0_129 = arith.constant 0 : index
    %146 = tpu.strided_load %arg17[%c2_127, %c0_128, %c0_129] {strides = array<i32: 2, 1, 1>} : memref<16x8x64xf32, #tpu.memory_space<vmem>>, vector<7x8x64xf32>
    %c2_130 = arith.constant 2 : index
    %c0_131 = arith.constant 0 : index
    %c0_132 = arith.constant 0 : index
    %147 = tpu.strided_load %arg18[%c2_130, %c0_131, %c0_132] {strides = array<i32: 2, 1, 1>} : memref<16x7x64xf32, #tpu.memory_space<vmem>>, vector<7x7x64xf32>
    %148 = vector.extract_strided_slice %146 {offsets = [0, 0, 0], sizes = [7, 7, 64], strides = [1, 1, 1]} : vector<7x8x64xf32> to vector<7x7x64xf32>
    %149 = vector.extract_strided_slice %146 {offsets = [0, 1, 0], sizes = [7, 7, 64], strides = [1, 1, 1]} : vector<7x8x64xf32> to vector<7x7x64xf32>
    %150 = tpu.concatenate %148, %147, %149 in 2 : vector<7x7x64xf32>, vector<7x7x64xf32>, vector<7x7x64xf32> -> vector<7x7x192xf32>
    %cst_133 = arith.constant 0.000000e+00 : f32
    %151 = vector.broadcast %cst_133 : f32 to vector<7x1x192xf32>
    %152 = tpu.concatenate %150, %151 in 1 : vector<7x7x192xf32>, vector<7x1x192xf32> -> vector<7x8x192xf32>
    %153 = vector.shape_cast %152 : vector<7x8x192xf32> to vector<56x192xf32>
    %154 = arith.truncf %153 : vector<56x192xf32> to vector<56x192xbf16>
    %c2_134 = arith.constant 2 : index
    %c0_135 = arith.constant 0 : index
    %c0_136 = arith.constant 0 : index
    %155 = vector.load %arg9[%c2_134, %c0_135, %c0_136] : memref<3x192x128xbf16, #tpu.memory_space<vmem>>, vector<1x192x128xbf16>
    %156 = vector.shape_cast %155 : vector<1x192x128xbf16> to vector<192x128xbf16>
    %cst_137 = arith.constant dense<0.000000e+00> : vector<56x128xf32>
    %157 = tpu.matmul %154, %156, %cst_137 {dimension_numbers = #tpu.dot_dimension_numbers<[1], [0], [0], [1], [0, 0, 1, 1], [], []>} : vector<56x192xbf16>, vector<192x128xbf16>, vector<56x128xf32> -> vector<56x128xf32>
    %158 = arith.addf %145, %157 : vector<56x128xf32>
    %c0_138 = arith.constant 0 : index
    %c0_139 = arith.constant 0 : index
    %159 = vector.load %arg10[%c0_138, %c0_139] : memref<1x128xf32, #tpu.memory_space<vmem>>, vector<1x128xf32>
    %160 = vector.broadcast %159 : vector<1x128xf32> to vector<56x128xf32>
    %161 = arith.mulf %158, %160 : vector<56x128xf32>
    %c0_140 = arith.constant 0 : index
    %c0_141 = arith.constant 0 : index
    %162 = vector.load %arg11[%c0_140, %c0_141] : memref<1x128xf32, #tpu.memory_space<vmem>>, vector<1x128xf32>
    %163 = vector.broadcast %162 : vector<1x128xf32> to vector<56x128xf32>
    %164 = arith.addf %161, %163 : vector<56x128xf32>
    %cst_142 = arith.constant 0.000000e+00 : f32
    %165 = vector.broadcast %cst_142 : f32 to vector<56x128xf32>
    %166 = arith.maximumf %164, %165 : vector<56x128xf32>
    %167 = vector.shape_cast %166 : vector<56x128xf32> to vector<7x8x128xf32>
    %168 = vector.extract_strided_slice %167 {offsets = [0, 0, 0], sizes = [7, 7, 128], strides = [1, 1, 1]} : vector<7x8x128xf32> to vector<7x7x128xf32>
    %c0_143 = arith.constant 0 : index
    %c0_144 = arith.constant 0 : index
    %c0_145 = arith.constant 0 : index
    %c0_146 = arith.constant 0 : index
    %169 = vector.load %arg12[%c0_143, %c0_144, %c0_145, %c0_146] : memref<1x7x7x132xf32, #tpu.memory_space<vmem>>, vector<1x7x7x128xf32>
    %170 = vector.shape_cast %169 : vector<1x7x7x128xf32> to vector<7x7x128xf32>
    %171 = vector.shape_cast %168 : vector<7x7x128xf32> to vector<1x7x7x128xf32>
    tpu.vector_store %arg12[%c0_143, %c0_144, %c0_145, %c0_146], %171 {strides = array<i32>} : memref<1x7x7x132xf32, #tpu.memory_space<vmem>>, vector<1x7x7x128xf32>,
    %c0_147 = arith.constant 0 : index
    %c0_148 = arith.constant 0 : index
    %c0_149 = arith.constant 0 : index
    %c128 = arith.constant 128 : index
    %172 = vector.load %arg12[%c0_147, %c0_148, %c0_149, %c128] : memref<1x7x7x132xf32, #tpu.memory_space<vmem>>, vector<1x7x7x4xf32>
    %173 = vector.shape_cast %172 : vector<1x7x7x4xf32> to vector<7x7x4xf32>
    %174 = vector.shape_cast %136 : vector<7x7x4xf32> to vector<1x7x7x4xf32>
    tpu.vector_store %arg12[%c0_147, %c0_148, %c0_149, %c128], %174 {strides = array<i32>} : memref<1x7x7x132xf32, #tpu.memory_space<vmem>>, vector<1x7x7x4xf32>,
    return
  }
  func.func @transform_0(%arg0: i32) -> (i32, i32, i32, i32) {
    %c0_i32 = arith.constant 0 : i32
    %c0_i32_0 = arith.constant 0 : i32
    %c0_i32_1 = arith.constant 0 : i32
    %c0_i32_2 = arith.constant 0 : i32
    return %arg0, %c0_i32, %c0_i32_0, %c0_i32_1 : i32, i32, i32, i32
  }
  func.func @transform_1(%arg0: i32) -> (i32, i32) {
    %c0_i32 = arith.constant 0 : i32
    %c0_i32_0 = arith.constant 0 : i32
    %c0_i32_1 = arith.constant 0 : i32
    return %c0_i32, %c0_i32_0 : i32, i32
  }
  func.func @transform_2(%arg0: i32) -> (i32, i32) {
    %c0_i32 = arith.constant 0 : i32
    %c0_i32_0 = arith.constant 0 : i32
    %c0_i32_1 = arith.constant 0 : i32
    return %c0_i32, %c0_i32_0 : i32, i32
  }
  func.func @transform_3(%arg0: i32) -> (i32, i32) {
    %c0_i32 = arith.constant 0 : i32
    %c0_i32_0 = arith.constant 0 : i32
    %c0_i32_1 = arith.constant 0 : i32
    return %c0_i32, %c0_i32_0 : i32, i32
  }
  func.func @transform_4(%arg0: i32) -> (i32, i32, i32) {
    %c0_i32 = arith.constant 0 : i32
    %c0_i32_0 = arith.constant 0 : i32
    %c0_i32_1 = arith.constant 0 : i32
    %c0_i32_2 = arith.constant 0 : i32
    return %c0_i32, %c0_i32_0, %c0_i32_1 : i32, i32, i32
  }
  func.func @transform_5(%arg0: i32) -> (i32, i32) {
    %c0_i32 = arith.constant 0 : i32
    %c0_i32_0 = arith.constant 0 : i32
    %c0_i32_1 = arith.constant 0 : i32
    return %c0_i32, %c0_i32_0 : i32, i32
  }
  func.func @transform_6(%arg0: i32) -> (i32, i32) {
    %c0_i32 = arith.constant 0 : i32
    %c0_i32_0 = arith.constant 0 : i32
    %c0_i32_1 = arith.constant 0 : i32
    return %c0_i32, %c0_i32_0 : i32, i32
  }
  func.func @transform_7(%arg0: i32) -> (i32, i32, i32) {
    %c0_i32 = arith.constant 0 : i32
    %c0_i32_0 = arith.constant 0 : i32
    %c0_i32_1 = arith.constant 0 : i32
    %c0_i32_2 = arith.constant 0 : i32
    return %c0_i32, %c0_i32_0, %c0_i32_1 : i32, i32, i32
  }
  func.func @transform_8(%arg0: i32) -> (i32, i32, i32) {
    %c0_i32 = arith.constant 0 : i32
    %c0_i32_0 = arith.constant 0 : i32
    %c0_i32_1 = arith.constant 0 : i32
    %c0_i32_2 = arith.constant 0 : i32
    return %c0_i32, %c0_i32_0, %c0_i32_1 : i32, i32, i32
  }
  func.func @transform_9(%arg0: i32) -> (i32, i32) {
    %c0_i32 = arith.constant 0 : i32
    %c0_i32_0 = arith.constant 0 : i32
    %c0_i32_1 = arith.constant 0 : i32
    return %c0_i32, %c0_i32_0 : i32, i32
  }
  func.func @transform_10(%arg0: i32) -> (i32, i32) {
    %c0_i32 = arith.constant 0 : i32
    %c0_i32_0 = arith.constant 0 : i32
    %c0_i32_1 = arith.constant 0 : i32
    return %c0_i32, %c0_i32_0 : i32, i32
  }
  func.func @transform_11(%arg0: i32) -> (i32, i32, i32, i32) {
    %c0_i32 = arith.constant 0 : i32
    %c0_i32_0 = arith.constant 0 : i32
    %c0_i32_1 = arith.constant 0 : i32
    %c0_i32_2 = arith.constant 0 : i32
    return %arg0, %c0_i32, %c0_i32_0, %c0_i32_1 : i32, i32, i32, i32
  }
}

</mosaic_0001>

<llo_original>
// kernel: inception_b_forward.1
$region0: #{inception_b_forward.1}
  #allocation0 [shape = 'u32[]', space=smem, size = 0x4, offset = 0x4, fixed_abs, tag = 'smem constant byte address 0x4 - core index']
  #allocation1 [shape = 'u32[72,128]{1,0:T(1,128)}', space=vmem, size = 0x9000, scoped, tag = 'internal scratch']
  #allocation2 [shape = 'f32[18,18,32]{2,1,0:T(8,128)}', space=vmem, size = 0x36000, scoped, tag = 'scratch operand']
  #allocation3 [shape = 'f32[16,16,64]{2,1,0:T(8,128)}', space=vmem, size = 0x20000, scoped, tag = 'scratch operand']
  #allocation4 [shape = 'f32[16,8,4]{2,1,0:T(8,128)}', space=vmem, size = 0x10000, scoped, tag = 'scratch operand']
  #allocation5 [shape = 'f32[16,7,4]{2,1,0:T(8,128)}', space=vmem, size = 0x10000, scoped, tag = 'scratch operand']
  #allocation6 [shape = 'f32[16,8,64]{2,1,0:T(8,128)}', space=vmem, size = 0x10000, scoped, tag = 'scratch operand']
  #allocation7 [shape = 'f32[16,7,64]{2,1,0:T(8,128)}', space=vmem, size = 0x10000, scoped, tag = 'scratch operand']
  %s0 = inlined_call_operand.vmem [shape: f32[2,16,16,4], index: 0, kind: input, shape index: {}]
  %s1 = inlined_call_operand.vmem [shape: bf16[4,32], index: 1, kind: input, shape index: {}]
  %s2 = inlined_call_operand.vmem [shape: f32[1,32], index: 2, kind: input, shape index: {}]
  %s3 = inlined_call_operand.vmem [shape: f32[1,32], index: 3, kind: input, shape index: {}]
  %s4 = inlined_call_operand.vmem [shape: bf16[3,96,64], index: 4, kind: input, shape index: {}]
  %s5 = inlined_call_operand.vmem [shape: f32[1,64], index: 5, kind: input, shape index: {}]
  %s6 = inlined_call_operand.vmem [shape: f32[1,64], index: 6, kind: input, shape index: {}]
  %s7 = inlined_call_operand.vmem [shape: bf16[3,12,128], index: 7, kind: input, shape index: {}]
  %s8 = inlined_call_operand.vmem [shape: bf16[3,192,128], index: 8, kind: input, shape index: {}]
  %s9 = inlined_call_operand.vmem [shape: f32[1,128], index: 9, kind: input, shape index: {}]
  %s10 = inlined_call_operand.vmem [shape: f32[1,128], index: 10, kind: input, shape index: {}]
  %s11 = inlined_call_operand.vmem [shape: f32[2,7,7,132], index: 11, kind: output, shape index: {}]
  %s12 = sld [smem:[#allocation0]]
  $region77: #{inception_b_forward.1} parent=0
    _
  %s14 = ssub.s32 1, %s12
  %s15 = scalar_select 0, %s14, %s12
  loop: start=0, step=1, limit=4
  $region2: #{inception_b_forward.1} parent=0 // loop_pre_header
    _
  $region3: #{inception_b_forward.1} parent=0 // loop_header
    %s17 = sphi 0, %s21
    %p18 = scmp.ge.s32.totalorder %s17, 4
    %s27 = sphi 0, %s29
    %s30 = sphi 0, %s27
    %s31 = sphi 0, %s30
    %s47 = sphi 0, %s31
    %s51 = sphi 0, %s51
    %s53 = sphi 0, %s51
    %s54 = sphi 0, %s53
    %s68 = sphi 0, %s54
    %s72 = sphi 0, %s72
    %s74 = sphi 0, %s72
    %s75 = sphi 0, %s74
    %s89 = sphi 0, %s75
    %s93 = sphi 0, %s93
    %s95 = sphi 0, %s93
    %s96 = sphi 0, %s95
    %s110 = sphi 0, %s96
    %s114 = sphi 0, %s114
    %s116 = sphi 0, %s114
    %s117 = sphi 0, %s116
    %s131 = sphi 0, %s117
    %s135 = sphi 0, %s135
    %s137 = sphi 0, %s135
    %s138 = sphi 0, %s137
    %s152 = sphi 0, %s138
    %s156 = sphi 0, %s156
    %s158 = sphi 0, %s156
    %s159 = sphi 0, %s158
    %s173 = sphi 0, %s159
    %s177 = sphi 0, %s177
    %s179 = sphi 0, %s177
    %s180 = sphi 0, %s179
    %s194 = sphi 0, %s180
    %s198 = sphi 0, %s198
    %s200 = sphi 0, %s198
    %s201 = sphi 0, %s200
    %s215 = sphi 0, %s201
    %s219 = sphi 0, %s219
    %s221 = sphi 0, %s219
    %s222 = sphi 0, %s221
    %s236 = sphi 0, %s222
    %s240 = sphi 0, %s240
    %s242 = sphi 0, %s240
    %s243 = sphi 0, %s242
    %s257 = sphi 0, %s243
    %s263 = sphi 0, %s265
    %s266 = sphi 0, %s263
    %s267 = sphi 0, %s266
    %s283 = sphi 0, %s267
  $region4: #{inception_b_forward.1} parent=0 // loop_header_branch
    %20 = sbr.rel (%p18) target = $region8
  $region5: #{inception_b_forward.1} parent=0 // loop_body
    %s22 = ssub.s32 %s17, 1
    %s23 = ssub.s32 %s17, 2
    %s24 = sadd.s32 %s17, 1
    %s25 = ssub.s32 %s17, %s24
    %p26 = scmp.eq.s32.totalorder %s25, 0
    %s28 = sadd.s32 %s27, 1
    %s29 = scalar_select %p26, %s27, %s28
    %p32 = pneg %p26
    %p33 = scmp.eq.s32.totalorder %s17, 1
    %p34 = por %p32, %p33
    %p35 = scmp.ne.s32.totalorder %s27, %s30
    %p36 = scmp.eq.s32.totalorder %s17, 0
    %p37 = por %p35, %p36
    %p38 = scmp.ne.s32.totalorder %s27, %s30
    %p39 = scmp.eq.s32.totalorder %s22, 1
    %p40 = por %p38, %p39
    %p41 = scmp.ne.s32.totalorder %s30, %s31
    %p42 = scmp.eq.s32.totalorder %s22, 0
    %p43 = por %p41, %p42
    %p44 = scmp.ne.s32.totalorder %s30, %s31
    %p45 = scmp.eq.s32.totalorder %s23, 1
    %p46 = por %p44, %p45
    %p48 = scmp.ne.s32.totalorder %s31, %s47
    %p49 = scmp.eq.s32.totalorder %s23, 0
    %p50 = por %p48, %p49
    %s52 = sadd.s32 %s51, 1
    %p55 = scmp.eq.s32.totalorder %s17, 1
    %p56 = scmp.ne.s32.totalorder %s51, %s53
    %p57 = scmp.eq.s32.totalorder %s17, 0
    %p58 = por %p56, %p57
    %p59 = scmp.ne.s32.totalorder %s51, %s53
    %p60 = scmp.eq.s32.totalorder %s22, 1
    %p61 = por %p59, %p60
    %p62 = scmp.ne.s32.totalorder %s53, %s54
    %p63 = scmp.eq.s32.totalorder %s22, 0
    %p64 = por %p62, %p63
    %p65 = scmp.ne.s32.totalorder %s53, %s54
    %p66 = scmp.eq.s32.totalorder %s23, 1
    %p67 = por %p65, %p66
    %p69 = scmp.ne.s32.totalorder %s54, %s68
    %p70 = scmp.eq.s32.totalorder %s23, 0
    %p71 = por %p69, %p70
    %s73 = sadd.s32 %s72, 1
    %p76 = scmp.eq.s32.totalorder %s17, 1
    %p77 = scmp.ne.s32.totalorder %s72, %s74
    %p78 = scmp.eq.s32.totalorder %s17, 0
    %p79 = por %p77, %p78
    %p80 = scmp.ne.s32.totalorder %s72, %s74
    %p81 = scmp.eq.s32.totalorder %s22, 1
    %p82 = por %p80, %p81
    %p83 = scmp.ne.s32.totalorder %s74, %s75
    %p84 = scmp.eq.s32.totalorder %s22, 0
    %p85 = por %p83, %p84
    %p86 = scmp.ne.s32.totalorder %s74, %s75
    %p87 = scmp.eq.s32.totalorder %s23, 1
    %p88 = por %p86, %p87
    %p90 = scmp.ne.s32.totalorder %s75, %s89
    %p91 = scmp.eq.s32.totalorder %s23, 0
    %p92 = por %p90, %p91
    %s94 = sadd.s32 %s93, 1
    %p97 = scmp.eq.s32.totalorder %s17, 1
    %p98 = scmp.ne.s32.totalorder %s93, %s95
    %p99 = scmp.eq.s32.totalorder %s17, 0
    %p100 = por %p98, %p99
    %p101 = scmp.ne.s32.totalorder %s93, %s95
    %p102 = scmp.eq.s32.totalorder %s22, 1
    %p103 = por %p101, %p102
    %p104 = scmp.ne.s32.totalorder %s95, %s96
    %p105 = scmp.eq.s32.totalorder %s22, 0
    %p106 = por %p104, %p105
    %p107 = scmp.ne.s32.totalorder %s95, %s96
    %p108 = scmp.eq.s32.totalorder %s23, 1
    %p109 = por %p107, %p108
    %p111 = scmp.ne.s32.totalorder %s96, %s110
    %p112 = scmp.eq.s32.totalorder %s23, 0
    %p113 = por %p111, %p112
    %s115 = sadd.s32 %s114, 1
    %p118 = scmp.eq.s32.totalorder %s17, 1
    %p119 = scmp.ne.s32.totalorder %s114, %s116
    %p120 = scmp.eq.s32.totalorder %s17, 0
    %p121 = por %p119, %p120
    %p122 = scmp.ne.s32.totalorder %s114, %s116
    %p123 = scmp.eq.s32.totalorder %s22, 1
    %p124 = por %p122, %p123
    %p125 = scmp.ne.s32.totalorder %s116, %s117
    %p126 = scmp.eq.s32.totalorder %s22, 0
    %p127 = por %p125, %p126
    %p128 = scmp.ne.s32.totalorder %s116, %s117
    %p129 = scmp.eq.s32.totalorder %s23, 1
    %p130 = por %p128, %p129
    %p132 = scmp.ne.s32.totalorder %s117, %s131
    %p133 = scmp.eq.s32.totalorder %s23, 0
    %p134 = por %p132, %p133
    %s136 = sadd.s32 %s135, 1
    %p139 = scmp.eq.s32.totalorder %s17, 1
    %p140 = scmp.ne.s32.totalorder %s135, %s137
    %p141 = scmp.eq.s32.totalorder %s17, 0
    %p142 = por %p140, %p141
    %p143 = scmp.ne.s32.totalorder %s135, %s137
    %p144 = scmp.eq.s32.totalorder %s22, 1
    %p145 = por %p143, %p144
    %p146 = scmp.ne.s32.totalorder %s137, %s138
    %p147 = scmp.eq.s32.totalorder %s22, 0
    %p148 = por %p146, %p147
    %p149 = scmp.ne.s32.totalorder %s137, %s138
    %p150 = scmp.eq.s32.totalorder %s23, 1
    %p151 = por %p149, %p150
    %p153 = scmp.ne.s32.totalorder %s138, %s152
    %p154 = scmp.eq.s32.totalorder %s23, 0
    %p155 = por %p153, %p154
    %s157 = sadd.s32 %s156, 1
    %p160 = scmp.eq.s32.totalorder %s17, 1
    %p161 = scmp.ne.s32.totalorder %s156, %s158
    %p162 = scmp.eq.s32.totalorder %s17, 0
    %p163 = por %p161, %p162
    %p164 = scmp.ne.s32.totalorder %s156, %s158
    %p165 = scmp.eq.s32.totalorder %s22, 1
    %p166 = por %p164, %p165
    %p167 = scmp.ne.s32.totalorder %s158, %s159
    %p168 = scmp.eq.s32.totalorder %s22, 0
    %p169 = por %p167, %p168
    %p170 = scmp.ne.s32.totalorder %s158, %s159
    %p171 = scmp.eq.s32.totalorder %s23, 1
    %p172 = por %p170, %p171
    %p174 = scmp.ne.s32.totalorder %s159, %s173
    %p175 = scmp.eq.s32.totalorder %s23, 0
    %p176 = por %p174, %p175
    %s178 = sadd.s32 %s177, 1
    %p181 = scmp.eq.s32.totalorder %s17, 1
    %p182 = scmp.ne.s32.totalorder %s177, %s179
    %p183 = scmp.eq.s32.totalorder %s17, 0
    %p184 = por %p182, %p183
    %p185 = scmp.ne.s32.totalorder %s177, %s179
    %p186 = scmp.eq.s32.totalorder %s22, 1
    %p187 = por %p185, %p186
    %p188 = scmp.ne.s32.totalorder %s179, %s180
    %p189 = scmp.eq.s32.totalorder %s22, 0
    %p190 = por %p188, %p189
    %p191 = scmp.ne.s32.totalorder %s179, %s180
    %p192 = scmp.eq.s32.totalorder %s23, 1
    %p193 = por %p191, %p192
    %p195 = scmp.ne.s32.totalorder %s180, %s194
    %p196 = scmp.eq.s32.totalorder %s23, 0
    %p197 = por %p195, %p196
    %s199 = sadd.s32 %s198, 1
    %p202 = scmp.eq.s32.totalorder %s17, 1
    %p203 = scmp.ne.s32.totalorder %s198, %s200
    %p204 = scmp.eq.s32.totalorder %s17, 0
    %p205 = por %p203, %p204
    %p206 = scmp.ne.s32.totalorder %s198, %s200
    %p207 = scmp.eq.s32.totalorder %s22, 1
    %p208 = por %p206, %p207
    %p209 = scmp.ne.s32.totalorder %s200, %s201
    %p210 = scmp.eq.s32.totalorder %s22, 0
    %p211 = por %p209, %p210
    %p212 = scmp.ne.s32.totalorder %s200, %s201
    %p213 = scmp.eq.s32.totalorder %s23, 1
    %p214 = por %p212, %p213
    %p216 = scmp.ne.s32.totalorder %s201, %s215
    %p217 = scmp.eq.s32.totalorder %s23, 0
    %p218 = por %p216, %p217
    %s220 = sadd.s32 %s219, 1
    %p223 = scmp.eq.s32.totalorder %s17, 1
    %p224 = scmp.ne.s32.totalorder %s219, %s221
    %p225 = scmp.eq.s32.totalorder %s17, 0
    %p226 = por %p224, %p225
    %p227 = scmp.ne.s32.totalorder %s219, %s221
    %p228 = scmp.eq.s32.totalorder %s22, 1
    %p229 = por %p227, %p228
    %p230 = scmp.ne.s32.totalorder %s221, %s222
    %p231 = scmp.eq.s32.totalorder %s22, 0
    %p232 = por %p230, %p231
    %p233 = scmp.ne.s32.totalorder %s221, %s222
    %p234 = scmp.eq.s32.totalorder %s23, 1
    %p235 = por %p233, %p234
    %p237 = scmp.ne.s32.totalorder %s222, %s236
    %p238 = scmp.eq.s32.totalorder %s23, 0
    %p239 = por %p237, %p238
    %s241 = sadd.s32 %s240, 1
    %p244 = scmp.eq.s32.totalorder %s17, 1
    %p245 = scmp.ne.s32.totalorder %s240, %s242
    %p246 = scmp.eq.s32.totalorder %s17, 0
    %p247 = por %p245, %p246
    %p248 = scmp.ne.s32.totalorder %s240, %s242
    %p249 = scmp.eq.s32.totalorder %s22, 1
    %p250 = por %p248, %p249
    %p251 = scmp.ne.s32.totalorder %s242, %s243
    %p252 = scmp.eq.s32.totalorder %s22, 0
    %p253 = por %p251, %p252
    %p254 = scmp.ne.s32.totalorder %s242, %s243
    %p255 = scmp.eq.s32.totalorder %s23, 1
    %p256 = por %p254, %p255
    %p258 = scmp.ne.s32.totalorder %s243, %s257
    %p259 = scmp.eq.s32.totalorder %s23, 0
    %p260 = por %p258, %p259
    %s261 = ssub.s32 %s17, %s24
    %p262 = scmp.eq.s32.totalorder %s261, 0
    %s264 = sadd.s32 %s263, 1
    %s265 = scalar_select %p262, %s263, %s264
    %p268 = pneg %p262
    %p269 = scmp.eq.s32.totalorder %s17, 1
    %p270 = por %p268, %p269
    %p271 = scmp.ne.s32.totalorder %s263, %s266
    %p272 = scmp.eq.s32.totalorder %s17, 0
    %p273 = por %p271, %p272
    %p274 = scmp.ne.s32.totalorder %s263, %s266
    %p275 = scmp.eq.s32.totalorder %s22, 1
    %p276 = por %p274, %p275
    %p277 = scmp.ne.s32.totalorder %s266, %s267
    %p278 = scmp.eq.s32.totalorder %s22, 0
    %p279 = por %p277, %p278
    %p280 = scmp.ne.s32.totalorder %s266, %s267
    %p281 = scmp.eq.s32.totalorder %s23, 1
    %p282 = por %p280, %p281
    %p284 = scmp.ne.s32.totalorder %s267, %s283
    %p285 = scmp.eq.s32.totalorder %s23, 0
    %p286 = por %p284, %p285
    %p287 = scmp.le.s32.totalorder 1, %s17
    %p288 = scmp.lt.s32.totalorder %s17, 3
    %p289 = pnand %p287, %p288
    %p290 = pneg %p289
    // Predicated region
    $region9: #{inception_b_forward.1} parent=5 // pred_check
      _
    $region10: #{inception_b_forward.1} parent=5 // pred_check_branch
      %292 = sbr.rel (%p289) target = $region12
    $region11: #{inception_b_forward.1} parent=5 // pred_region
      %s293 = ssub.s32 %s17, 1
      // Predicated region
      $region13: #{inception_b_forward.1} parent=11 // pred_check
        %p294 = pneg %p64
      $region14: #{inception_b_forward.1} parent=11 // pred_check_branch
        %296 = sbr.rel (%p294) target = $region16
      $region15: #{inception_b_forward.1} parent=11 // pred_region
        _
      $region16: #{inception_b_forward.1} parent=11 // pred_fallthru
        _
      // Predicated region
      $region17: #{inception_b_forward.1} parent=11 // pred_check
        %p297 = pneg %p85
      $region18: #{inception_b_forward.1} parent=11 // pred_check_branch
        %299 = sbr.rel (%p297) target = $region20
      $region19: #{inception_b_forward.1} parent=11 // pred_region
        _
      $region20: #{inception_b_forward.1} parent=11 // pred_fallthru
        _
      // Predicated region
      $region21: #{inception_b_forward.1} parent=11 // pred_check
        %p300 = pneg %p106
      $region22: #{inception_b_forward.1} parent=11 // pred_check_branch
        %302 = sbr.rel (%p300) target = $region24
      $region23: #{inception_b_forward.1} parent=11 // pred_region
        _
      $region24: #{inception_b_forward.1} parent=11 // pred_fallthru
        _
      // Predicated region
      $region25: #{inception_b_forward.1} parent=11 // pred_check
        %p303 = pneg %p127
      $region26: #{inception_b_forward.1} parent=11 // pred_check_branch
        %305 = sbr.rel (%p303) target = $region28
      $region27: #{inception_b_forward.1} parent=11 // pred_region
        _
      $region28: #{inception_b_forward.1} parent=11 // pred_fallthru
        _
      // Predicated region
      $region29: #{inception_b_forward.1} parent=11 // pred_check
        %p306 = pneg %p148
      $region30: #{inception_b_forward.1} parent=11 // pred_check_branch
        %308 = sbr.rel (%p306) target = $region32
      $region31: #{inception_b_forward.1} parent=11 // pred_region
        _
      $region32: #{inception_b_forward.1} parent=11 // pred_fallthru
        _
      // Predicated region
      $region33: #{inception_b_forward.1} parent=11 // pred_check
        %p309 = pneg %p169
      $region34: #{inception_b_forward.1} parent=11 // pred_check_branch
        %311 = sbr.rel (%p309) target = $region36
      $region35: #{inception_b_forward.1} parent=11 // pred_region
        _
      $region36: #{inception_b_forward.1} parent=11 // pred_fallthru
        _
      // Predicated region
      $region37: #{inception_b_forward.1} parent=11 // pred_check
        %p312 = pneg %p190
      $region38: #{inception_b_forward.1} parent=11 // pred_check_branch
        %314 = sbr.rel (%p312) target = $region40
      $region39: #{inception_b_forward.1} parent=11 // pred_region
        _
      $region40: #{inception_b_forward.1} parent=11 // pred_fallthru
        _
      // Predicated region
      $region41: #{inception_b_forward.1} parent=11 // pred_check
        %p315 = pneg %p211
      $region42: #{inception_b_forward.1} parent=11 // pred_check_branch
        %317 = sbr.rel (%p315) target = $region44
      $region43: #{inception_b_forward.1} parent=11 // pred_region
        _
      $region44: #{inception_b_forward.1} parent=11 // pred_fallthru
        _
      // Predicated region
      $region45: #{inception_b_forward.1} parent=11 // pred_check
        %p318 = pneg %p232
      $region46: #{inception_b_forward.1} parent=11 // pred_check_branch
        %320 = sbr.rel (%p318) target = $region48
      $region47: #{inception_b_forward.1} parent=11 // pred_region
        _
      $region48: #{inception_b_forward.1} parent=11 // pred_fallthru
        _
      // Predicated region
      $region49: #{inception_b_forward.1} parent=11 // pred_check
        %p321 = pneg %p253
      $region50: #{inception_b_forward.1} parent=11 // pred_check_branch
        %323 = sbr.rel (%p321) target = $region52
      $region51: #{inception_b_forward.1} parent=11 // pred_region
        _
      $region52: #{inception_b_forward.1} parent=11 // pred_fallthru
        _
    $region12: #{inception_b_forward.1} parent=5 // pred_fallthru
      _
    %p324 = scmp.lt.s32.totalorder %s17, 2
    // Predicated region
    $region53: #{inception_b_forward.1} parent=5 // pred_check
      %p325 = pneg %p324
    $region54: #{inception_b_forward.1} parent=5 // pred_check_branch
      %327 = sbr.rel (%p325) target = $region56
    $region55: #{inception_b_forward.1} parent=5 // pred_region
      // Predicated region
      $region57: #{inception_b_forward.1} parent=55 // pred_check
        %p328 = pneg %p37
      $region58: #{inception_b_forward.1} parent=55 // pred_check_branch
        %330 = sbr.rel (%p328) target = $region60
      $region59: #{inception_b_forward.1} parent=55 // pred_region
        %p331 = scmp.lt.s32.totalorder %s17, 1
        %s332 = scalar_select %p331, %s17, 1
        %s333 = smul.addr %s332, 32
        %s334 = smul.addr %s333, 8
        %s335 = scalar_lea.vmem %s0, %s334
      $region60: #{inception_b_forward.1} parent=55 // pred_fallthru
        _
    $region56: #{inception_b_forward.1} parent=5 // pred_fallthru
      _
    %p336 = scmp.le.s32.totalorder 1, %s17
    %p337 = scmp.lt.s32.totalorder %s17, 3
    %p338 = pnand %p336, %p337
    %p339 = pneg %p338
    // Predicated region
    $region61: #{inception_b_forward.1} parent=5 // pred_check
      _
    $region62: #{inception_b_forward.1} parent=5 // pred_check_branch
      %341 = sbr.rel (%p338) target = $region64
    $region63: #{inception_b_forward.1} parent=5 // pred_region
      %s342 = ssub.s32 %s17, 1
      %p343 = scmp.lt.s32.totalorder %s22, 1
      %s344 = scalar_select %p343, %s22, 1
      %s345 = smul.addr %s344, 32
      %s346 = smul.addr %s345, 8
      %s347 = scalar_lea.vmem %s0, %s346
      %p348 = pneg %p43
      %p349 = pneg %p40
      %p350 = pneg %p64
      %p351 = pneg %p61
      %p352 = pneg %p85
      %p353 = pneg %p82
      %p354 = pneg %p106
      %p355 = pneg %p103
      %p356 = pneg %p127
      %p357 = pneg %p124
      %p358 = pneg %p148
      %p359 = pneg %p145
      %p360 = pneg %p169
      %p361 = pneg %p166
      %p362 = pneg %p190
      %p363 = pneg %p187
      %p364 = pneg %p211
      %p365 = pneg %p208
      %p366 = pneg %p232
      %p367 = pneg %p229
      %p368 = pneg %p253
      %p369 = pneg %p250
      %p370 = pneg %p279
      %p371 = pneg %p276
      %p372 = scmp.lt.s32.totalorder %s22, 1
      %s373 = scalar_select %p372, %s22, 1
      %s374 = smul.addr %s373, 14
      %s375 = smul.addr %s374, 8
      %s376 = scalar_lea.vmem %s11, %s375
      %p377 = scmp.lt.s32.totalorder %s22, 1
      %s378 = scalar_select %p377, %s22, 1
      %s379 = smul.addr %s378, 32
      %s380 = smul.addr %s379, 8
      %s381 = scalar_lea.vmem %s0, %s380
      %p382 = scmp.lt.s32.totalorder %s22, 1
      %s383 = scalar_select %p382, %s22, 1
      %s384 = smul.addr %s383, 14
      %s385 = smul.addr %s384, 8
      %s386 = scalar_lea.vmem %s11, %s385
      %v388 = vld [vmem:[%s381] ss:$2 sm:$0xff]
      %s389 = scalar_lea.vmem %s381, 16
      %v390 = vld [vmem:[%s389] ss:$2 sm:$0xff]
      %s391 = scalar_lea.vmem %s381, 32
      %v392 = vld [vmem:[%s391] ss:$2 sm:$0xff]
      %s393 = scalar_lea.vmem %s381, 48
      %v394 = vld [vmem:[%s393] ss:$2 sm:$0xff]
      %s395 = scalar_lea.vmem %s381, 64
      %v396 = vld [vmem:[%s395] ss:$2 sm:$0xff]
      %s397 = scalar_lea.vmem %s381, 80
      %v398 = vld [vmem:[%s397] ss:$2 sm:$0xff]
      %s399 = scalar_lea.vmem %s381, 96
      %v400 = vld [vmem:[%s399] ss:$2 sm:$0xff]
      %s401 = scalar_lea.vmem %s381, 112
      %v402 = vld [vmem:[%s401] ss:$2 sm:$0xff]
      %s403 = scalar_lea.vmem %s381, 128
      %v404 = vld [vmem:[%s403] ss:$2 sm:$0xff]
      %s405 = scalar_lea.vmem %s381, 144
      %v406 = vld [vmem:[%s405] ss:$2 sm:$0xff]
      %s407 = scalar_lea.vmem %s381, 160
      %v408 = vld [vmem:[%s407] ss:$2 sm:$0xff]
      %s409 = scalar_lea.vmem %s381, 176
      %v410 = vld [vmem:[%s409] ss:$2 sm:$0xff]
      %s411 = scalar_lea.vmem %s381, 192
      %v412 = vld [vmem:[%s411] ss:$2 sm:$0xff]
      %s413 = scalar_lea.vmem %s381, 208
      %v414 = vld [vmem:[%s413] ss:$2 sm:$0xff]
      %s415 = scalar_lea.vmem %s381, 224
      %v416 = vld [vmem:[%s415] ss:$2 sm:$0xff]
      %s417 = scalar_lea.vmem %s381, 240
      %v418 = vld [vmem:[%s417] ss:$2 sm:$0xff]
      %vm419 = vcmask 31744
      %420 = vst.msk [vmem:[#allocation4] sm:$0xff] %vm419, %v388
      %421 = vst.msk [vmem:[#allocation4 + $0x8] sm:$0xff] %vm419, %v390
      %422 = vst.msk [vmem:[#allocation4 + $0x10] sm:$0xff] %vm419, %v392
      %423 = vst.msk [vmem:[#allocation4 + $0x18] sm:$0xff] %vm419, %v394
      %424 = vst.msk [vmem:[#allocation4 + $0x20] sm:$0xff] %vm419, %v396
      %425 = vst.msk [vmem:[#allocation4 + $0x28] sm:$0xff] %vm419, %v398
      %426 = vst.msk [vmem:[#allocation4 + $0x30] sm:$0xff] %vm419, %v400
      %427 = vst.msk [vmem:[#allocation4 + $0x38] sm:$0xff] %vm419, %v402
      %428 = vst.msk [vmem:[#allocation4 + $0x40] sm:$0xff] %vm419, %v404
      %429 = vst.msk [vmem:[#allocation4 + $0x48] sm:$0xff] %vm419, %v406
      %430 = vst.msk [vmem:[#allocation4 + $0x50] sm:$0xff] %vm419, %v408
      %431 = vst.msk [vmem:[#allocation4 + $0x58] sm:$0xff] %vm419, %v410
      %432 = vst.msk [vmem:[#allocation4 + $0x60] sm:$0xff] %vm419, %v412
      %433 = vst.msk [vmem:[#allocation4 + $0x68] sm:$0xff] %vm419, %v414
      %434 = vst.msk [vmem:[#allocation4 + $0x70] sm:$0xff] %vm419, %v416
      %435 = vst.msk [vmem:[#allocation4 + $0x78] sm:$0xff] %vm419, %v418
      %s436 = scalar_lea.vmem %s381, 1
      %v437 = vld [vmem:[%s436] ss:$2 sm:$0x7f]
      %s438 = scalar_lea.vmem %s381, 17
      %v439 = vld [vmem:[%s438] ss:$2 sm:$0x7f]
      %s440 = scalar_lea.vmem %s381, 33
      %v441 = vld [vmem:[%s440] ss:$2 sm:$0x7f]
      %s442 = scalar_lea.vmem %s381, 49
      %v443 = vld [vmem:[%s442] ss:$2 sm:$0x7f]
      %s444 = scalar_lea.vmem %s381, 65
      %v445 = vld [vmem:[%s444] ss:$2 sm:$0x7f]
      %s446 = scalar_lea.vmem %s381, 81
      %v447 = vld [vmem:[%s446] ss:$2 sm:$0x7f]
      %s448 = scalar_lea.vmem %s381, 97
      %v449 = vld [vmem:[%s448] ss:$2 sm:$0x7f]
      %s450 = scalar_lea.vmem %s381, 113
      %v451 = vld [vmem:[%s450] ss:$2 sm:$0x7f]
      %s452 = scalar_lea.vmem %s381, 129
      %v453 = vld [vmem:[%s452] ss:$2 sm:$0x7f]
      %s454 = scalar_lea.vmem %s381, 145
      %v455 = vld [vmem:[%s454] ss:$2 sm:$0x7f]
      %s456 = scalar_lea.vmem %s381, 161
      %v457 = vld [vmem:[%s456] ss:$2 sm:$0x7f]
      %s458 = scalar_lea.vmem %s381, 177
      %v459 = vld [vmem:[%s458] ss:$2 sm:$0x7f]
      %s460 = scalar_lea.vmem %s381, 193
      %v461 = vld [vmem:[%s460] ss:$2 sm:$0x7f]
      %s462 = scalar_lea.vmem %s381, 209
      %v463 = vld [vmem:[%s462] ss:$2 sm:$0x7f]
      %s464 = scalar_lea.vmem %s381, 225
      %v465 = vld [vmem:[%s464] ss:$2 sm:$0x7f]
      %s466 = scalar_lea.vmem %s381, 241
      %v467 = vld [vmem:[%s466] ss:$2 sm:$0x7f]
      %vm468 = vcmask 30720
      %469 = vst.msk [vmem:[#allocation5] sm:$0x7f] %vm468, %v437
      %470 = vst.msk [vmem:[#allocation5 + $0x8] sm:$0x7f] %vm468, %v439
      %471 = vst.msk [vmem:[#allocation5 + $0x10] sm:$0x7f] %vm468, %v441
      %472 = vst.msk [vmem:[#allocation5 + $0x18] sm:$0x7f] %vm468, %v443
      %473 = vst.msk [vmem:[#allocation5 + $0x20] sm:$0x7f] %vm468, %v445
      %474 = vst.msk [vmem:[#allocation5 + $0x28] sm:$0x7f] %vm468, %v447
      %475 = vst.msk [vmem:[#allocation5 + $0x30] sm:$0x7f] %vm468, %v449
      %476 = vst.msk [vmem:[#allocation5 + $0x38] sm:$0x7f] %vm468, %v451
      %477 = vst.msk [vmem:[#allocation5 + $0x40] sm:$0x7f] %vm468, %v453
      %478 = vst.msk [vmem:[#allocation5 + $0x48] sm:$0x7f] %vm468, %v455
      %479 = vst.msk [vmem:[#allocation5 + $0x50] sm:$0x7f] %vm468, %v457
      %480 = vst.msk [vmem:[#allocation5 + $0x58] sm:$0x7f] %vm468, %v459
      %481 = vst.msk [vmem:[#allocation5 + $0x60] sm:$0x7f] %vm468, %v461
      %482 = vst.msk [vmem:[#allocation5 + $0x68] sm:$0x7f] %vm468, %v463
      %483 = vst.msk [vmem:[#allocation5 + $0x70] sm:$0x7f] %vm468, %v465
      %484 = vst.msk [vmem:[#allocation5 + $0x78] sm:$0x7f] %vm468, %v467
      %v485 = vld [vmem:[%s381] sm:$0xff]
      %v486 = vld [vmem:[%s381 + $0x8] sm:$0xff]
      %v487 = vld [vmem:[%s381 + $0x10] sm:$0xff]
      %v488 = vld [vmem:[%s381 + $0x18] sm:$0xff]
      %v489 = vld [vmem:[%s381 + $0x20] sm:$0xff]
      %v490 = vld [vmem:[%s381 + $0x28] sm:$0xff]
      %v491 = vld [vmem:[%s381 + $0x30] sm:$0xff]
      %v492 = vld [vmem:[%s381 + $0x38] sm:$0xff]
      %v493 = vld [vmem:[%s381 + $0x40] sm:$0xff]
      %v494 = vld [vmem:[%s381 + $0x48] sm:$0xff]
      %v495 = vld [vmem:[%s381 + $0x50] sm:$0xff]
      %v496 = vld [vmem:[%s381 + $0x58] sm:$0xff]
      %v497 = vld [vmem:[%s381 + $0x60] sm:$0xff]
      %v498 = vld [vmem:[%s381 + $0x68] sm:$0xff]
      %v499 = vld [vmem:[%s381 + $0x70] sm:$0xff]
      %v500 = vld [vmem:[%s381 + $0x78] sm:$0xff]
      %v501 = vld [vmem:[%s381 + $0x80] sm:$0xff]
      %v502 = vld [vmem:[%s381 + $0x88] sm:$0xff]
      %v503 = vld [vmem:[%s381 + $0x90] sm:$0xff]
      %v504 = vld [vmem:[%s381 + $0x98] sm:$0xff]
      %v505 = vld [vmem:[%s381 + $0xa0] sm:$0xff]
      %v506 = vld [vmem:[%s381 + $0xa8] sm:$0xff]
      %v507 = vld [vmem:[%s381 + $0xb0] sm:$0xff]
      %v508 = vld [vmem:[%s381 + $0xb8] sm:$0xff]
      %v509 = vld [vmem:[%s381 + $0xc0] sm:$0xff]
      %v510 = vld [vmem:[%s381 + $0xc8] sm:$0xff]
      %v511 = vld [vmem:[%s381 + $0xd0] sm:$0xff]
      %v512 = vld [vmem:[%s381 + $0xd8] sm:$0xff]
      %v513 = vld [vmem:[%s381 + $0xe0] sm:$0xff]
      %v514 = vld [vmem:[%s381 + $0xe8] sm:$0xff]
      %v515 = vld [vmem:[%s381 + $0xf0] sm:$0xff]
      %v516 = vld [vmem:[%s381 + $0xf8] sm:$0xff]
      %v517 = vpack.c.bf16 %v486, %v485
      %v518 = vpack.c.bf16 %v488, %v487
      %v519 = vpack.c.bf16 %v490, %v489
      %v520 = vpack.c.bf16 %v492, %v491
      %v521 = vpack.c.bf16 %v494, %v493
      %v522 = vpack.c.bf16 %v496, %v495
      %v523 = vpack.c.bf16 %v498, %v497
      %v524 = vpack.c.bf16 %v500, %v499
      %v525 = vpack.c.bf16 %v502, %v501
      %v526 = vpack.c.bf16 %v504, %v503
      %v527 = vpack.c.bf16 %v506, %v505
      %v528 = vpack.c.bf16 %v508, %v507
      %v529 = vpack.c.bf16 %v510, %v509
      %v530 = vpack.c.bf16 %v512, %v511
      %v531 = vpack.c.bf16 %v514, %v513
      %v532 = vpack.c.bf16 %v516, %v515
      %v533 = vld [vmem:[%s1] sm:$0x3]
      %v535 = vsel %vm419, %v517, 0
      %v538 = vsel %vm419, %v518, 0
      %v541 = vsel %vm419, %v519, 0
      %v544 = vsel %vm419, %v520, 0
      %v547 = vsel %vm419, %v521, 0
      %v550 = vsel %vm419, %v522, 0
      %v553 = vsel %vm419, %v523, 0
      %v556 = vsel %vm419, %v524, 0
      %v559 = vsel %vm419, %v525, 0
      %v562 = vsel %vm419, %v526, 0
      %v565 = vsel %vm419, %v527, 0
      %v568 = vsel %vm419, %v528, 0
      %v571 = vsel %vm419, %v529, 0
      %v574 = vsel %vm419, %v530, 0
      %v577 = vsel %vm419, %v531, 0
      %v580 = vsel %vm419, %v532, 0
      %vm582 = vcmask 1041408
      %v584 = vsel %vm582, %v533, 0
      %586 = vmatpush.bf16.msra.mxu0 0
      %587 = vmatpush.bf16.msra.mxu0 0
      %588 = vmatpush.bf16.msra.mxu0 0
      %589 = vmatpush.bf16.msra.mxu0 0
      %590 = vmatpush.bf16.msra.mxu0 0
      %591 = vmatpush.bf16.msra.mxu0 0
      %592 = vmatpush.bf16.msra.mxu0 0
      %593 = vmatpush.bf16.msra.mxu0 %v584
      %594 = vmatmul.bf16.gmra.mxu0 %v535
      %v595 = vpop.f32.mrf.mxu0
      %v596 = vadd.f32 0.0, %v595
      %v597 = vpop.f32.mrf.mxu0
      %v598 = vadd.f32 0.0, %v597
      %599 = vmatmul.bf16.gmra.mxu0 %v538
      %v600 = vpop.f32.mrf.mxu0
      %v601 = vadd.f32 0.0, %v600
      %v602 = vpop.f32.mrf.mxu0
      %v603 = vadd.f32 0.0, %v602
      %604 = vmatmul.bf16.gmra.mxu0 %v541
      %v605 = vpop.f32.mrf.mxu0
      %v606 = vadd.f32 0.0, %v605
      %v607 = vpop.f32.mrf.mxu0
      %v608 = vadd.f32 0.0, %v607
      %609 = vmatmul.bf16.gmra.mxu0 %v544
      %v610 = vpop.f32.mrf.mxu0
      %v611 = vadd.f32 0.0, %v610
      %v612 = vpop.f32.mrf.mxu0
      %v613 = vadd.f32 0.0, %v612
      %614 = vmatmul.bf16.gmra.mxu0 %v547
      %v615 = vpop.f32.mrf.mxu0
      %v616 = vadd.f32 0.0, %v615
      %v617 = vpop.f32.mrf.mxu0
      %v618 = vadd.f32 0.0, %v617
      %619 = vmatmul.bf16.gmra.mxu0 %v550
      %v620 = vpop.f32.mrf.mxu0
      %v621 = vadd.f32 0.0, %v620
      %v622 = vpop.f32.mrf.mxu0
      %v623 = vadd.f32 0.0, %v622
      %624 = vmatmul.bf16.gmra.mxu0 %v553
      %v625 = vpop.f32.mrf.mxu0
      %v626 = vadd.f32 0.0, %v625
      %v627 = vpop.f32.mrf.mxu0
      %v628 = vadd.f32 0.0, %v627
      %629 = vmatmul.bf16.gmra.mxu0 %v556
      %v630 = vpop.f32.mrf.mxu0
      %v631 = vadd.f32 0.0, %v630
      %v632 = vpop.f32.mrf.mxu0
      %v633 = vadd.f32 0.0, %v632
      %634 = vmatmul.bf16.gmra.mxu0 %v559
      %v635 = vpop.f32.mrf.mxu0
      %v636 = vadd.f32 0.0, %v635
      %v637 = vpop.f32.mrf.mxu0
      %v638 = vadd.f32 0.0, %v637
      %639 = vmatmul.bf16.gmra.mxu0 %v562
      %v640 = vpop.f32.mrf.mxu0
      %v641 = vadd.f32 0.0, %v640
      %v642 = vpop.f32.mrf.mxu0
      %v643 = vadd.f32 0.0, %v642
      %644 = vmatmul.bf16.gmra.mxu0 %v565
      %v645 = vpop.f32.mrf.mxu0
      %v646 = vadd.f32 0.0, %v645
      %v647 = vpop.f32.mrf.mxu0
      %v648 = vadd.f32 0.0, %v647
      %649 = vmatmul.bf16.gmra.mxu0 %v568
      %v650 = vpop.f32.mrf.mxu0
      %v651 = vadd.f32 0.0, %v650
      %v652 = vpop.f32.mrf.mxu0
      %v653 = vadd.f32 0.0, %v652
      %654 = vmatmul.bf16.gmra.mxu0 %v571
      %v655 = vpop.f32.mrf.mxu0
      %v656 = vadd.f32 0.0, %v655
      %v657 = vpop.f32.mrf.mxu0
      %v658 = vadd.f32 0.0, %v657
      %659 = vmatmul.bf16.gmra.mxu0 %v574
      %v660 = vpop.f32.mrf.mxu0
      %v661 = vadd.f32 0.0, %v660
      %v662 = vpop.f32.mrf.mxu0
      %v663 = vadd.f32 0.0, %v662
      %664 = vmatmul.bf16.gmra.mxu0 %v577
      %v665 = vpop.f32.mrf.mxu0
      %v666 = vadd.f32 0.0, %v665
      %v667 = vpop.f32.mrf.mxu0
      %v668 = vadd.f32 0.0, %v667
      %669 = vmatmul.bf16.gmra.mxu0 %v580
      %v670 = vpop.f32.mrf.mxu0
      %v671 = vadd.f32 0.0, %v670
      %v672 = vpop.f32.mrf.mxu0
      %v673 = vadd.f32 0.0, %v672
      %674 = vdwg.mxu0
      %v675 = vld [vmem:[%s2] sm:$0x1]
      %v677 = vperm.slane %v675, 0
      %v679 = vmul.f32 %v596, %v677
      %v680 = vmul.f32 %v598, %v677
      %v681 = vmul.f32 %v601, %v677
      %v682 = vmul.f32 %v603, %v677
      %v683 = vmul.f32 %v606, %v677
      %v684 = vmul.f32 %v608, %v677
      %v685 = vmul.f32 %v611, %v677
      %v686 = vmul.f32 %v613, %v677
      %v687 = vmul.f32 %v616, %v677
      %v688 = vmul.f32 %v618, %v677
      %v689 = vmul.f32 %v621, %v677
      %v690 = vmul.f32 %v623, %v677
      %v691 = vmul.f32 %v626, %v677
      %v692 = vmul.f32 %v628, %v677
      %v693 = vmul.f32 %v631, %v677
      %v694 = vmul.f32 %v633, %v677
      %v695 = vmul.f32 %v636, %v677
      %v696 = vmul.f32 %v638, %v677
      %v697 = vmul.f32 %v641, %v677
      %v698 = vmul.f32 %v643, %v677
      %v699 = vmul.f32 %v646, %v677
      %v700 = vmul.f32 %v648, %v677
      %v701 = vmul.f32 %v651, %v677
      %v702 = vmul.f32 %v653, %v677
      %v703 = vmul.f32 %v656, %v677
      %v704 = vmul.f32 %v658, %v677
      %v705 = vmul.f32 %v661, %v677
      %v706 = vmul.f32 %v663, %v677
      %v707 = vmul.f32 %v666, %v677
      %v708 = vmul.f32 %v668, %v677
      %v709 = vmul.f32 %v671, %v677
      %v710 = vmul.f32 %v673, %v677
      %v711 = vld [vmem:[%s3] sm:$0x1]
      %v713 = vperm.slane %v711, 0
      %v715 = vadd.f32 %v679, %v713
      %v716 = vadd.f32 %v680, %v713
      %v717 = vadd.f32 %v681, %v713
      %v718 = vadd.f32 %v682, %v713
      %v719 = vadd.f32 %v683, %v713
      %v720 = vadd.f32 %v684, %v713
      %v721 = vadd.f32 %v685, %v713
      %v722 = vadd.f32 %v686, %v713
      %v723 = vadd.f32 %v687, %v713
      %v724 = vadd.f32 %v688, %v713
      %v725 = vadd.f32 %v689, %v713
      %v726 = vadd.f32 %v690, %v713
      %v727 = vadd.f32 %v691, %v713
      %v728 = vadd.f32 %v692, %v713
      %v729 = vadd.f32 %v693, %v713
      %v730 = vadd.f32 %v694, %v713
      %v731 = vadd.f32 %v695, %v713
      %v732 = vadd.f32 %v696, %v713
      %v733 = vadd.f32 %v697, %v713
      %v734 = vadd.f32 %v698, %v713
      %v735 = vadd.f32 %v699, %v713
      %v736 = vadd.f32 %v700, %v713
      %v737 = vadd.f32 %v701, %v713
      %v738 = vadd.f32 %v702, %v713
      %v739 = vadd.f32 %v703, %v713
      %v740 = vadd.f32 %v704, %v713
      %v741 = vadd.f32 %v705, %v713
      %v742 = vadd.f32 %v706, %v713
      %v743 = vadd.f32 %v707, %v713
      %v744 = vadd.f32 %v708, %v713
      %v745 = vadd.f32 %v709, %v713
      %v746 = vadd.f32 %v710, %v713
      %v747 = vmax.f32 %v715, 0.0
      %v748 = vmax.f32 %v716, 0.0
      %v749 = vmax.f32 %v717, 0.0
      %v750 = vmax.f32 %v718, 0.0
      %v751 = vmax.f32 %v719, 0.0
      %v752 = vmax.f32 %v720, 0.0
      %v753 = vmax.f32 %v721, 0.0
      %v754 = vmax.f32 %v722, 0.0
      %v755 = vmax.f32 %v723, 0.0
      %v756 = vmax.f32 %v724, 0.0
      %v757 = vmax.f32 %v725, 0.0
      %v758 = vmax.f32 %v726, 0.0
      %v759 = vmax.f32 %v727, 0.0
      %v760 = vmax.f32 %v728, 0.0
      %v761 = vmax.f32 %v729, 0.0
      %v762 = vmax.f32 %v730, 0.0
      %v763 = vmax.f32 %v731, 0.0
      %v764 = vmax.f32 %v732, 0.0
      %v765 = vmax.f32 %v733, 0.0
      %v766 = vmax.f32 %v734, 0.0
      %v767 = vmax.f32 %v735, 0.0
      %v768 = vmax.f32 %v736, 0.0
      %v769 = vmax.f32 %v737, 0.0
      %v770 = vmax.f32 %v738, 0.0
      %v771 = vmax.f32 %v739, 0.0
      %v772 = vmax.f32 %v740, 0.0
      %v773 = vmax.f32 %v741, 0.0
      %v774 = vmax.f32 %v742, 0.0
      %v775 = vmax.f32 %v743, 0.0
      %v776 = vmax.f32 %v744, 0.0
      %v777 = vmax.f32 %v745, 0.0
      %v778 = vmax.f32 %v746, 0.0
      %vm779 = vcmask 261120
      %780 = vst.msk [vmem:[#allocation2] sm:$0xff] %vm779, 0.0
      %781 = vst.msk [vmem:[#allocation2 + $0x8] sm:$0xff] %vm779, 0.0
      %vm782 = vcmask 254976
      %783 = vst.msk [vmem:[#allocation2 + $0x10] sm:$0x3] %vm782, 0.0
      %784 = vst.msk [vmem:[#allocation2 + $0x18] sm:$0xff] %vm779, 0.0
      %785 = vst.msk [vmem:[#allocation2 + $0x20] sm:$0xff] %vm779, 0.0
      %786 = vst.msk [vmem:[#allocation2 + $0x28] sm:$0x3] %vm782, 0.0
      %787 = vst.msk [vmem:[#allocation2 + $0x30] sm:$0xff] %vm779, 0.0
      %788 = vst.msk [vmem:[#allocation2 + $0x38] sm:$0xff] %vm779, 0.0
      %789 = vst.msk [vmem:[#allocation2 + $0x40] sm:$0x3] %vm782, 0.0
      %790 = vst.msk [vmem:[#allocation2 + $0x48] sm:$0xff] %vm779, 0.0
      %791 = vst.msk [vmem:[#allocation2 + $0x50] sm:$0xff] %vm779, 0.0
      %792 = vst.msk [vmem:[#allocation2 + $0x58] sm:$0x3] %vm782, 0.0
      %793 = vst.msk [vmem:[#allocation2 + $0x60] sm:$0xff] %vm779, 0.0
      %794 = vst.msk [vmem:[#allocation2 + $0x68] sm:$0xff] %vm779, 0.0
      %795 = vst.msk [vmem:[#allocation2 + $0x70] sm:$0x3] %vm782, 0.0
      %796 = vst.msk [vmem:[#allocation2 + $0x78] sm:$0xff] %vm779, 0.0
      %797 = vst.msk [vmem:[#allocation2 + $0x80] sm:$0xff] %vm779, 0.0
      %798 = vst.msk [vmem:[#allocation2 + $0x88] sm:$0x3] %vm782, 0.0
      %799 = vst.msk [vmem:[#allocation2 + $0x90] sm:$0xff] %vm779, 0.0
      %800 = vst.msk [vmem:[#allocation2 + $0x98] sm:$0xff] %vm779, 0.0
      %801 = vst.msk [vmem:[#allocation2 + $0xa0] sm:$0x3] %vm782, 0.0
      %802 = vst.msk [vmem:[#allocation2 + $0xa8] sm:$0xff] %vm779, 0.0
      %803 = vst.msk [vmem:[#allocation2 + $0xb0] sm:$0xff] %vm779, 0.0
      %804 = vst.msk [vmem:[#allocation2 + $0xb8] sm:$0x3] %vm782, 0.0
      %805 = vst.msk [vmem:[#allocation2 + $0xc0] sm:$0xff] %vm779, 0.0
      %806 = vst.msk [vmem:[#allocation2 + $0xc8] sm:$0xff] %vm779, 0.0
      %807 = vst.msk [vmem:[#allocation2 + $0xd0] sm:$0x3] %vm782, 0.0
      %808 = vst.msk [vmem:[#allocation2 + $0xd8] sm:$0xff] %vm779, 0.0
      %809 = vst.msk [vmem:[#allocation2 + $0xe0] sm:$0xff] %vm779, 0.0
      %810 = vst.msk [vmem:[#allocation2 + $0xe8] sm:$0x3] %vm782, 0.0
      %811 = vst.msk [vmem:[#allocation2 + $0xf0] sm:$0xff] %vm779, 0.0
      %812 = vst.msk [vmem:[#allocation2 + $0xf8] sm:$0xff] %vm779, 0.0
      %813 = vst.msk [vmem:[#allocation2 + $0x100] sm:$0x3] %vm782, 0.0
      %814 = vst.msk [vmem:[#allocation2 + $0x108] sm:$0xff] %vm779, 0.0
      %815 = vst.msk [vmem:[#allocation2 + $0x110] sm:$0xff] %vm779, 0.0
      %816 = vst.msk [vmem:[#allocation2 + $0x118] sm:$0x3] %vm782, 0.0
      %817 = vst.msk [vmem:[#allocation2 + $0x120] sm:$0xff] %vm779, 0.0
      %818 = vst.msk [vmem:[#allocation2 + $0x128] sm:$0xff] %vm779, 0.0
      %819 = vst.msk [vmem:[#allocation2 + $0x130] sm:$0x3] %vm782, 0.0
      %820 = vst.msk [vmem:[#allocation2 + $0x138] sm:$0xff] %vm779, 0.0
      %821 = vst.msk [vmem:[#allocation2 + $0x140] sm:$0xff] %vm779, 0.0
      %822 = vst.msk [vmem:[#allocation2 + $0x148] sm:$0x3] %vm782, 0.0
      %823 = vst.msk [vmem:[#allocation2 + $0x150] sm:$0xff] %vm779, 0.0
      %824 = vst.msk [vmem:[#allocation2 + $0x158] sm:$0xff] %vm779, 0.0
      %825 = vst.msk [vmem:[#allocation2 + $0x160] sm:$0x3] %vm782, 0.0
      %826 = vst.msk [vmem:[#allocation2 + $0x168] sm:$0xff] %vm779, 0.0
      %827 = vst.msk [vmem:[#allocation2 + $0x170] sm:$0xff] %vm779, 0.0
      %828 = vst.msk [vmem:[#allocation2 + $0x178] sm:$0x3] %vm782, 0.0
      %829 = vst.msk [vmem:[#allocation2 + $0x180] sm:$0xff] %vm779, 0.0
      %830 = vst.msk [vmem:[#allocation2 + $0x188] sm:$0xff] %vm779, 0.0
      %831 = vst.msk [vmem:[#allocation2 + $0x190] sm:$0x3] %vm782, 0.0
      %832 = vst.msk [vmem:[#allocation2 + $0x198] sm:$0xff] %vm779, 0.0
      %833 = vst.msk [vmem:[#allocation2 + $0x1a0] sm:$0xff] %vm779, 0.0
      %834 = vst.msk [vmem:[#allocation2 + $0x1a8] sm:$0x3] %vm782, 0.0
      %s835 = scalar_lea.vmem [#allocation2], 24
      %836 = vst.msk [vmem:[%s835 + $0x1] sm:$0xff] %vm779, %v747
      %837 = vst.msk [vmem:[%s835 + $0x9] sm:$0xff] %vm779, %v748
      %838 = vst.msk [vmem:[%s835 + $0x19] sm:$0xff] %vm779, %v749
      %839 = vst.msk [vmem:[%s835 + $0x21] sm:$0xff] %vm779, %v750
      %840 = vst.msk [vmem:[%s835 + $0x31] sm:$0xff] %vm779, %v751
      %841 = vst.msk [vmem:[%s835 + $0x39] sm:$0xff] %vm779, %v752
      %842 = vst.msk [vmem:[%s835 + $0x49] sm:$0xff] %vm779, %v753
      %843 = vst.msk [vmem:[%s835 + $0x51] sm:$0xff] %vm779, %v754
      %844 = vst.msk [vmem:[%s835 + $0x61] sm:$0xff] %vm779, %v755
      %845 = vst.msk [vmem:[%s835 + $0x69] sm:$0xff] %vm779, %v756
      %846 = vst.msk [vmem:[%s835 + $0x79] sm:$0xff] %vm779, %v757
      %847 = vst.msk [vmem:[%s835 + $0x81] sm:$0xff] %vm779, %v758
      %848 = vst.msk [vmem:[%s835 + $0x91] sm:$0xff] %vm779, %v759
      %849 = vst.msk [vmem:[%s835 + $0x99] sm:$0xff] %vm779, %v760
      %850 = vst.msk [vmem:[%s835 + $0xa9] sm:$0xff] %vm779, %v761
      %851 = vst.msk [vmem:[%s835 + $0xb1] sm:$0xff] %vm779, %v762
      %852 = vst.msk [vmem:[%s835 + $0xc1] sm:$0xff] %vm779, %v763
      %853 = vst.msk [vmem:[%s835 + $0xc9] sm:$0xff] %vm779, %v764
      %854 = vst.msk [vmem:[%s835 + $0xd9] sm:$0xff] %vm779, %v765
      %855 = vst.msk [vmem:[%s835 + $0xe1] sm:$0xff] %vm779, %v766
      %856 = vst.msk [vmem:[%s835 + $0xf1] sm:$0xff] %vm779, %v767
      %857 = vst.msk [vmem:[%s835 + $0xf9] sm:$0xff] %vm779, %v768
      %858 = vst.msk [vmem:[%s835 + $0x109] sm:$0xff] %vm779, %v769
      %859 = vst.msk [vmem:[%s835 + $0x111] sm:$0xff] %vm779, %v770
      %860 = vst.msk [vmem:[%s835 + $0x121] sm:$0xff] %vm779, %v771
      %861 = vst.msk [vmem:[%s835 + $0x129] sm:$0xff] %vm779, %v772
      %862 = vst.msk [vmem:[%s835 + $0x139] sm:$0xff] %vm779, %v773
      %863 = vst.msk [vmem:[%s835 + $0x141] sm:$0xff] %vm779, %v774
      %864 = vst.msk [vmem:[%s835 + $0x151] sm:$0xff] %vm779, %v775
      %865 = vst.msk [vmem:[%s835 + $0x159] sm:$0xff] %vm779, %v776
      %866 = vst.msk [vmem:[%s835 + $0x169] sm:$0xff] %vm779, %v777
      %867 = vst.msk [vmem:[%s835 + $0x171] sm:$0xff] %vm779, %v778
      %v868 = vld [vmem:[#allocation2] sm:$0xff]
      %v869 = vld [vmem:[#allocation2 + $0x8] sm:$0xff]
      %v870 = vld [vmem:[#allocation2 + $0x10] sm:$0x3]
      %v871 = vld [vmem:[#allocation2 + $0x18] sm:$0xff]
      %v872 = vld [vmem:[#allocation2 + $0x20] sm:$0xff]
      %v873 = vld [vmem:[#allocation2 + $0x28] sm:$0x3]
      %v874 = vld [vmem:[#allocation2 + $0x30] sm:$0xff]
      %v875 = vld [vmem:[#allocation2 + $0x38] sm:$0xff]
      %v876 = vld [vmem:[#allocation2 + $0x40] sm:$0x3]
      %v877 = vld [vmem:[#allocation2 + $0x48] sm:$0xff]
      %v878 = vld [vmem:[#allocation2 + $0x50] sm:$0xff]
      %v879 = vld [vmem:[#allocation2 + $0x58] sm:$0x3]
      %v880 = vld [vmem:[#allocation2 + $0x60] sm:$0xff]
      %v881 = vld [vmem:[#allocation2 + $0x68] sm:$0xff]
      %v882 = vld [vmem:[#allocation2 + $0x70] sm:$0x3]
      %v883 = vld [vmem:[#allocation2 + $0x78] sm:$0xff]
      %v884 = vld [vmem:[#allocation2 + $0x80] sm:$0xff]
      %v885 = vld [vmem:[#allocation2 + $0x88] sm:$0x3]
      %v886 = vld [vmem:[#allocation2 + $0x90] sm:$0xff]
      %v887 = vld [vmem:[#allocation2 + $0x98] sm:$0xff]
      %v888 = vld [vmem:[#allocation2 + $0xa0] sm:$0x3]
      %v889 = vld [vmem:[#allocation2 + $0xa8] sm:$0xff]
      %v890 = vld [vmem:[#allocation2 + $0xb0] sm:$0xff]
      %v891 = vld [vmem:[#allocation2 + $0xb8] sm:$0x3]
      %v892 = vld [vmem:[#allocation2 + $0xc0] sm:$0xff]
      %v893 = vld [vmem:[#allocation2 + $0xc8] sm:$0xff]
      %v894 = vld [vmem:[#allocation2 + $0xd0] sm:$0x3]
      %v895 = vld [vmem:[#allocation2 + $0xd8] sm:$0xff]
      %v896 = vld [vmem:[#allocation2 + $0xe0] sm:$0xff]
      %v897 = vld [vmem:[#allocation2 + $0xe8] sm:$0x3]
      %v898 = vld [vmem:[#allocation2 + $0xf0] sm:$0xff]
      %v899 = vld [vmem:[#allocation2 + $0xf8] sm:$0xff]
      %v900 = vld [vmem:[#allocation2 + $0x100] sm:$0x3]
      %v901 = vld [vmem:[#allocation2 + $0x108] sm:$0xff]
      %v902 = vld [vmem:[#allocation2 + $0x110] sm:$0xff]
      %v903 = vld [vmem:[#allocation2 + $0x118] sm:$0x3]
      %v904 = vld [vmem:[#allocation2 + $0x120] sm:$0xff]
      %v905 = vld [vmem:[#allocation2 + $0x128] sm:$0xff]
      %v906 = vld [vmem:[#allocation2 + $0x130] sm:$0x3]
      %v907 = vld [vmem:[#allocation2 + $0x138] sm:$0xff]
      %v908 = vld [vmem:[#allocation2 + $0x140] sm:$0xff]
      %v909 = vld [vmem:[#allocation2 + $0x148] sm:$0x3]
      %v910 = vld [vmem:[#allocation2 + $0x150] sm:$0xff]
      %v911 = vld [vmem:[#allocation2 + $0x158] sm:$0xff]
      %v912 = vld [vmem:[#allocation2 + $0x160] sm:$0x3]
      %v913 = vld [vmem:[#allocation2 + $0x168] sm:$0xff]
      %v914 = vld [vmem:[#allocation2 + $0x170] sm:$0xff]
      %v915 = vld [vmem:[#allocation2 + $0x178] sm:$0x3]
      %vm964 = vcmask 1046528
      %v965 = vrot.slane %v868, 1
      %v966 = vrot.slane %v869, 1
      %v967 = vsel %vm964, %v965, %v966
      %v968 = vrot.slane %v870, 1
      %v969 = vsel %vm964, %v966, %v968
      %v970 = vrot.slane %v871, 1
      %v971 = vrot.slane %v872, 1
      %v972 = vsel %vm964, %v970, %v971
      %v973 = vrot.slane %v873, 1
      %v974 = vsel %vm964, %v971, %v973
      %v975 = vrot.slane %v874, 1
      %v976 = vrot.slane %v875, 1
      %v977 = vsel %vm964, %v975, %v976
      %v978 = vrot.slane %v876, 1
      %v979 = vsel %vm964, %v976, %v978
      %v980 = vrot.slane %v877, 1
      %v981 = vrot.slane %v878, 1
      %v982 = vsel %vm964, %v980, %v981
      %v983 = vrot.slane %v879, 1
      %v984 = vsel %vm964, %v981, %v983
      %v985 = vrot.slane %v880, 1
      %v986 = vrot.slane %v881, 1
      %v987 = vsel %vm964, %v985, %v986
      %v988 = vrot.slane %v882, 1
      %v989 = vsel %vm964, %v986, %v988
      %v990 = vrot.slane %v883, 1
      %v991 = vrot.slane %v884, 1
      %v992 = vsel %vm964, %v990, %v991
      %v993 = vrot.slane %v885, 1
      %v994 = vsel %vm964, %v991, %v993
      %v995 = vrot.slane %v886, 1
      %v996 = vrot.slane %v887, 1
      %v997 = vsel %vm964, %v995, %v996
      %v998 = vrot.slane %v888, 1
      %v999 = vsel %vm964, %v996, %v998
      %v1000 = vrot.slane %v889, 1
      %v1001 = vrot.slane %v890, 1
      %v1002 = vsel %vm964, %v1000, %v1001
      %v1003 = vrot.slane %v891, 1
      %v1004 = vsel %vm964, %v1001, %v1003
      %v1005 = vrot.slane %v892, 1
      %v1006 = vrot.slane %v893, 1
      %v1007 = vsel %vm964, %v1005, %v1006
      %v1008 = vrot.slane %v894, 1
      %v1009 = vsel %vm964, %v1006, %v1008
      %v1010 = vrot.slane %v895, 1
      %v1011 = vrot.slane %v896, 1
      %v1012 = vsel %vm964, %v1010, %v1011
      %v1013 = vrot.slane %v897, 1
      %v1014 = vsel %vm964, %v1011, %v1013
      %v1015 = vrot.slane %v898, 1
      %v1016 = vrot.slane %v899, 1
      %v1017 = vsel %vm964, %v1015, %v1016
      %v1018 = vrot.slane %v900, 1
      %v1019 = vsel %vm964, %v1016, %v1018
      %v1020 = vrot.slane %v901, 1
      %v1021 = vrot.slane %v902, 1
      %v1022 = vsel %vm964, %v1020, %v1021
      %v1023 = vrot.slane %v903, 1
      %v1024 = vsel %vm964, %v1021, %v1023
      %v1025 = vrot.slane %v904, 1
      %v1026 = vrot.slane %v905, 1
      %v1027 = vsel %vm964, %v1025, %v1026
      %v1028 = vrot.slane %v906, 1
      %v1029 = vsel %vm964, %v1026, %v1028
      %v1030 = vrot.slane %v907, 1
      %v1031 = vrot.slane %v908, 1
      %v1032 = vsel %vm964, %v1030, %v1031
      %v1033 = vrot.slane %v909, 1
      %v1034 = vsel %vm964, %v1031, %v1033
      %v1035 = vrot.slane %v910, 1
      %v1036 = vrot.slane %v911, 1
      %v1037 = vsel %vm964, %v1035, %v1036
      %v1038 = vrot.slane %v912, 1
      %v1039 = vsel %vm964, %v1036, %v1038
      %v1040 = vrot.slane %v913, 1
      %v1041 = vrot.slane %v914, 1
      %v1042 = vsel %vm964, %v1040, %v1041
      %v1043 = vrot.slane %v915, 1
      %v1044 = vsel %vm964, %v1041, %v1043
      %1045 = vrot.lane.b32.xlu0 %v967, 32
      %v1046 = vpop.permute.xlu0 %1045
      %1047 = vrot.lane.b32.xlu0 %v969, 32
      %v1048 = vpop.permute.xlu0 %1047
      %1049 = vrot.lane.b32.xlu0 %v972, 32
      %v1050 = vpop.permute.xlu0 %1049
      %1051 = vrot.lane.b32.xlu0 %v974, 32
      %v1052 = vpop.permute.xlu0 %1051
      %1053 = vrot.lane.b32.xlu0 %v977, 32
      %v1054 = vpop.permute.xlu0 %1053
      %1055 = vrot.lane.b32.xlu0 %v979, 32
      %v1056 = vpop.permute.xlu0 %1055
      %1057 = vrot.lane.b32.xlu0 %v982, 32
      %v1058 = vpop.permute.xlu0 %1057
      %1059 = vrot.lane.b32.xlu0 %v984, 32
      %v1060 = vpop.permute.xlu0 %1059
      %1061 = vrot.lane.b32.xlu0 %v987, 32
      %v1062 = vpop.permute.xlu0 %1061
      %1063 = vrot.lane.b32.xlu0 %v989, 32
      %v1064 = vpop.permute.xlu0 %1063
      %1065 = vrot.lane.b32.xlu0 %v992, 32
      %v1066 = vpop.permute.xlu0 %1065
      %1067 = vrot.lane.b32.xlu0 %v994, 32
      %v1068 = vpop.permute.xlu0 %1067
      %1069 = vrot.lane.b32.xlu0 %v997, 32
      %v1070 = vpop.permute.xlu0 %1069
      %1071 = vrot.lane.b32.xlu0 %v999, 32
      %v1072 = vpop.permute.xlu0 %1071
      %1073 = vrot.lane.b32.xlu0 %v1002, 32
      %v1074 = vpop.permute.xlu0 %1073
      %1075 = vrot.lane.b32.xlu0 %v1004, 32
      %v1076 = vpop.permute.xlu0 %1075
      %1077 = vrot.lane.b32.xlu0 %v1007, 32
      %v1078 = vpop.permute.xlu0 %1077
      %1079 = vrot.lane.b32.xlu0 %v1009, 32
      %v1080 = vpop.permute.xlu0 %1079
      %1081 = vrot.lane.b32.xlu0 %v1012, 32
      %v1082 = vpop.permute.xlu0 %1081
      %1083 = vrot.lane.b32.xlu0 %v1014, 32
      %v1084 = vpop.permute.xlu0 %1083
      %1085 = vrot.lane.b32.xlu0 %v1017, 32
      %v1086 = vpop.permute.xlu0 %1085
      %1087 = vrot.lane.b32.xlu0 %v1019, 32
      %v1088 = vpop.permute.xlu0 %1087
      %1089 = vrot.lane.b32.xlu0 %v1022, 32
      %v1090 = vpop.permute.xlu0 %1089
      %1091 = vrot.lane.b32.xlu0 %v1024, 32
      %v1092 = vpop.permute.xlu0 %1091
      %1093 = vrot.lane.b32.xlu0 %v1027, 32
      %v1094 = vpop.permute.xlu0 %1093
      %1095 = vrot.lane.b32.xlu0 %v1029, 32
      %v1096 = vpop.permute.xlu0 %1095
      %1097 = vrot.lane.b32.xlu0 %v1032, 32
      %v1098 = vpop.permute.xlu0 %1097
      %1099 = vrot.lane.b32.xlu0 %v1034, 32
      %v1100 = vpop.permute.xlu0 %1099
      %1101 = vrot.lane.b32.xlu0 %v1037, 32
      %v1102 = vpop.permute.xlu0 %1101
      %1103 = vrot.lane.b32.xlu0 %v1039, 32
      %v1104 = vpop.permute.xlu0 %1103
      %1105 = vrot.lane.b32.xlu0 %v1042, 32
      %v1106 = vpop.permute.xlu0 %1105
      %1107 = vrot.lane.b32.xlu0 %v1044, 32
      %v1108 = vpop.permute.xlu0 %1107
      %vm1141 = vcmask 1045504
      %v1142 = vrot.slane %v868, 2
      %v1143 = vrot.slane %v869, 2
      %v1144 = vsel %vm1141, %v1142, %v1143
      %v1145 = vrot.slane %v870, 2
      %v1146 = vsel %vm1141, %v1143, %v1145
      %v1147 = vrot.slane %v871, 2
      %v1148 = vrot.slane %v872, 2
      %v1149 = vsel %vm1141, %v1147, %v1148
      %v1150 = vrot.slane %v873, 2
      %v1151 = vsel %vm1141, %v1148, %v1150
      %v1152 = vrot.slane %v874, 2
      %v1153 = vrot.slane %v875, 2
      %v1154 = vsel %vm1141, %v1152, %v1153
      %v1155 = vrot.slane %v876, 2
      %v1156 = vsel %vm1141, %v1153, %v1155
      %v1157 = vrot.slane %v877, 2
      %v1158 = vrot.slane %v878, 2
      %v1159 = vsel %vm1141, %v1157, %v1158
      %v1160 = vrot.slane %v879, 2
      %v1161 = vsel %vm1141, %v1158, %v1160
      %v1162 = vrot.slane %v880, 2
      %v1163 = vrot.slane %v881, 2
      %v1164 = vsel %vm1141, %v1162, %v1163
      %v1165 = vrot.slane %v882, 2
      %v1166 = vsel %vm1141, %v1163, %v1165
      %v1167 = vrot.slane %v883, 2
      %v1168 = vrot.slane %v884, 2
      %v1169 = vsel %vm1141, %v1167, %v1168
      %v1170 = vrot.slane %v885, 2
      %v1171 = vsel %vm1141, %v1168, %v1170
      %v1172 = vrot.slane %v886, 2
      %v1173 = vrot.slane %v887, 2
      %v1174 = vsel %vm1141, %v1172, %v1173
      %v1175 = vrot.slane %v888, 2
      %v1176 = vsel %vm1141, %v1173, %v1175
      %v1177 = vrot.slane %v889, 2
      %v1178 = vrot.slane %v890, 2
      %v1179 = vsel %vm1141, %v1177, %v1178
      %v1180 = vrot.slane %v891, 2
      %v1181 = vsel %vm1141, %v1178, %v1180
      %v1182 = vrot.slane %v892, 2
      %v1183 = vrot.slane %v893, 2
      %v1184 = vsel %vm1141, %v1182, %v1183
      %v1185 = vrot.slane %v894, 2
      %v1186 = vsel %vm1141, %v1183, %v1185
      %v1187 = vrot.slane %v895, 2
      %v1188 = vrot.slane %v896, 2
      %v1189 = vsel %vm1141, %v1187, %v1188
      %v1190 = vrot.slane %v897, 2
      %v1191 = vsel %vm1141, %v1188, %v1190
      %v1192 = vrot.slane %v898, 2
      %v1193 = vrot.slane %v899, 2
      %v1194 = vsel %vm1141, %v1192, %v1193
      %v1195 = vrot.slane %v900, 2
      %v1196 = vsel %vm1141, %v1193, %v1195
      %v1197 = vrot.slane %v901, 2
      %v1198 = vrot.slane %v902, 2
      %v1199 = vsel %vm1141, %v1197, %v1198
      %v1200 = vrot.slane %v903, 2
      %v1201 = vsel %vm1141, %v1198, %v1200
      %v1202 = vrot.slane %v904, 2
      %v1203 = vrot.slane %v905, 2
      %v1204 = vsel %vm1141, %v1202, %v1203
      %v1205 = vrot.slane %v906, 2
      %v1206 = vsel %vm1141, %v1203, %v1205
      %v1207 = vrot.slane %v907, 2
      %v1208 = vrot.slane %v908, 2
      %v1209 = vsel %vm1141, %v1207, %v1208
      %v1210 = vrot.slane %v909, 2
      %v1211 = vsel %vm1141, %v1208, %v1210
      %v1212 = vrot.slane %v910, 2
      %v1213 = vrot.slane %v911, 2
      %v1214 = vsel %vm1141, %v1212, %v1213
      %v1215 = vrot.slane %v912, 2
      %v1216 = vsel %vm1141, %v1213, %v1215
      %v1217 = vrot.slane %v913, 2
      %v1218 = vrot.slane %v914, 2
      %v1219 = vsel %vm1141, %v1217, %v1218
      %v1220 = vrot.slane %v915, 2
      %v1221 = vsel %vm1141, %v1218, %v1220
      %1222 = vrot.lane.b32.xlu0 %v1144, 64
      %v1223 = vpop.permute.xlu0 %1222
      %1224 = vrot.lane.b32.xlu0 %v1146, 64
      %v1225 = vpop.permute.xlu0 %1224
      %1226 = vrot.lane.b32.xlu0 %v1149, 64
      %v1227 = vpop.permute.xlu0 %1226
      %1228 = vrot.lane.b32.xlu0 %v1151, 64
      %v1229 = vpop.permute.xlu0 %1228
      %1230 = vrot.lane.b32.xlu0 %v1154, 64
      %v1231 = vpop.permute.xlu0 %1230
      %1232 = vrot.lane.b32.xlu0 %v1156, 64
      %v1233 = vpop.permute.xlu0 %1232
      %1234 = vrot.lane.b32.xlu0 %v1159, 64
      %v1235 = vpop.permute.xlu0 %1234
      %1236 = vrot.lane.b32.xlu0 %v1161, 64
      %v1237 = vpop.permute.xlu0 %1236
      %1238 = vrot.lane.b32.xlu0 %v1164, 64
      %v1239 = vpop.permute.xlu0 %1238
      %1240 = vrot.lane.b32.xlu0 %v1166, 64
      %v1241 = vpop.permute.xlu0 %1240
      %1242 = vrot.lane.b32.xlu0 %v1169, 64
      %v1243 = vpop.permute.xlu0 %1242
      %1244 = vrot.lane.b32.xlu0 %v1171, 64
      %v1245 = vpop.permute.xlu0 %1244
      %1246 = vrot.lane.b32.xlu0 %v1174, 64
      %v1247 = vpop.permute.xlu0 %1246
      %1248 = vrot.lane.b32.xlu0 %v1176, 64
      %v1249 = vpop.permute.xlu0 %1248
      %1250 = vrot.lane.b32.xlu0 %v1179, 64
      %v1251 = vpop.permute.xlu0 %1250
      %1252 = vrot.lane.b32.xlu0 %v1181, 64
      %v1253 = vpop.permute.xlu0 %1252
      %1254 = vrot.lane.b32.xlu0 %v1184, 64
      %v1255 = vpop.permute.xlu0 %1254
      %1256 = vrot.lane.b32.xlu0 %v1186, 64
      %v1257 = vpop.permute.xlu0 %1256
      %1258 = vrot.lane.b32.xlu0 %v1189, 64
      %v1259 = vpop.permute.xlu0 %1258
      %1260 = vrot.lane.b32.xlu0 %v1191, 64
      %v1261 = vpop.permute.xlu0 %1260
      %1262 = vrot.lane.b32.xlu0 %v1194, 64
      %v1263 = vpop.permute.xlu0 %1262
      %1264 = vrot.lane.b32.xlu0 %v1196, 64
      %v1265 = vpop.permute.xlu0 %1264
      %1266 = vrot.lane.b32.xlu0 %v1199, 64
      %v1267 = vpop.permute.xlu0 %1266
      %1268 = vrot.lane.b32.xlu0 %v1201, 64
      %v1269 = vpop.permute.xlu0 %1268
      %1270 = vrot.lane.b32.xlu0 %v1204, 64
      %v1271 = vpop.permute.xlu0 %1270
      %1272 = vrot.lane.b32.xlu0 %v1206, 64
      %v1273 = vpop.permute.xlu0 %1272
      %1274 = vrot.lane.b32.xlu0 %v1209, 64
      %v1275 = vpop.permute.xlu0 %1274
      %1276 = vrot.lane.b32.xlu0 %v1211, 64
      %v1277 = vpop.permute.xlu0 %1276
      %1278 = vrot.lane.b32.xlu0 %v1214, 64
      %v1279 = vpop.permute.xlu0 %1278
      %1280 = vrot.lane.b32.xlu0 %v1216, 64
      %v1281 = vpop.permute.xlu0 %1280
      %1282 = vrot.lane.b32.xlu0 %v1219, 64
      %v1283 = vpop.permute.xlu0 %1282
      %1284 = vrot.lane.b32.xlu0 %v1221, 64
      %v1285 = vpop.permute.xlu0 %1284
      %v1318 = vsel %vm779, %v868, %v1046
      %v1319 = vsel %vm779, %v869, %v1048
      %v1320 = vsel %vm779, %v871, %v1050
      %v1321 = vsel %vm779, %v872, %v1052
      %v1322 = vsel %vm779, %v874, %v1054
      %v1323 = vsel %vm779, %v875, %v1056
      %v1324 = vsel %vm779, %v877, %v1058
      %v1325 = vsel %vm779, %v878, %v1060
      %v1326 = vsel %vm779, %v880, %v1062
      %v1327 = vsel %vm779, %v881, %v1064
      %v1328 = vsel %vm779, %v883, %v1066
      %v1329 = vsel %vm779, %v884, %v1068
      %v1330 = vsel %vm779, %v886, %v1070
      %v1331 = vsel %vm779, %v887, %v1072
      %v1332 = vsel %vm779, %v889, %v1074
      %v1333 = vsel %vm779, %v890, %v1076
      %v1334 = vsel %vm779, %v892, %v1078
      %v1335 = vsel %vm779, %v893, %v1080
      %v1336 = vsel %vm779, %v895, %v1082
      %v1337 = vsel %vm779, %v896, %v1084
      %v1338 = vsel %vm779, %v898, %v1086
      %v1339 = vsel %vm779, %v899, %v1088
      %v1340 = vsel %vm779, %v901, %v1090
      %v1341 = vsel %vm779, %v902, %v1092
      %v1342 = vsel %vm779, %v904, %v1094
      %v1343 = vsel %vm779, %v905, %v1096
      %v1344 = vsel %vm779, %v907, %v1098
      %v1345 = vsel %vm779, %v908, %v1100
      %v1346 = vsel %vm779, %v910, %v1102
      %v1347 = vsel %vm779, %v911, %v1104
      %v1348 = vsel %vm779, %v913, %v1106
      %v1349 = vsel %vm779, %v914, %v1108
      %vm1350 = vcmask 523264
      %v1351 = vsel %vm1350, %v1318, %v1223
      %v1352 = vsel %vm1350, %v1319, %v1225
      %v1353 = vsel %vm1350, %v1320, %v1227
      %v1354 = vsel %vm1350, %v1321, %v1229
      %v1355 = vsel %vm1350, %v1322, %v1231
      %v1356 = vsel %vm1350, %v1323, %v1233
      %v1357 = vsel %vm1350, %v1324, %v1235
      %v1358 = vsel %vm1350, %v1325, %v1237
      %v1359 = vsel %vm1350, %v1326, %v1239
      %v1360 = vsel %vm1350, %v1327, %v1241
      %v1361 = vsel %vm1350, %v1328, %v1243
      %v1362 = vsel %vm1350, %v1329, %v1245
      %v1363 = vsel %vm1350, %v1330, %v1247
      %v1364 = vsel %vm1350, %v1331, %v1249
      %v1365 = vsel %vm1350, %v1332, %v1251
      %v1366 = vsel %vm1350, %v1333, %v1253
      %v1367 = vsel %vm1350, %v1334, %v1255
      %v1368 = vsel %vm1350, %v1335, %v1257
      %v1369 = vsel %vm1350, %v1336, %v1259
      %v1370 = vsel %vm1350, %v1337, %v1261
      %v1371 = vsel %vm1350, %v1338, %v1263
      %v1372 = vsel %vm1350, %v1339, %v1265
      %v1373 = vsel %vm1350, %v1340, %v1267
      %v1374 = vsel %vm1350, %v1341, %v1269
      %v1375 = vsel %vm1350, %v1342, %v1271
      %v1376 = vsel %vm1350, %v1343, %v1273
      %v1377 = vsel %vm1350, %v1344, %v1275
      %v1378 = vsel %vm1350, %v1345, %v1277
      %v1379 = vsel %vm1350, %v1346, %v1279
      %v1380 = vsel %vm1350, %v1347, %v1281
      %v1381 = vsel %vm1350, %v1348, %v1283
      %v1382 = vsel %vm1350, %v1349, %v1285
      %v1383 = vpack.c.bf16 %v1352, %v1351
      %v1384 = vpack.c.bf16 %v1354, %v1353
      %v1385 = vpack.c.bf16 %v1356, %v1355
      %v1386 = vpack.c.bf16 %v1358, %v1357
      %v1387 = vpack.c.bf16 %v1360, %v1359
      %v1388 = vpack.c.bf16 %v1362, %v1361
      %v1389 = vpack.c.bf16 %v1364, %v1363
      %v1390 = vpack.c.bf16 %v1366, %v1365
      %v1391 = vpack.c.bf16 %v1368, %v1367
      %v1392 = vpack.c.bf16 %v1370, %v1369
      %v1393 = vpack.c.bf16 %v1372, %v1371
      %v1394 = vpack.c.bf16 %v1374, %v1373
      %v1395 = vpack.c.bf16 %v1376, %v1375
      %v1396 = vpack.c.bf16 %v1378, %v1377
      %v1397 = vpack.c.bf16 %v1380, %v1379
      %v1398 = vpack.c.bf16 %v1382, %v1381
      %v1399 = vld [vmem:[%s4] sm:$0xf]
      %v1400 = vld [vmem:[%s4 + $0x4] sm:$0xf]
      %v1401 = vld [vmem:[%s4 + $0x8] sm:$0xf]
      %v1402 = vld [vmem:[%s4 + $0xc] sm:$0xf]
      %v1403 = vld [vmem:[%s4 + $0x10] sm:$0xf]
      %v1404 = vld [vmem:[%s4 + $0x14] sm:$0xf]
      %v1405 = vld [vmem:[%s4 + $0x18] sm:$0xf]
      %v1406 = vld [vmem:[%s4 + $0x1c] sm:$0xf]
      %v1407 = vld [vmem:[%s4 + $0x20] sm:$0xf]
      %v1408 = vld [vmem:[%s4 + $0x24] sm:$0xf]
      %v1409 = vld [vmem:[%s4 + $0x28] sm:$0xf]
      %v1410 = vld [vmem:[%s4 + $0x2c] sm:$0xf]
      %v1411 = vld [vmem:[%s835] sm:$0xff]
      %v1412 = vld [vmem:[%s835 + $0x8] sm:$0xff]
      %v1413 = vld [vmem:[%s835 + $0x10] sm:$0x3]
      %v1414 = vld [vmem:[%s835 + $0x18] sm:$0xff]
      %v1415 = vld [vmem:[%s835 + $0x20] sm:$0xff]
      %v1416 = vld [vmem:[%s835 + $0x28] sm:$0x3]
      %v1417 = vld [vmem:[%s835 + $0x30] sm:$0xff]
      %v1418 = vld [vmem:[%s835 + $0x38] sm:$0xff]
      %v1419 = vld [vmem:[%s835 + $0x40] sm:$0x3]
      %v1420 = vld [vmem:[%s835 + $0x48] sm:$0xff]
      %v1421 = vld [vmem:[%s835 + $0x50] sm:$0xff]
      %v1422 = vld [vmem:[%s835 + $0x58] sm:$0x3]
      %v1423 = vld [vmem:[%s835 + $0x60] sm:$0xff]
      %v1424 = vld [vmem:[%s835 + $0x68] sm:$0xff]
      %v1425 = vld [vmem:[%s835 + $0x70] sm:$0x3]
      %v1426 = vld [vmem:[%s835 + $0x78] sm:$0xff]
      %v1427 = vld [vmem:[%s835 + $0x80] sm:$0xff]
      %v1428 = vld [vmem:[%s835 + $0x88] sm:$0x3]
      %v1429 = vld [vmem:[%s835 + $0x90] sm:$0xff]
      %v1430 = vld [vmem:[%s835 + $0x98] sm:$0xff]
      %v1431 = vld [vmem:[%s835 + $0xa0] sm:$0x3]
      %v1432 = vld [vmem:[%s835 + $0xa8] sm:$0xff]
      %v1433 = vld [vmem:[%s835 + $0xb0] sm:$0xff]
      %v1434 = vld [vmem:[%s835 + $0xb8] sm:$0x3]
      %v1435 = vld [vmem:[%s835 + $0xc0] sm:$0xff]
      %v1436 = vld [vmem:[%s835 + $0xc8] sm:$0xff]
      %v1437 = vld [vmem:[%s835 + $0xd0] sm:$0x3]
      %v1438 = vld [vmem:[%s835 + $0xd8] sm:$0xff]
      %v1439 = vld [vmem:[%s835 + $0xe0] sm:$0xff]
      %v1440 = vld [vmem:[%s835 + $0xe8] sm:$0x3]
      %v1441 = vld [vmem:[%s835 + $0xf0] sm:$0xff]
      %v1442 = vld [vmem:[%s835 + $0xf8] sm:$0xff]
      %v1443 = vld [vmem:[%s835 + $0x100] sm:$0x3]
      %v1444 = vld [vmem:[%s835 + $0x108] sm:$0xff]
      %v1445 = vld [vmem:[%s835 + $0x110] sm:$0xff]
      %v1446 = vld [vmem:[%s835 + $0x118] sm:$0x3]
      %v1447 = vld [vmem:[%s835 + $0x120] sm:$0xff]
      %v1448 = vld [vmem:[%s835 + $0x128] sm:$0xff]
      %v1449 = vld [vmem:[%s835 + $0x130] sm:$0x3]
      %v1450 = vld [vmem:[%s835 + $0x138] sm:$0xff]
      %v1451 = vld [vmem:[%s835 + $0x140] sm:$0xff]
      %v1452 = vld [vmem:[%s835 + $0x148] sm:$0x3]
      %v1453 = vld [vmem:[%s835 + $0x150] sm:$0xff]
      %v1454 = vld [vmem:[%s835 + $0x158] sm:$0xff]
      %v1455 = vld [vmem:[%s835 + $0x160] sm:$0x3]
      %v1456 = vld [vmem:[%s835 + $0x168] sm:$0xff]
      %v1457 = vld [vmem:[%s835 + $0x170] sm:$0xff]
      %v1458 = vld [vmem:[%s835 + $0x178] sm:$0x3]
      %v1507 = vrot.slane %v1411, 1
      %v1508 = vrot.slane %v1412, 1
      %v1509 = vsel %vm964, %v1507, %v1508
      %v1510 = vrot.slane %v1413, 1
      %v1511 = vsel %vm964, %v1508, %v1510
      %v1512 = vrot.slane %v1414, 1
      %v1513 = vrot.slane %v1415, 1
      %v1514 = vsel %vm964, %v1512, %v1513
      %v1515 = vrot.slane %v1416, 1
      %v1516 = vsel %vm964, %v1513, %v1515
      %v1517 = vrot.slane %v1417, 1
      %v1518 = vrot.slane %v1418, 1
      %v1519 = vsel %vm964, %v1517, %v1518
      %v1520 = vrot.slane %v1419, 1
      %v1521 = vsel %vm964, %v1518, %v1520
      %v1522 = vrot.slane %v1420, 1
      %v1523 = vrot.slane %v1421, 1
      %v1524 = vsel %vm964, %v1522, %v1523
      %v1525 = vrot.slane %v1422, 1
      %v1526 = vsel %vm964, %v1523, %v1525
      %v1527 = vrot.slane %v1423, 1
      %v1528 = vrot.slane %v1424, 1
      %v1529 = vsel %vm964, %v1527, %v1528
      %v1530 = vrot.slane %v1425, 1
      %v1531 = vsel %vm964, %v1528, %v1530
      %v1532 = vrot.slane %v1426, 1
      %v1533 = vrot.slane %v1427, 1
      %v1534 = vsel %vm964, %v1532, %v1533
      %v1535 = vrot.slane %v1428, 1
      %v1536 = vsel %vm964, %v1533, %v1535
      %v1537 = vrot.slane %v1429, 1
      %v1538 = vrot.slane %v1430, 1
      %v1539 = vsel %vm964, %v1537, %v1538
      %v1540 = vrot.slane %v1431, 1
      %v1541 = vsel %vm964, %v1538, %v1540
      %v1542 = vrot.slane %v1432, 1
      %v1543 = vrot.slane %v1433, 1
      %v1544 = vsel %vm964, %v1542, %v1543
      %v1545 = vrot.slane %v1434, 1
      %v1546 = vsel %vm964, %v1543, %v1545
      %v1547 = vrot.slane %v1435, 1
      %v1548 = vrot.slane %v1436, 1
      %v1549 = vsel %vm964, %v1547, %v1548
      %v1550 = vrot.slane %v1437, 1
      %v1551 = vsel %vm964, %v1548, %v1550
      %v1552 = vrot.slane %v1438, 1
      %v1553 = vrot.slane %v1439, 1
      %v1554 = vsel %vm964, %v1552, %v1553
      %v1555 = vrot.slane %v1440, 1
      %v1556 = vsel %vm964, %v1553, %v1555
      %v1557 = vrot.slane %v1441, 1
      %v1558 = vrot.slane %v1442, 1
      %v1559 = vsel %vm964, %v1557, %v1558
      %v1560 = vrot.slane %v1443, 1
      %v1561 = vsel %vm964, %v1558, %v1560
      %v1562 = vrot.slane %v1444, 1
      %v1563 = vrot.slane %v1445, 1
      %v1564 = vsel %vm964, %v1562, %v1563
      %v1565 = vrot.slane %v1446, 1
      %v1566 = vsel %vm964, %v1563, %v1565
      %v1567 = vrot.slane %v1447, 1
      %v1568 = vrot.slane %v1448, 1
      %v1569 = vsel %vm964, %v1567, %v1568
      %v1570 = vrot.slane %v1449, 1
      %v1571 = vsel %vm964, %v1568, %v1570
      %v1572 = vrot.slane %v1450, 1
      %v1573 = vrot.slane %v1451, 1
      %v1574 = vsel %vm964, %v1572, %v1573
      %v1575 = vrot.slane %v1452, 1
      %v1576 = vsel %vm964, %v1573, %v1575
      %v1577 = vrot.slane %v1453, 1
      %v1578 = vrot.slane %v1454, 1
      %v1579 = vsel %vm964, %v1577, %v1578
      %v1580 = vrot.slane %v1455, 1
      %v1581 = vsel %vm964, %v1578, %v1580
      %v1582 = vrot.slane %v1456, 1
      %v1583 = vrot.slane %v1457, 1
      %v1584 = vsel %vm964, %v1582, %v1583
      %v1585 = vrot.slane %v1458, 1
      %v1586 = vsel %vm964, %v1583, %v1585
      %1587 = vrot.lane.b32.xlu0 %v1509, 32
      %v1588 = vpop.permute.xlu0 %1587
      %1589 = vrot.lane.b32.xlu0 %v1511, 32
      %v1590 = vpop.permute.xlu0 %1589
      %1591 = vrot.lane.b32.xlu0 %v1514, 32
      %v1592 = vpop.permute.xlu0 %1591
      %1593 = vrot.lane.b32.xlu0 %v1516, 32
      %v1594 = vpop.permute.xlu0 %1593
      %1595 = vrot.lane.b32.xlu0 %v1519, 32
      %v1596 = vpop.permute.xlu0 %1595
      %1597 = vrot.lane.b32.xlu0 %v1521, 32
      %v1598 = vpop.permute.xlu0 %1597
      %1599 = vrot.lane.b32.xlu0 %v1524, 32
      %v1600 = vpop.permute.xlu0 %1599
      %1601 = vrot.lane.b32.xlu0 %v1526, 32
      %v1602 = vpop.permute.xlu0 %1601
      %1603 = vrot.lane.b32.xlu0 %v1529, 32
      %v1604 = vpop.permute.xlu0 %1603
      %1605 = vrot.lane.b32.xlu0 %v1531, 32
      %v1606 = vpop.permute.xlu0 %1605
      %1607 = vrot.lane.b32.xlu0 %v1534, 32
      %v1608 = vpop.permute.xlu0 %1607
      %1609 = vrot.lane.b32.xlu0 %v1536, 32
      %v1610 = vpop.permute.xlu0 %1609
      %1611 = vrot.lane.b32.xlu0 %v1539, 32
      %v1612 = vpop.permute.xlu0 %1611
      %1613 = vrot.lane.b32.xlu0 %v1541, 32
      %v1614 = vpop.permute.xlu0 %1613
      %1615 = vrot.lane.b32.xlu0 %v1544, 32
      %v1616 = vpop.permute.xlu0 %1615
      %1617 = vrot.lane.b32.xlu0 %v1546, 32
      %v1618 = vpop.permute.xlu0 %1617
      %1619 = vrot.lane.b32.xlu0 %v1549, 32
      %v1620 = vpop.permute.xlu0 %1619
      %1621 = vrot.lane.b32.xlu0 %v1551, 32
      %v1622 = vpop.permute.xlu0 %1621
      %1623 = vrot.lane.b32.xlu0 %v1554, 32
      %v1624 = vpop.permute.xlu0 %1623
      %1625 = vrot.lane.b32.xlu0 %v1556, 32
      %v1626 = vpop.permute.xlu0 %1625
      %1627 = vrot.lane.b32.xlu0 %v1559, 32
      %v1628 = vpop.permute.xlu0 %1627
      %1629 = vrot.lane.b32.xlu0 %v1561, 32
      %v1630 = vpop.permute.xlu0 %1629
      %1631 = vrot.lane.b32.xlu0 %v1564, 32
      %v1632 = vpop.permute.xlu0 %1631
      %1633 = vrot.lane.b32.xlu0 %v1566, 32
      %v1634 = vpop.permute.xlu0 %1633
      %1635 = vrot.lane.b32.xlu0 %v1569, 32
      %v1636 = vpop.permute.xlu0 %1635
      %1637 = vrot.lane.b32.xlu0 %v1571, 32
      %v1638 = vpop.permute.xlu0 %1637
      %1639 = vrot.lane.b32.xlu0 %v1574, 32
      %v1640 = vpop.permute.xlu0 %1639
      %1641 = vrot.lane.b32.xlu0 %v1576, 32
      %v1642 = vpop.permute.xlu0 %1641
      %1643 = vrot.lane.b32.xlu0 %v1579, 32
      %v1644 = vpop.permute.xlu0 %1643
      %1645 = vrot.lane.b32.xlu0 %v1581, 32
      %v1646 = vpop.permute.xlu0 %1645
      %1647 = vrot.lane.b32.xlu0 %v1584, 32
      %v1648 = vpop.permute.xlu0 %1647
      %1649 = vrot.lane.b32.xlu0 %v1586, 32
      %v1650 = vpop.permute.xlu0 %1649
      %v1683 = vrot.slane %v1411, 2
      %v1684 = vrot.slane %v1412, 2
      %v1685 = vsel %vm1141, %v1683, %v1684
      %v1686 = vrot.slane %v1413, 2
      %v1687 = vsel %vm1141, %v1684, %v1686
      %v1688 = vrot.slane %v1414, 2
      %v1689 = vrot.slane %v1415, 2
      %v1690 = vsel %vm1141, %v1688, %v1689
      %v1691 = vrot.slane %v1416, 2
      %v1692 = vsel %vm1141, %v1689, %v1691
      %v1693 = vrot.slane %v1417, 2
      %v1694 = vrot.slane %v1418, 2
      %v1695 = vsel %vm1141, %v1693, %v1694
      %v1696 = vrot.slane %v1419, 2
      %v1697 = vsel %vm1141, %v1694, %v1696
      %v1698 = vrot.slane %v1420, 2
      %v1699 = vrot.slane %v1421, 2
      %v1700 = vsel %vm1141, %v1698, %v1699
      %v1701 = vrot.slane %v1422, 2
      %v1702 = vsel %vm1141, %v1699, %v1701
      %v1703 = vrot.slane %v1423, 2
      %v1704 = vrot.slane %v1424, 2
      %v1705 = vsel %vm1141, %v1703, %v1704
      %v1706 = vrot.slane %v1425, 2
      %v1707 = vsel %vm1141, %v1704, %v1706
      %v1708 = vrot.slane %v1426, 2
      %v1709 = vrot.slane %v1427, 2
      %v1710 = vsel %vm1141, %v1708, %v1709
      %v1711 = vrot.slane %v1428, 2
      %v1712 = vsel %vm1141, %v1709, %v1711
      %v1713 = vrot.slane %v1429, 2
      %v1714 = vrot.slane %v1430, 2
      %v1715 = vsel %vm1141, %v1713, %v1714
      %v1716 = vrot.slane %v1431, 2
      %v1717 = vsel %vm1141, %v1714, %v1716
      %v1718 = vrot.slane %v1432, 2
      %v1719 = vrot.slane %v1433, 2
      %v1720 = vsel %vm1141, %v1718, %v1719
      %v1721 = vrot.slane %v1434, 2
      %v1722 = vsel %vm1141, %v1719, %v1721
      %v1723 = vrot.slane %v1435, 2
      %v1724 = vrot.slane %v1436, 2
      %v1725 = vsel %vm1141, %v1723, %v1724
      %v1726 = vrot.slane %v1437, 2
      %v1727 = vsel %vm1141, %v1724, %v1726
      %v1728 = vrot.slane %v1438, 2
      %v1729 = vrot.slane %v1439, 2
      %v1730 = vsel %vm1141, %v1728, %v1729
      %v1731 = vrot.slane %v1440, 2
      %v1732 = vsel %vm1141, %v1729, %v1731
      %v1733 = vrot.slane %v1441, 2
      %v1734 = vrot.slane %v1442, 2
      %v1735 = vsel %vm1141, %v1733, %v1734
      %v1736 = vrot.slane %v1443, 2
      %v1737 = vsel %vm1141, %v1734, %v1736
      %v1738 = vrot.slane %v1444, 2
      %v1739 = vrot.slane %v1445, 2
      %v1740 = vsel %vm1141, %v1738, %v1739
      %v1741 = vrot.slane %v1446, 2
      %v1742 = vsel %vm1141, %v1739, %v1741
      %v1743 = vrot.slane %v1447, 2
      %v1744 = vrot.slane %v1448, 2
      %v1745 = vsel %vm1141, %v1743, %v1744
      %v1746 = vrot.slane %v1449, 2
      %v1747 = vsel %vm1141, %v1744, %v1746
      %v1748 = vrot.slane %v1450, 2
      %v1749 = vrot.slane %v1451, 2
      %v1750 = vsel %vm1141, %v1748, %v1749
      %v1751 = vrot.slane %v1452, 2
      %v1752 = vsel %vm1141, %v1749, %v1751
      %v1753 = vrot.slane %v1453, 2
      %v1754 = vrot.slane %v1454, 2
      %v1755 = vsel %vm1141, %v1753, %v1754
      %v1756 = vrot.slane %v1455, 2
      %v1757 = vsel %vm1141, %v1754, %v1756
      %v1758 = vrot.slane %v1456, 2
      %v1759 = vrot.slane %v1457, 2
      %v1760 = vsel %vm1141, %v1758, %v1759
      %v1761 = vrot.slane %v1458, 2
      %v1762 = vsel %vm1141, %v1759, %v1761
      %1763 = vrot.lane.b32.xlu0 %v1685, 64
      %v1764 = vpop.permute.xlu0 %1763
      %1765 = vrot.lane.b32.xlu0 %v1687, 64
      %v1766 = vpop.permute.xlu0 %1765
      %1767 = vrot.lane.b32.xlu0 %v1690, 64
      %v1768 = vpop.permute.xlu0 %1767
      %1769 = vrot.lane.b32.xlu0 %v1692, 64
      %v1770 = vpop.permute.xlu0 %1769
      %1771 = vrot.lane.b32.xlu0 %v1695, 64
      %v1772 = vpop.permute.xlu0 %1771
      %1773 = vrot.lane.b32.xlu0 %v1697, 64
      %v1774 = vpop.permute.xlu0 %1773
      %1775 = vrot.lane.b32.xlu0 %v1700, 64
      %v1776 = vpop.permute.xlu0 %1775
      %1777 = vrot.lane.b32.xlu0 %v1702, 64
      %v1778 = vpop.permute.xlu0 %1777
      %1779 = vrot.lane.b32.xlu0 %v1705, 64
      %v1780 = vpop.permute.xlu0 %1779
      %1781 = vrot.lane.b32.xlu0 %v1707, 64
      %v1782 = vpop.permute.xlu0 %1781
      %1783 = vrot.lane.b32.xlu0 %v1710, 64
      %v1784 = vpop.permute.xlu0 %1783
      %1785 = vrot.lane.b32.xlu0 %v1712, 64
      %v1786 = vpop.permute.xlu0 %1785
      %1787 = vrot.lane.b32.xlu0 %v1715, 64
      %v1788 = vpop.permute.xlu0 %1787
      %1789 = vrot.lane.b32.xlu0 %v1717, 64
      %v1790 = vpop.permute.xlu0 %1789
      %1791 = vrot.lane.b32.xlu0 %v1720, 64
      %v1792 = vpop.permute.xlu0 %1791
      %1793 = vrot.lane.b32.xlu0 %v1722, 64
      %v1794 = vpop.permute.xlu0 %1793
      %1795 = vrot.lane.b32.xlu0 %v1725, 64
      %v1796 = vpop.permute.xlu0 %1795
      %1797 = vrot.lane.b32.xlu0 %v1727, 64
      %v1798 = vpop.permute.xlu0 %1797
      %1799 = vrot.lane.b32.xlu0 %v1730, 64
      %v1800 = vpop.permute.xlu0 %1799
      %1801 = vrot.lane.b32.xlu0 %v1732, 64
      %v1802 = vpop.permute.xlu0 %1801
      %1803 = vrot.lane.b32.xlu0 %v1735, 64
      %v1804 = vpop.permute.xlu0 %1803
      %1805 = vrot.lane.b32.xlu0 %v1737, 64
      %v1806 = vpop.permute.xlu0 %1805
      %1807 = vrot.lane.b32.xlu0 %v1740, 64
      %v1808 = vpop.permute.xlu0 %1807
      %1809 = vrot.lane.b32.xlu0 %v1742, 64
      %v1810 = vpop.permute.xlu0 %1809
      %1811 = vrot.lane.b32.xlu0 %v1745, 64
      %v1812 = vpop.permute.xlu0 %1811
      %1813 = vrot.lane.b32.xlu0 %v1747, 64
      %v1814 = vpop.permute.xlu0 %1813
      %1815 = vrot.lane.b32.xlu0 %v1750, 64
      %v1816 = vpop.permute.xlu0 %1815
      %1817 = vrot.lane.b32.xlu0 %v1752, 64
      %v1818 = vpop.permute.xlu0 %1817
      %1819 = vrot.lane.b32.xlu0 %v1755, 64
      %v1820 = vpop.permute.xlu0 %1819
      %1821 = vrot.lane.b32.xlu0 %v1757, 64
      %v1822 = vpop.permute.xlu0 %1821
      %1823 = vrot.lane.b32.xlu0 %v1760, 64
      %v1824 = vpop.permute.xlu0 %1823
      %1825 = vrot.lane.b32.xlu0 %v1762, 64
      %v1826 = vpop.permute.xlu0 %1825
      %v1859 = vsel %vm779, %v1411, %v1588
      %v1860 = vsel %vm779, %v1412, %v1590
      %v1861 = vsel %vm779, %v1414, %v1592
      %v1862 = vsel %vm779, %v1415, %v1594
      %v1863 = vsel %vm779, %v1417, %v1596
      %v1864 = vsel %vm779, %v1418, %v1598
      %v1865 = vsel %vm779, %v1420, %v1600
      %v1866 = vsel %vm779, %v1421, %v1602
      %v1867 = vsel %vm779, %v1423, %v1604
      %v1868 = vsel %vm779, %v1424, %v1606
      %v1869 = vsel %vm779, %v1426, %v1608
      %v1870 = vsel %vm779, %v1427, %v1610
      %v1871 = vsel %vm779, %v1429, %v1612
      %v1872 = vsel %vm779, %v1430, %v1614
      %v1873 = vsel %vm779, %v1432, %v1616
      %v1874 = vsel %vm779, %v1433, %v1618
      %v1875 = vsel %vm779, %v1435, %v1620
      %v1876 = vsel %vm779, %v1436, %v1622
      %v1877 = vsel %vm779, %v1438, %v1624
      %v1878 = vsel %vm779, %v1439, %v1626
      %v1879 = vsel %vm779, %v1441, %v1628
      %v1880 = vsel %vm779, %v1442, %v1630
      %v1881 = vsel %vm779, %v1444, %v1632
      %v1882 = vsel %vm779, %v1445, %v1634
      %v1883 = vsel %vm779, %v1447, %v1636
      %v1884 = vsel %vm779, %v1448, %v1638
      %v1885 = vsel %vm779, %v1450, %v1640
      %v1886 = vsel %vm779, %v1451, %v1642
      %v1887 = vsel %vm779, %v1453, %v1644
      %v1888 = vsel %vm779, %v1454, %v1646
      %v1889 = vsel %vm779, %v1456, %v1648
      %v1890 = vsel %vm779, %v1457, %v1650
      %v1891 = vsel %vm1350, %v1859, %v1764
      %v1892 = vsel %vm1350, %v1860, %v1766
      %v1893 = vsel %vm1350, %v1861, %v1768
      %v1894 = vsel %vm1350, %v1862, %v1770
      %v1895 = vsel %vm1350, %v1863, %v1772
      %v1896 = vsel %vm1350, %v1864, %v1774
      %v1897 = vsel %vm1350, %v1865, %v1776
      %v1898 = vsel %vm1350, %v1866, %v1778
      %v1899 = vsel %vm1350, %v1867, %v1780
      %v1900 = vsel %vm1350, %v1868, %v1782
      %v1901 = vsel %vm1350, %v1869, %v1784
      %v1902 = vsel %vm1350, %v1870, %v1786
      %v1903 = vsel %vm1350, %v1871, %v1788
      %v1904 = vsel %vm1350, %v1872, %v1790
      %v1905 = vsel %vm1350, %v1873, %v1792
      %v1906 = vsel %vm1350, %v1874, %v1794
      %v1907 = vsel %vm1350, %v1875, %v1796
      %v1908 = vsel %vm1350, %v1876, %v1798
      %v1909 = vsel %vm1350, %v1877, %v1800
      %v1910 = vsel %vm1350, %v1878, %v1802
      %v1911 = vsel %vm1350, %v1879, %v1804
      %v1912 = vsel %vm1350, %v1880, %v1806
      %v1913 = vsel %vm1350, %v1881, %v1808
      %v1914 = vsel %vm1350, %v1882, %v1810
      %v1915 = vsel %vm1350, %v1883, %v1812
      %v1916 = vsel %vm1350, %v1884, %v1814
      %v1917 = vsel %vm1350, %v1885, %v1816
      %v1918 = vsel %vm1350, %v1886, %v1818
      %v1919 = vsel %vm1350, %v1887, %v1820
      %v1920 = vsel %vm1350, %v1888, %v1822
      %v1921 = vsel %vm1350, %v1889, %v1824
      %v1922 = vsel %vm1350, %v1890, %v1826
      %v1923 = vpack.c.bf16 %v1892, %v1891
      %v1924 = vpack.c.bf16 %v1894, %v1893
      %v1925 = vpack.c.bf16 %v1896, %v1895
      %v1926 = vpack.c.bf16 %v1898, %v1897
      %v1927 = vpack.c.bf16 %v1900, %v1899
      %v1928 = vpack.c.bf16 %v1902, %v1901
      %v1929 = vpack.c.bf16 %v1904, %v1903
      %v1930 = vpack.c.bf16 %v1906, %v1905
      %v1931 = vpack.c.bf16 %v1908, %v1907
      %v1932 = vpack.c.bf16 %v1910, %v1909
      %v1933 = vpack.c.bf16 %v1912, %v1911
      %v1934 = vpack.c.bf16 %v1914, %v1913
      %v1935 = vpack.c.bf16 %v1916, %v1915
      %v1936 = vpack.c.bf16 %v1918, %v1917
      %v1937 = vpack.c.bf16 %v1920, %v1919
      %v1938 = vpack.c.bf16 %v1922, %v1921
      %s1939 = scalar_lea.vmem %s4, 48
      %v1940 = vld [vmem:[%s1939] sm:$0xf]
      %v1941 = vld [vmem:[%s1939 + $0x4] sm:$0xf]
      %v1942 = vld [vmem:[%s1939 + $0x8] sm:$0xf]
      %v1943 = vld [vmem:[%s1939 + $0xc] sm:$0xf]
      %v1944 = vld [vmem:[%s1939 + $0x10] sm:$0xf]
      %v1945 = vld [vmem:[%s1939 + $0x14] sm:$0xf]
      %v1946 = vld [vmem:[%s1939 + $0x18] sm:$0xf]
      %v1947 = vld [vmem:[%s1939 + $0x1c] sm:$0xf]
      %v1948 = vld [vmem:[%s1939 + $0x20] sm:$0xf]
      %v1949 = vld [vmem:[%s1939 + $0x24] sm:$0xf]
      %v1950 = vld [vmem:[%s1939 + $0x28] sm:$0xf]
      %v1951 = vld [vmem:[%s1939 + $0x2c] sm:$0xf]
      %v1964 = vunpack.c.l.b16 %v1940
      %v1965 = vunpack.c.l.b16 %v1941
      %v1966 = vunpack.c.l.b16 %v1942
      %v1967 = vunpack.c.l.b16 %v1943
      %v1968 = vunpack.c.l.b16 %v1944
      %v1969 = vunpack.c.l.b16 %v1945
      %v1970 = vunpack.c.l.b16 %v1946
      %v1971 = vunpack.c.l.b16 %v1947
      %v1972 = vunpack.c.l.b16 %v1948
      %v1973 = vunpack.c.l.b16 %v1949
      %v1974 = vunpack.c.l.b16 %v1950
      %v1975 = vunpack.c.l.b16 %v1951
      %v1976 = vpack.c.b16 %v1965, %v1964
      %v1977 = vpack.c.b16 %v1967, %v1966
      %v1978 = vpack.c.b16 %v1969, %v1968
      %v1979 = vpack.c.b16 %v1971, %v1970
      %v1980 = vpack.c.b16 %v1973, %v1972
      %v1981 = vpack.c.b16 %v1975, %v1974
      %vm1988 = vcmask 785408
      %v1990 = vsel %vm1988, %v1923, 0
      %v1993 = vsel %vm1988, %v1924, 0
      %v1996 = vsel %vm1988, %v1925, 0
      %v1999 = vsel %vm1988, %v1926, 0
      %v2002 = vsel %vm1988, %v1927, 0
      %v2005 = vsel %vm1988, %v1928, 0
      %v2008 = vsel %vm1988, %v1929, 0
      %v2011 = vsel %vm1988, %v1930, 0
      %v2014 = vsel %vm1988, %v1931, 0
      %v2017 = vsel %vm1988, %v1932, 0
      %v2020 = vsel %vm1988, %v1933, 0
      %v2023 = vsel %vm1988, %v1934, 0
      %v2026 = vsel %vm1988, %v1935, 0
      %v2029 = vsel %vm1988, %v1936, 0
      %v2032 = vsel %vm1988, %v1937, 0
      %v2035 = vsel %vm1988, %v1938, 0
      %2037 = vmatpush.bf16.msra.mxu0 0
      %2038 = vmatpush.bf16.msra.mxu0 0
      %2039 = vmatpush.bf16.msra.mxu0 %v1981
      %2040 = vmatpush.bf16.msra.mxu0 %v1980
      %2041 = vmatpush.bf16.msra.mxu0 %v1979
      %2042 = vmatpush.bf16.msra.mxu0 %v1978
      %2043 = vmatpush.bf16.msra.mxu0 %v1977
      %2044 = vmatpush.bf16.msra.mxu0 %v1976
      %2045 = vmatmul.bf16.gmra.mxu0 %v1990
      %v2046 = vpop.f32.mrf.mxu0
      %v2047 = vadd.f32 0.0, %v2046
      %v2048 = vpop.f32.mrf.mxu0
      %v2049 = vadd.f32 0.0, %v2048
      %2050 = vmatmul.bf16.gmra.mxu0 %v1993
      %v2051 = vpop.f32.mrf.mxu0
      %v2052 = vadd.f32 0.0, %v2051
      %v2053 = vpop.f32.mrf.mxu0
      %v2054 = vadd.f32 0.0, %v2053
      %2055 = vmatmul.bf16.gmra.mxu0 %v1996
      %v2056 = vpop.f32.mrf.mxu0
      %v2057 = vadd.f32 0.0, %v2056
      %v2058 = vpop.f32.mrf.mxu0
      %v2059 = vadd.f32 0.0, %v2058
      %2060 = vmatmul.bf16.gmra.mxu0 %v1999
      %v2061 = vpop.f32.mrf.mxu0
      %v2062 = vadd.f32 0.0, %v2061
      %v2063 = vpop.f32.mrf.mxu0
      %v2064 = vadd.f32 0.0, %v2063
      %2065 = vmatmul.bf16.gmra.mxu0 %v2002
      %v2066 = vpop.f32.mrf.mxu0
      %v2067 = vadd.f32 0.0, %v2066
      %v2068 = vpop.f32.mrf.mxu0
      %v2069 = vadd.f32 0.0, %v2068
      %2070 = vmatmul.bf16.gmra.mxu0 %v2005
      %v2071 = vpop.f32.mrf.mxu0
      %v2072 = vadd.f32 0.0, %v2071
      %v2073 = vpop.f32.mrf.mxu0
      %v2074 = vadd.f32 0.0, %v2073
      %2075 = vmatmul.bf16.gmra.mxu0 %v2008
      %v2076 = vpop.f32.mrf.mxu0
      %v2077 = vadd.f32 0.0, %v2076
      %v2078 = vpop.f32.mrf.mxu0
      %v2079 = vadd.f32 0.0, %v2078
      %2080 = vmatmul.bf16.gmra.mxu0 %v2011
      %v2081 = vpop.f32.mrf.mxu0
      %v2082 = vadd.f32 0.0, %v2081
      %v2083 = vpop.f32.mrf.mxu0
      %v2084 = vadd.f32 0.0, %v2083
      %2085 = vmatmul.bf16.gmra.mxu0 %v2014
      %v2086 = vpop.f32.mrf.mxu0
      %v2087 = vadd.f32 0.0, %v2086
      %v2088 = vpop.f32.mrf.mxu0
      %v2089 = vadd.f32 0.0, %v2088
      %2090 = vmatmul.bf16.gmra.mxu0 %v2017
      %v2091 = vpop.f32.mrf.mxu0
      %v2092 = vadd.f32 0.0, %v2091
      %v2093 = vpop.f32.mrf.mxu0
      %v2094 = vadd.f32 0.0, %v2093
      %2095 = vmatmul.bf16.gmra.mxu0 %v2020
      %v2096 = vpop.f32.mrf.mxu0
      %v2097 = vadd.f32 0.0, %v2096
      %v2098 = vpop.f32.mrf.mxu0
      %v2099 = vadd.f32 0.0, %v2098
      %2100 = vmatmul.bf16.gmra.mxu0 %v2023
      %v2101 = vpop.f32.mrf.mxu0
      %v2102 = vadd.f32 0.0, %v2101
      %v2103 = vpop.f32.mrf.mxu0
      %v2104 = vadd.f32 0.0, %v2103
      %2105 = vmatmul.bf16.gmra.mxu0 %v2026
      %v2106 = vpop.f32.mrf.mxu0
      %v2107 = vadd.f32 0.0, %v2106
      %v2108 = vpop.f32.mrf.mxu0
      %v2109 = vadd.f32 0.0, %v2108
      %2110 = vmatmul.bf16.gmra.mxu0 %v2029
      %v2111 = vpop.f32.mrf.mxu0
      %v2112 = vadd.f32 0.0, %v2111
      %v2113 = vpop.f32.mrf.mxu0
      %v2114 = vadd.f32 0.0, %v2113
      %2115 = vmatmul.bf16.gmra.mxu0 %v2032
      %v2116 = vpop.f32.mrf.mxu0
      %v2117 = vadd.f32 0.0, %v2116
      %v2118 = vpop.f32.mrf.mxu0
      %v2119 = vadd.f32 0.0, %v2118
      %2120 = vmatmul.bf16.gmra.mxu0 %v2035
      %v2121 = vpop.f32.mrf.mxu0
      %v2122 = vadd.f32 0.0, %v2121
      %v2123 = vpop.f32.mrf.mxu0
      %v2124 = vadd.f32 0.0, %v2123
      %2125 = vdwg.mxu0
      %v2138 = vunpack.c.l.b16 %v1399
      %v2139 = vunpack.c.l.b16 %v1400
      %v2140 = vunpack.c.l.b16 %v1401
      %v2141 = vunpack.c.l.b16 %v1402
      %v2142 = vunpack.c.l.b16 %v1403
      %v2143 = vunpack.c.l.b16 %v1404
      %v2144 = vunpack.c.l.b16 %v1405
      %v2145 = vunpack.c.l.b16 %v1406
      %v2146 = vunpack.c.l.b16 %v1407
      %v2147 = vunpack.c.l.b16 %v1408
      %v2148 = vunpack.c.l.b16 %v1409
      %v2149 = vunpack.c.l.b16 %v1410
      %v2150 = vpack.c.b16 %v2139, %v2138
      %v2151 = vpack.c.b16 %v2141, %v2140
      %v2152 = vpack.c.b16 %v2143, %v2142
      %v2153 = vpack.c.b16 %v2145, %v2144
      %v2154 = vpack.c.b16 %v2147, %v2146
      %v2155 = vpack.c.b16 %v2149, %v2148
      %v2163 = vsel %vm1988, %v1383, 0
      %v2166 = vsel %vm1988, %v1384, 0
      %v2169 = vsel %vm1988, %v1385, 0
      %v2172 = vsel %vm1988, %v1386, 0
      %v2175 = vsel %vm1988, %v1387, 0
      %v2178 = vsel %vm1988, %v1388, 0
      %v2181 = vsel %vm1988, %v1389, 0
      %v2184 = vsel %vm1988, %v1390, 0
      %v2187 = vsel %vm1988, %v1391, 0
      %v2190 = vsel %vm1988, %v1392, 0
      %v2193 = vsel %vm1988, %v1393, 0
      %v2196 = vsel %vm1988, %v1394, 0
      %v2199 = vsel %vm1988, %v1395, 0
      %v2202 = vsel %vm1988, %v1396, 0
      %v2205 = vsel %vm1988, %v1397, 0
      %v2208 = vsel %vm1988, %v1398, 0
      %2210 = vmatpush.bf16.msra.mxu0 0
      %2211 = vmatpush.bf16.msra.mxu0 0
      %2212 = vmatpush.bf16.msra.mxu0 %v2155
      %2213 = vmatpush.bf16.msra.mxu0 %v2154
      %2214 = vmatpush.bf16.msra.mxu0 %v2153
      %2215 = vmatpush.bf16.msra.mxu0 %v2152
      %2216 = vmatpush.bf16.msra.mxu0 %v2151
      %2217 = vmatpush.bf16.msra.mxu0 %v2150
      %2218 = vmatmul.bf16.gmra.mxu0 %v2163
      %v2219 = vpop.f32.mrf.mxu0
      %v2220 = vadd.f32 %v2047, %v2219
      %v2221 = vpop.f32.mrf.mxu0
      %v2222 = vadd.f32 %v2049, %v2221
      %2223 = vmatmul.bf16.gmra.mxu0 %v2166
      %v2224 = vpop.f32.mrf.mxu0
      %v2225 = vadd.f32 %v2052, %v2224
      %v2226 = vpop.f32.mrf.mxu0
      %v2227 = vadd.f32 %v2054, %v2226
      %2228 = vmatmul.bf16.gmra.mxu0 %v2169
      %v2229 = vpop.f32.mrf.mxu0
      %v2230 = vadd.f32 %v2057, %v2229
      %v2231 = vpop.f32.mrf.mxu0
      %v2232 = vadd.f32 %v2059, %v2231
      %2233 = vmatmul.bf16.gmra.mxu0 %v2172
      %v2234 = vpop.f32.mrf.mxu0
      %v2235 = vadd.f32 %v2062, %v2234
      %v2236 = vpop.f32.mrf.mxu0
      %v2237 = vadd.f32 %v2064, %v2236
      %2238 = vmatmul.bf16.gmra.mxu0 %v2175
      %v2239 = vpop.f32.mrf.mxu0
      %v2240 = vadd.f32 %v2067, %v2239
      %v2241 = vpop.f32.mrf.mxu0
      %v2242 = vadd.f32 %v2069, %v2241
      %2243 = vmatmul.bf16.gmra.mxu0 %v2178
      %v2244 = vpop.f32.mrf.mxu0
      %v2245 = vadd.f32 %v2072, %v2244
      %v2246 = vpop.f32.mrf.mxu0
      %v2247 = vadd.f32 %v2074, %v2246
      %2248 = vmatmul.bf16.gmra.mxu0 %v2181
      %v2249 = vpop.f32.mrf.mxu0
      %v2250 = vadd.f32 %v2077, %v2249
      %v2251 = vpop.f32.mrf.mxu0
      %v2252 = vadd.f32 %v2079, %v2251
      %2253 = vmatmul.bf16.gmra.mxu0 %v2184
      %v2254 = vpop.f32.mrf.mxu0
      %v2255 = vadd.f32 %v2082, %v2254
      %v2256 = vpop.f32.mrf.mxu0
      %v2257 = vadd.f32 %v2084, %v2256
      %2258 = vmatmul.bf16.gmra.mxu0 %v2187
      %v2259 = vpop.f32.mrf.mxu0
      %v2260 = vadd.f32 %v2087, %v2259
      %v2261 = vpop.f32.mrf.mxu0
      %v2262 = vadd.f32 %v2089, %v2261
      %2263 = vmatmul.bf16.gmra.mxu0 %v2190
      %v2264 = vpop.f32.mrf.mxu0
      %v2265 = vadd.f32 %v2092, %v2264
      %v2266 = vpop.f32.mrf.mxu0
      %v2267 = vadd.f32 %v2094, %v2266
      %2268 = vmatmul.bf16.gmra.mxu0 %v2193
      %v2269 = vpop.f32.mrf.mxu0
      %v2270 = vadd.f32 %v2097, %v2269
      %v2271 = vpop.f32.mrf.mxu0
      %v2272 = vadd.f32 %v2099, %v2271
      %2273 = vmatmul.bf16.gmra.mxu0 %v2196
      %v2274 = vpop.f32.mrf.mxu0
      %v2275 = vadd.f32 %v2102, %v2274
      %v2276 = vpop.f32.mrf.mxu0
      %v2277 = vadd.f32 %v2104, %v2276
      %2278 = vmatmul.bf16.gmra.mxu0 %v2199
      %v2279 = vpop.f32.mrf.mxu0
      %v2280 = vadd.f32 %v2107, %v2279
      %v2281 = vpop.f32.mrf.mxu0
      %v2282 = vadd.f32 %v2109, %v2281
      %2283 = vmatmul.bf16.gmra.mxu0 %v2202
      %v2284 = vpop.f32.mrf.mxu0
      %v2285 = vadd.f32 %v2112, %v2284
      %v2286 = vpop.f32.mrf.mxu0
      %v2287 = vadd.f32 %v2114, %v2286
      %2288 = vmatmul.bf16.gmra.mxu0 %v2205
      %v2289 = vpop.f32.mrf.mxu0
      %v2290 = vadd.f32 %v2117, %v2289
      %v2291 = vpop.f32.mrf.mxu0
      %v2292 = vadd.f32 %v2119, %v2291
      %2293 = vmatmul.bf16.gmra.mxu0 %v2208
      %v2294 = vpop.f32.mrf.mxu0
      %v2295 = vadd.f32 %v2122, %v2294
      %v2296 = vpop.f32.mrf.mxu0
      %v2297 = vadd.f32 %v2124, %v2296
      %2298 = vdwg.mxu0
      %s2299 = scalar_lea.vmem [#allocation2], 48
      %v2300 = vld [vmem:[%s2299] sm:$0xff]
      %v2301 = vld [vmem:[%s2299 + $0x8] sm:$0xff]
      %v2302 = vld [vmem:[%s2299 + $0x10] sm:$0x3]
      %v2303 = vld [vmem:[%s2299 + $0x18] sm:$0xff]
      %v2304 = vld [vmem:[%s2299 + $0x20] sm:$0xff]
      %v2305 = vld [vmem:[%s2299 + $0x28] sm:$0x3]
      %v2306 = vld [vmem:[%s2299 + $0x30] sm:$0xff]
      %v2307 = vld [vmem:[%s2299 + $0x38] sm:$0xff]
      %v2308 = vld [vmem:[%s2299 + $0x40] sm:$0x3]
      %v2309 = vld [vmem:[%s2299 + $0x48] sm:$0xff]
      %v2310 = vld [vmem:[%s2299 + $0x50] sm:$0xff]
      %v2311 = vld [vmem:[%s2299 + $0x58] sm:$0x3]
      %v2312 = vld [vmem:[%s2299 + $0x60] sm:$0xff]
      %v2313 = vld [vmem:[%s2299 + $0x68] sm:$0xff]
      %v2314 = vld [vmem:[%s2299 + $0x70] sm:$0x3]
      %v2315 = vld [vmem:[%s2299 + $0x78] sm:$0xff]
      %v2316 = vld [vmem:[%s2299 + $0x80] sm:$0xff]
      %v2317 = vld [vmem:[%s2299 + $0x88] sm:$0x3]
      %v2318 = vld [vmem:[%s2299 + $0x90] sm:$0xff]
      %v2319 = vld [vmem:[%s2299 + $0x98] sm:$0xff]
      %v2320 = vld [vmem:[%s2299 + $0xa0] sm:$0x3]
      %v2321 = vld [vmem:[%s2299 + $0xa8] sm:$0xff]
      %v2322 = vld [vmem:[%s2299 + $0xb0] sm:$0xff]
      %v2323 = vld [vmem:[%s2299 + $0xb8] sm:$0x3]
      %v2324 = vld [vmem:[%s2299 + $0xc0] sm:$0xff]
      %v2325 = vld [vmem:[%s2299 + $0xc8] sm:$0xff]
      %v2326 = vld [vmem:[%s2299 + $0xd0] sm:$0x3]
      %v2327 = vld [vmem:[%s2299 + $0xd8] sm:$0xff]
      %v2328 = vld [vmem:[%s2299 + $0xe0] sm:$0xff]
      %v2329 = vld [vmem:[%s2299 + $0xe8] sm:$0x3]
      %v2330 = vld [vmem:[%s2299 + $0xf0] sm:$0xff]
      %v2331 = vld [vmem:[%s2299 + $0xf8] sm:$0xff]
      %v2332 = vld [vmem:[%s2299 + $0x100] sm:$0x3]
      %v2333 = vld [vmem:[%s2299 + $0x108] sm:$0xff]
      %v2334 = vld [vmem:[%s2299 + $0x110] sm:$0xff]
      %v2335 = vld [vmem:[%s2299 + $0x118] sm:$0x3]
      %v2336 = vld [vmem:[%s2299 + $0x120] sm:$0xff]
      %v2337 = vld [vmem:[%s2299 + $0x128] sm:$0xff]
      %v2338 = vld [vmem:[%s2299 + $0x130] sm:$0x3]
      %v2339 = vld [vmem:[%s2299 + $0x138] sm:$0xff]
      %v2340 = vld [vmem:[%s2299 + $0x140] sm:$0xff]
      %v2341 = vld [vmem:[%s2299 + $0x148] sm:$0x3]
      %v2342 = vld [vmem:[%s2299 + $0x150] sm:$0xff]
      %v2343 = vld [vmem:[%s2299 + $0x158] sm:$0xff]
      %v2344 = vld [vmem:[%s2299 + $0x160] sm:$0x3]
      %v2345 = vld [vmem:[%s2299 + $0x168] sm:$0xff]
      %v2346 = vld [vmem:[%s2299 + $0x170] sm:$0xff]
      %v2347 = vld [vmem:[%s2299 + $0x178] sm:$0x3]
      %v2396 = vrot.slane %v2300, 1
      %v2397 = vrot.slane %v2301, 1
      %v2398 = vsel %vm964, %v2396, %v2397
      %v2399 = vrot.slane %v2302, 1
      %v2400 = vsel %vm964, %v2397, %v2399
      %v2401 = vrot.slane %v2303, 1
      %v2402 = vrot.slane %v2304, 1
      %v2403 = vsel %vm964, %v2401, %v2402
      %v2404 = vrot.slane %v2305, 1
      %v2405 = vsel %vm964, %v2402, %v2404
      %v2406 = vrot.slane %v2306, 1
      %v2407 = vrot.slane %v2307, 1
      %v2408 = vsel %vm964, %v2406, %v2407
      %v2409 = vrot.slane %v2308, 1
      %v2410 = vsel %vm964, %v2407, %v2409
      %v2411 = vrot.slane %v2309, 1
      %v2412 = vrot.slane %v2310, 1
      %v2413 = vsel %vm964, %v2411, %v2412
      %v2414 = vrot.slane %v2311, 1
      %v2415 = vsel %vm964, %v2412, %v2414
      %v2416 = vrot.slane %v2312, 1
      %v2417 = vrot.slane %v2313, 1
      %v2418 = vsel %vm964, %v2416, %v2417
      %v2419 = vrot.slane %v2314, 1
      %v2420 = vsel %vm964, %v2417, %v2419
      %v2421 = vrot.slane %v2315, 1
      %v2422 = vrot.slane %v2316, 1
      %v2423 = vsel %vm964, %v2421, %v2422
      %v2424 = vrot.slane %v2317, 1
      %v2425 = vsel %vm964, %v2422, %v2424
      %v2426 = vrot.slane %v2318, 1
      %v2427 = vrot.slane %v2319, 1
      %v2428 = vsel %vm964, %v2426, %v2427
      %v2429 = vrot.slane %v2320, 1
      %v2430 = vsel %vm964, %v2427, %v2429
      %v2431 = vrot.slane %v2321, 1
      %v2432 = vrot.slane %v2322, 1
      %v2433 = vsel %vm964, %v2431, %v2432
      %v2434 = vrot.slane %v2323, 1
      %v2435 = vsel %vm964, %v2432, %v2434
      %v2436 = vrot.slane %v2324, 1
      %v2437 = vrot.slane %v2325, 1
      %v2438 = vsel %vm964, %v2436, %v2437
      %v2439 = vrot.slane %v2326, 1
      %v2440 = vsel %vm964, %v2437, %v2439
      %v2441 = vrot.slane %v2327, 1
      %v2442 = vrot.slane %v2328, 1
      %v2443 = vsel %vm964, %v2441, %v2442
      %v2444 = vrot.slane %v2329, 1
      %v2445 = vsel %vm964, %v2442, %v2444
      %v2446 = vrot.slane %v2330, 1
      %v2447 = vrot.slane %v2331, 1
      %v2448 = vsel %vm964, %v2446, %v2447
      %v2449 = vrot.slane %v2332, 1
      %v2450 = vsel %vm964, %v2447, %v2449
      %v2451 = vrot.slane %v2333, 1
      %v2452 = vrot.slane %v2334, 1
      %v2453 = vsel %vm964, %v2451, %v2452
      %v2454 = vrot.slane %v2335, 1
      %v2455 = vsel %vm964, %v2452, %v2454
      %v2456 = vrot.slane %v2336, 1
      %v2457 = vrot.slane %v2337, 1
      %v2458 = vsel %vm964, %v2456, %v2457
      %v2459 = vrot.slane %v2338, 1
      %v2460 = vsel %vm964, %v2457, %v2459
      %v2461 = vrot.slane %v2339, 1
      %v2462 = vrot.slane %v2340, 1
      %v2463 = vsel %vm964, %v2461, %v2462
      %v2464 = vrot.slane %v2341, 1
      %v2465 = vsel %vm964, %v2462, %v2464
      %v2466 = vrot.slane %v2342, 1
      %v2467 = vrot.slane %v2343, 1
      %v2468 = vsel %vm964, %v2466, %v2467
      %v2469 = vrot.slane %v2344, 1
      %v2470 = vsel %vm964, %v2467, %v2469
      %v2471 = vrot.slane %v2345, 1
      %v2472 = vrot.slane %v2346, 1
      %v2473 = vsel %vm964, %v2471, %v2472
      %v2474 = vrot.slane %v2347, 1
      %v2475 = vsel %vm964, %v2472, %v2474
      %2476 = vrot.lane.b32.xlu0 %v2398, 32
      %v2477 = vpop.permute.xlu0 %2476
      %2478 = vrot.lane.b32.xlu0 %v2400, 32
      %v2479 = vpop.permute.xlu0 %2478
      %2480 = vrot.lane.b32.xlu0 %v2403, 32
      %v2481 = vpop.permute.xlu0 %2480
      %2482 = vrot.lane.b32.xlu0 %v2405, 32
      %v2483 = vpop.permute.xlu0 %2482
      %2484 = vrot.lane.b32.xlu0 %v2408, 32
      %v2485 = vpop.permute.xlu0 %2484
      %2486 = vrot.lane.b32.xlu0 %v2410, 32
      %v2487 = vpop.permute.xlu0 %2486
      %2488 = vrot.lane.b32.xlu0 %v2413, 32
      %v2489 = vpop.permute.xlu0 %2488
      %2490 = vrot.lane.b32.xlu0 %v2415, 32
      %v2491 = vpop.permute.xlu0 %2490
      %2492 = vrot.lane.b32.xlu0 %v2418, 32
      %v2493 = vpop.permute.xlu0 %2492
      %2494 = vrot.lane.b32.xlu0 %v2420, 32
      %v2495 = vpop.permute.xlu0 %2494
      %2496 = vrot.lane.b32.xlu0 %v2423, 32
      %v2497 = vpop.permute.xlu0 %2496
      %2498 = vrot.lane.b32.xlu0 %v2425, 32
      %v2499 = vpop.permute.xlu0 %2498
      %2500 = vrot.lane.b32.xlu0 %v2428, 32
      %v2501 = vpop.permute.xlu0 %2500
      %2502 = vrot.lane.b32.xlu0 %v2430, 32
      %v2503 = vpop.permute.xlu0 %2502
      %2504 = vrot.lane.b32.xlu0 %v2433, 32
      %v2505 = vpop.permute.xlu0 %2504
      %2506 = vrot.lane.b32.xlu0 %v2435, 32
      %v2507 = vpop.permute.xlu0 %2506
      %2508 = vrot.lane.b32.xlu0 %v2438, 32
      %v2509 = vpop.permute.xlu0 %2508
      %2510 = vrot.lane.b32.xlu0 %v2440, 32
      %v2511 = vpop.permute.xlu0 %2510
      %2512 = vrot.lane.b32.xlu0 %v2443, 32
      %v2513 = vpop.permute.xlu0 %2512
      %2514 = vrot.lane.b32.xlu0 %v2445, 32
      %v2515 = vpop.permute.xlu0 %2514
      %2516 = vrot.lane.b32.xlu0 %v2448, 32
      %v2517 = vpop.permute.xlu0 %2516
      %2518 = vrot.lane.b32.xlu0 %v2450, 32
      %v2519 = vpop.permute.xlu0 %2518
      %2520 = vrot.lane.b32.xlu0 %v2453, 32
      %v2521 = vpop.permute.xlu0 %2520
      %2522 = vrot.lane.b32.xlu0 %v2455, 32
      %v2523 = vpop.permute.xlu0 %2522
      %2524 = vrot.lane.b32.xlu0 %v2458, 32
      %v2525 = vpop.permute.xlu0 %2524
      %2526 = vrot.lane.b32.xlu0 %v2460, 32
      %v2527 = vpop.permute.xlu0 %2526
      %2528 = vrot.lane.b32.xlu0 %v2463, 32
      %v2529 = vpop.permute.xlu0 %2528
      %2530 = vrot.lane.b32.xlu0 %v2465, 32
      %v2531 = vpop.permute.xlu0 %2530
      %2532 = vrot.lane.b32.xlu0 %v2468, 32
      %v2533 = vpop.permute.xlu0 %2532
      %2534 = vrot.lane.b32.xlu0 %v2470, 32
      %v2535 = vpop.permute.xlu0 %2534
      %2536 = vrot.lane.b32.xlu0 %v2473, 32
      %v2537 = vpop.permute.xlu0 %2536
      %2538 = vrot.lane.b32.xlu0 %v2475, 32
      %v2539 = vpop.permute.xlu0 %2538
      %v2572 = vrot.slane %v2300, 2
      %v2573 = vrot.slane %v2301, 2
      %v2574 = vsel %vm1141, %v2572, %v2573
      %v2575 = vrot.slane %v2302, 2
      %v2576 = vsel %vm1141, %v2573, %v2575
      %v2577 = vrot.slane %v2303, 2
      %v2578 = vrot.slane %v2304, 2
      %v2579 = vsel %vm1141, %v2577, %v2578
      %v2580 = vrot.slane %v2305, 2
      %v2581 = vsel %vm1141, %v2578, %v2580
      %v2582 = vrot.slane %v2306, 2
      %v2583 = vrot.slane %v2307, 2
      %v2584 = vsel %vm1141, %v2582, %v2583
      %v2585 = vrot.slane %v2308, 2
      %v2586 = vsel %vm1141, %v2583, %v2585
      %v2587 = vrot.slane %v2309, 2
      %v2588 = vrot.slane %v2310, 2
      %v2589 = vsel %vm1141, %v2587, %v2588
      %v2590 = vrot.slane %v2311, 2
      %v2591 = vsel %vm1141, %v2588, %v2590
      %v2592 = vrot.slane %v2312, 2
      %v2593 = vrot.slane %v2313, 2
      %v2594 = vsel %vm1141, %v2592, %v2593
      %v2595 = vrot.slane %v2314, 2
      %v2596 = vsel %vm1141, %v2593, %v2595
      %v2597 = vrot.slane %v2315, 2
      %v2598 = vrot.slane %v2316, 2
      %v2599 = vsel %vm1141, %v2597, %v2598
      %v2600 = vrot.slane %v2317, 2
      %v2601 = vsel %vm1141, %v2598, %v2600
      %v2602 = vrot.slane %v2318, 2
      %v2603 = vrot.slane %v2319, 2
      %v2604 = vsel %vm1141, %v2602, %v2603
      %v2605 = vrot.slane %v2320, 2
      %v2606 = vsel %vm1141, %v2603, %v2605
      %v2607 = vrot.slane %v2321, 2
      %v2608 = vrot.slane %v2322, 2
      %v2609 = vsel %vm1141, %v2607, %v2608
      %v2610 = vrot.slane %v2323, 2
      %v2611 = vsel %vm1141, %v2608, %v2610
      %v2612 = vrot.slane %v2324, 2
      %v2613 = vrot.slane %v2325, 2
      %v2614 = vsel %vm1141, %v2612, %v2613
      %v2615 = vrot.slane %v2326, 2
      %v2616 = vsel %vm1141, %v2613, %v2615
      %v2617 = vrot.slane %v2327, 2
      %v2618 = vrot.slane %v2328, 2
      %v2619 = vsel %vm1141, %v2617, %v2618
      %v2620 = vrot.slane %v2329, 2
      %v2621 = vsel %vm1141, %v2618, %v2620
      %v2622 = vrot.slane %v2330, 2
      %v2623 = vrot.slane %v2331, 2
      %v2624 = vsel %vm1141, %v2622, %v2623
      %v2625 = vrot.slane %v2332, 2
      %v2626 = vsel %vm1141, %v2623, %v2625
      %v2627 = vrot.slane %v2333, 2
      %v2628 = vrot.slane %v2334, 2
      %v2629 = vsel %vm1141, %v2627, %v2628
      %v2630 = vrot.slane %v2335, 2
      %v2631 = vsel %vm1141, %v2628, %v2630
      %v2632 = vrot.slane %v2336, 2
      %v2633 = vrot.slane %v2337, 2
      %v2634 = vsel %vm1141, %v2632, %v2633
      %v2635 = vrot.slane %v2338, 2
      %v2636 = vsel %vm1141, %v2633, %v2635
      %v2637 = vrot.slane %v2339, 2
      %v2638 = vrot.slane %v2340, 2
      %v2639 = vsel %vm1141, %v2637, %v2638
      %v2640 = vrot.slane %v2341, 2
      %v2641 = vsel %vm1141, %v2638, %v2640
      %v2642 = vrot.slane %v2342, 2
      %v2643 = vrot.slane %v2343, 2
      %v2644 = vsel %vm1141, %v2642, %v2643
      %v2645 = vrot.slane %v2344, 2
      %v2646 = vsel %vm1141, %v2643, %v2645
      %v2647 = vrot.slane %v2345, 2
      %v2648 = vrot.slane %v2346, 2
      %v2649 = vsel %vm1141, %v2647, %v2648
      %v2650 = vrot.slane %v2347, 2
      %v2651 = vsel %vm1141, %v2648, %v2650
      %2652 = vrot.lane.b32.xlu0 %v2574, 64
      %v2653 = vpop.permute.xlu0 %2652
      %2654 = vrot.lane.b32.xlu0 %v2576, 64
      %v2655 = vpop.permute.xlu0 %2654
      %2656 = vrot.lane.b32.xlu0 %v2579, 64
      %v2657 = vpop.permute.xlu0 %2656
      %2658 = vrot.lane.b32.xlu0 %v2581, 64
      %v2659 = vpop.permute.xlu0 %2658
      %2660 = vrot.lane.b32.xlu0 %v2584, 64
      %v2661 = vpop.permute.xlu0 %2660
      %2662 = vrot.lane.b32.xlu0 %v2586, 64
      %v2663 = vpop.permute.xlu0 %2662
      %2664 = vrot.lane.b32.xlu0 %v2589, 64
      %v2665 = vpop.permute.xlu0 %2664
      %2666 = vrot.lane.b32.xlu0 %v2591, 64
      %v2667 = vpop.permute.xlu0 %2666
      %2668 = vrot.lane.b32.xlu0 %v2594, 64
      %v2669 = vpop.permute.xlu0 %2668
      %2670 = vrot.lane.b32.xlu0 %v2596, 64
      %v2671 = vpop.permute.xlu0 %2670
      %2672 = vrot.lane.b32.xlu0 %v2599, 64
      %v2673 = vpop.permute.xlu0 %2672
      %2674 = vrot.lane.b32.xlu0 %v2601, 64
      %v2675 = vpop.permute.xlu0 %2674
      %2676 = vrot.lane.b32.xlu0 %v2604, 64
      %v2677 = vpop.permute.xlu0 %2676
      %2678 = vrot.lane.b32.xlu0 %v2606, 64
      %v2679 = vpop.permute.xlu0 %2678
      %2680 = vrot.lane.b32.xlu0 %v2609, 64
      %v2681 = vpop.permute.xlu0 %2680
      %2682 = vrot.lane.b32.xlu0 %v2611, 64
      %v2683 = vpop.permute.xlu0 %2682
      %2684 = vrot.lane.b32.xlu0 %v2614, 64
      %v2685 = vpop.permute.xlu0 %2684
      %2686 = vrot.lane.b32.xlu0 %v2616, 64
      %v2687 = vpop.permute.xlu0 %2686
      %2688 = vrot.lane.b32.xlu0 %v2619, 64
      %v2689 = vpop.permute.xlu0 %2688
      %2690 = vrot.lane.b32.xlu0 %v2621, 64
      %v2691 = vpop.permute.xlu0 %2690
      %2692 = vrot.lane.b32.xlu0 %v2624, 64
      %v2693 = vpop.permute.xlu0 %2692
      %2694 = vrot.lane.b32.xlu0 %v2626, 64
      %v2695 = vpop.permute.xlu0 %2694
      %2696 = vrot.lane.b32.xlu0 %v2629, 64
      %v2697 = vpop.permute.xlu0 %2696
      %2698 = vrot.lane.b32.xlu0 %v2631, 64
      %v2699 = vpop.permute.xlu0 %2698
      %2700 = vrot.lane.b32.xlu0 %v2634, 64
      %v2701 = vpop.permute.xlu0 %2700
      %2702 = vrot.lane.b32.xlu0 %v2636, 64
      %v2703 = vpop.permute.xlu0 %2702
      %2704 = vrot.lane.b32.xlu0 %v2639, 64
      %v2705 = vpop.permute.xlu0 %2704
      %2706 = vrot.lane.b32.xlu0 %v2641, 64
      %v2707 = vpop.permute.xlu0 %2706
      %2708 = vrot.lane.b32.xlu0 %v2644, 64
      %v2709 = vpop.permute.xlu0 %2708
      %2710 = vrot.lane.b32.xlu0 %v2646, 64
      %v2711 = vpop.permute.xlu0 %2710
      %2712 = vrot.lane.b32.xlu0 %v2649, 64
      %v2713 = vpop.permute.xlu0 %2712
      %2714 = vrot.lane.b32.xlu0 %v2651, 64
      %v2715 = vpop.permute.xlu0 %2714
      %v2748 = vsel %vm779, %v2300, %v2477
      %v2749 = vsel %vm779, %v2301, %v2479
      %v2750 = vsel %vm779, %v2303, %v2481
      %v2751 = vsel %vm779, %v2304, %v2483
      %v2752 = vsel %vm779, %v2306, %v2485
      %v2753 = vsel %vm779, %v2307, %v2487
      %v2754 = vsel %vm779, %v2309, %v2489
      %v2755 = vsel %vm779, %v2310, %v2491
      %v2756 = vsel %vm779, %v2312, %v2493
      %v2757 = vsel %vm779, %v2313, %v2495
      %v2758 = vsel %vm779, %v2315, %v2497
      %v2759 = vsel %vm779, %v2316, %v2499
      %v2760 = vsel %vm779, %v2318, %v2501
      %v2761 = vsel %vm779, %v2319, %v2503
      %v2762 = vsel %vm779, %v2321, %v2505
      %v2763 = vsel %vm779, %v2322, %v2507
      %v2764 = vsel %vm779, %v2324, %v2509
      %v2765 = vsel %vm779, %v2325, %v2511
      %v2766 = vsel %vm779, %v2327, %v2513
      %v2767 = vsel %vm779, %v2328, %v2515
      %v2768 = vsel %vm779, %v2330, %v2517
      %v2769 = vsel %vm779, %v2331, %v2519
      %v2770 = vsel %vm779, %v2333, %v2521
      %v2771 = vsel %vm779, %v2334, %v2523
      %v2772 = vsel %vm779, %v2336, %v2525
      %v2773 = vsel %vm779, %v2337, %v2527
      %v2774 = vsel %vm779, %v2339, %v2529
      %v2775 = vsel %vm779, %v2340, %v2531
      %v2776 = vsel %vm779, %v2342, %v2533
      %v2777 = vsel %vm779, %v2343, %v2535
      %v2778 = vsel %vm779, %v2345, %v2537
      %v2779 = vsel %vm779, %v2346, %v2539
      %v2780 = vsel %vm1350, %v2748, %v2653
      %v2781 = vsel %vm1350, %v2749, %v2655
      %v2782 = vsel %vm1350, %v2750, %v2657
      %v2783 = vsel %vm1350, %v2751, %v2659
      %v2784 = vsel %vm1350, %v2752, %v2661
      %v2785 = vsel %vm1350, %v2753, %v2663
      %v2786 = vsel %vm1350, %v2754, %v2665
      %v2787 = vsel %vm1350, %v2755, %v2667
      %v2788 = vsel %vm1350, %v2756, %v2669
      %v2789 = vsel %vm1350, %v2757, %v2671
      %v2790 = vsel %vm1350, %v2758, %v2673
      %v2791 = vsel %vm1350, %v2759, %v2675
      %v2792 = vsel %vm1350, %v2760, %v2677
      %v2793 = vsel %vm1350, %v2761, %v2679
      %v2794 = vsel %vm1350, %v2762, %v2681
      %v2795 = vsel %vm1350, %v2763, %v2683
      %v2796 = vsel %vm1350, %v2764, %v2685
      %v2797 = vsel %vm1350, %v2765, %v2687
      %v2798 = vsel %vm1350, %v2766, %v2689
      %v2799 = vsel %vm1350, %v2767, %v2691
      %v2800 = vsel %vm1350, %v2768, %v2693
      %v2801 = vsel %vm1350, %v2769, %v2695
      %v2802 = vsel %vm1350, %v2770, %v2697
      %v2803 = vsel %vm1350, %v2771, %v2699
      %v2804 = vsel %vm1350, %v2772, %v2701
      %v2805 = vsel %vm1350, %v2773, %v2703
      %v2806 = vsel %vm1350, %v2774, %v2705
      %v2807 = vsel %vm1350, %v2775, %v2707
      %v2808 = vsel %vm1350, %v2776, %v2709
      %v2809 = vsel %vm1350, %v2777, %v2711
      %v2810 = vsel %vm1350, %v2778, %v2713
      %v2811 = vsel %vm1350, %v2779, %v2715
      %v2812 = vpack.c.bf16 %v2781, %v2780
      %v2813 = vpack.c.bf16 %v2783, %v2782
      %v2814 = vpack.c.bf16 %v2785, %v2784
      %v2815 = vpack.c.bf16 %v2787, %v2786
      %v2816 = vpack.c.bf16 %v2789, %v2788
      %v2817 = vpack.c.bf16 %v2791, %v2790
      %v2818 = vpack.c.bf16 %v2793, %v2792
      %v2819 = vpack.c.bf16 %v2795, %v2794
      %v2820 = vpack.c.bf16 %v2797, %v2796
      %v2821 = vpack.c.bf16 %v2799, %v2798
      %v2822 = vpack.c.bf16 %v2801, %v2800
      %v2823 = vpack.c.bf16 %v2803, %v2802
      %v2824 = vpack.c.bf16 %v2805, %v2804
      %v2825 = vpack.c.bf16 %v2807, %v2806
      %v2826 = vpack.c.bf16 %v2809, %v2808
      %v2827 = vpack.c.bf16 %v2811, %v2810
      %s2828 = scalar_lea.vmem %s4, 96
      %v2829 = vld [vmem:[%s2828] sm:$0xf]
      %v2830 = vld [vmem:[%s2828 + $0x4] sm:$0xf]
      %v2831 = vld [vmem:[%s2828 + $0x8] sm:$0xf]
      %v2832 = vld [vmem:[%s2828 + $0xc] sm:$0xf]
      %v2833 = vld [vmem:[%s2828 + $0x10] sm:$0xf]
      %v2834 = vld [vmem:[%s2828 + $0x14] sm:$0xf]
      %v2835 = vld [vmem:[%s2828 + $0x18] sm:$0xf]
      %v2836 = vld [vmem:[%s2828 + $0x1c] sm:$0xf]
      %v2837 = vld [vmem:[%s2828 + $0x20] sm:$0xf]
      %v2838 = vld [vmem:[%s2828 + $0x24] sm:$0xf]
      %v2839 = vld [vmem:[%s2828 + $0x28] sm:$0xf]
      %v2840 = vld [vmem:[%s2828 + $0x2c] sm:$0xf]
      %v2853 = vunpack.c.l.b16 %v2829
      %v2854 = vunpack.c.l.b16 %v2830
      %v2855 = vunpack.c.l.b16 %v2831
      %v2856 = vunpack.c.l.b16 %v2832
      %v2857 = vunpack.c.l.b16 %v2833
      %v2858 = vunpack.c.l.b16 %v2834
      %v2859 = vunpack.c.l.b16 %v2835
      %v2860 = vunpack.c.l.b16 %v2836
      %v2861 = vunpack.c.l.b16 %v2837
      %v2862 = vunpack.c.l.b16 %v2838
      %v2863 = vunpack.c.l.b16 %v2839
      %v2864 = vunpack.c.l.b16 %v2840
      %v2865 = vpack.c.b16 %v2854, %v2853
      %v2866 = vpack.c.b16 %v2856, %v2855
      %v2867 = vpack.c.b16 %v2858, %v2857
      %v2868 = vpack.c.b16 %v2860, %v2859
      %v2869 = vpack.c.b16 %v2862, %v2861
      %v2870 = vpack.c.b16 %v2864, %v2863
      %v2878 = vsel %vm1988, %v2812, 0
      %v2881 = vsel %vm1988, %v2813, 0
      %v2884 = vsel %vm1988, %v2814, 0
      %v2887 = vsel %vm1988, %v2815, 0
      %v2890 = vsel %vm1988, %v2816, 0
      %v2893 = vsel %vm1988, %v2817, 0
      %v2896 = vsel %vm1988, %v2818, 0
      %v2899 = vsel %vm1988, %v2819, 0
      %v2902 = vsel %vm1988, %v2820, 0
      %v2905 = vsel %vm1988, %v2821, 0
      %v2908 = vsel %vm1988, %v2822, 0
      %v2911 = vsel %vm1988, %v2823, 0
      %v2914 = vsel %vm1988, %v2824, 0
      %v2917 = vsel %vm1988, %v2825, 0
      %v2920 = vsel %vm1988, %v2826, 0
      %v2923 = vsel %vm1988, %v2827, 0
      %2925 = vmatpush.bf16.msra.mxu0 0
      %2926 = vmatpush.bf16.msra.mxu0 0
      %2927 = vmatpush.bf16.msra.mxu0 %v2870
      %2928 = vmatpush.bf16.msra.mxu0 %v2869
      %2929 = vmatpush.bf16.msra.mxu0 %v2868
      %2930 = vmatpush.bf16.msra.mxu0 %v2867
      %2931 = vmatpush.bf16.msra.mxu0 %v2866
      %2932 = vmatpush.bf16.msra.mxu0 %v2865
      %2933 = vmatmul.bf16.gmra.mxu0 %v2878
      %v2934 = vpop.f32.mrf.mxu0
      %v2935 = vadd.f32 0.0, %v2934
      %v2936 = vpop.f32.mrf.mxu0
      %v2937 = vadd.f32 0.0, %v2936
      %2938 = vmatmul.bf16.gmra.mxu0 %v2881
      %v2939 = vpop.f32.mrf.mxu0
      %v2940 = vadd.f32 0.0, %v2939
      %v2941 = vpop.f32.mrf.mxu0
      %v2942 = vadd.f32 0.0, %v2941
      %2943 = vmatmul.bf16.gmra.mxu0 %v2884
      %v2944 = vpop.f32.mrf.mxu0
      %v2945 = vadd.f32 0.0, %v2944
      %v2946 = vpop.f32.mrf.mxu0
      %v2947 = vadd.f32 0.0, %v2946
      %2948 = vmatmul.bf16.gmra.mxu0 %v2887
      %v2949 = vpop.f32.mrf.mxu0
      %v2950 = vadd.f32 0.0, %v2949
      %v2951 = vpop.f32.mrf.mxu0
      %v2952 = vadd.f32 0.0, %v2951
      %2953 = vmatmul.bf16.gmra.mxu0 %v2890
      %v2954 = vpop.f32.mrf.mxu0
      %v2955 = vadd.f32 0.0, %v2954
      %v2956 = vpop.f32.mrf.mxu0
      %v2957 = vadd.f32 0.0, %v2956
      %2958 = vmatmul.bf16.gmra.mxu0 %v2893
      %v2959 = vpop.f32.mrf.mxu0
      %v2960 = vadd.f32 0.0, %v2959
      %v2961 = vpop.f32.mrf.mxu0
      %v2962 = vadd.f32 0.0, %v2961
      %2963 = vmatmul.bf16.gmra.mxu0 %v2896
      %v2964 = vpop.f32.mrf.mxu0
      %v2965 = vadd.f32 0.0, %v2964
      %v2966 = vpop.f32.mrf.mxu0
      %v2967 = vadd.f32 0.0, %v2966
      %2968 = vmatmul.bf16.gmra.mxu0 %v2899
      %v2969 = vpop.f32.mrf.mxu0
      %v2970 = vadd.f32 0.0, %v2969
      %v2971 = vpop.f32.mrf.mxu0
      %v2972 = vadd.f32 0.0, %v2971
      %2973 = vmatmul.bf16.gmra.mxu0 %v2902
      %v2974 = vpop.f32.mrf.mxu0
      %v2975 = vadd.f32 0.0, %v2974
      %v2976 = vpop.f32.mrf.mxu0
      %v2977 = vadd.f32 0.0, %v2976
      %2978 = vmatmul.bf16.gmra.mxu0 %v2905
      %v2979 = vpop.f32.mrf.mxu0
      %v2980 = vadd.f32 0.0, %v2979
      %v2981 = vpop.f32.mrf.mxu0
      %v2982 = vadd.f32 0.0, %v2981
      %2983 = vmatmul.bf16.gmra.mxu0 %v2908
      %v2984 = vpop.f32.mrf.mxu0
      %v2985 = vadd.f32 0.0, %v2984
      %v2986 = vpop.f32.mrf.mxu0
      %v2987 = vadd.f32 0.0, %v2986
      %2988 = vmatmul.bf16.gmra.mxu0 %v2911
      %v2989 = vpop.f32.mrf.mxu0
      %v2990 = vadd.f32 0.0, %v2989
      %v2991 = vpop.f32.mrf.mxu0
      %v2992 = vadd.f32 0.0, %v2991
      %2993 = vmatmul.bf16.gmra.mxu0 %v2914
      %v2994 = vpop.f32.mrf.mxu0
      %v2995 = vadd.f32 0.0, %v2994
      %v2996 = vpop.f32.mrf.mxu0
      %v2997 = vadd.f32 0.0, %v2996
      %2998 = vmatmul.bf16.gmra.mxu0 %v2917
      %v2999 = vpop.f32.mrf.mxu0
      %v3000 = vadd.f32 0.0, %v2999
      %v3001 = vpop.f32.mrf.mxu0
      %v3002 = vadd.f32 0.0, %v3001
      %3003 = vmatmul.bf16.gmra.mxu0 %v2920
      %v3004 = vpop.f32.mrf.mxu0
      %v3005 = vadd.f32 0.0, %v3004
      %v3006 = vpop.f32.mrf.mxu0
      %v3007 = vadd.f32 0.0, %v3006
      %3008 = vmatmul.bf16.gmra.mxu0 %v2923
      %v3009 = vpop.f32.mrf.mxu0
      %v3010 = vadd.f32 0.0, %v3009
      %v3011 = vpop.f32.mrf.mxu0
      %v3012 = vadd.f32 0.0, %v3011
      %3013 = vdwg.mxu0
      %v3014 = vadd.f32 %v2220, %v2935
      %v3015 = vadd.f32 %v2222, %v2937
      %v3016 = vadd.f32 %v2225, %v2940
      %v3017 = vadd.f32 %v2227, %v2942
      %v3018 = vadd.f32 %v2230, %v2945
      %v3019 = vadd.f32 %v2232, %v2947
      %v3020 = vadd.f32 %v2235, %v2950
      %v3021 = vadd.f32 %v2237, %v2952
      %v3022 = vadd.f32 %v2240, %v2955
      %v3023 = vadd.f32 %v2242, %v2957
      %v3024 = vadd.f32 %v2245, %v2960
      %v3025 = vadd.f32 %v2247, %v2962
      %v3026 = vadd.f32 %v2250, %v2965
      %v3027 = vadd.f32 %v2252, %v2967
      %v3028 = vadd.f32 %v2255, %v2970
      %v3029 = vadd.f32 %v2257, %v2972
      %v3030 = vadd.f32 %v2260, %v2975
      %v3031 = vadd.f32 %v2262, %v2977
      %v3032 = vadd.f32 %v2265, %v2980
      %v3033 = vadd.f32 %v2267, %v2982
      %v3034 = vadd.f32 %v2270, %v2985
      %v3035 = vadd.f32 %v2272, %v2987
      %v3036 = vadd.f32 %v2275, %v2990
      %v3037 = vadd.f32 %v2277, %v2992
      %v3038 = vadd.f32 %v2280, %v2995
      %v3039 = vadd.f32 %v2282, %v2997
      %v3040 = vadd.f32 %v2285, %v3000
      %v3041 = vadd.f32 %v2287, %v3002
      %v3042 = vadd.f32 %v2290, %v3005
      %v3043 = vadd.f32 %v2292, %v3007
      %v3044 = vadd.f32 %v2295, %v3010
      %v3045 = vadd.f32 %v2297, %v3012
      %v3046 = vld [vmem:[%s5] sm:$0x1]
      %v3048 = vperm.slane %v3046, 0
      %v3050 = vmul.f32 %v3014, %v3048
      %v3051 = vmul.f32 %v3015, %v3048
      %v3052 = vmul.f32 %v3016, %v3048
      %v3053 = vmul.f32 %v3017, %v3048
      %v3054 = vmul.f32 %v3018, %v3048
      %v3055 = vmul.f32 %v3019, %v3048
      %v3056 = vmul.f32 %v3020, %v3048
      %v3057 = vmul.f32 %v3021, %v3048
      %v3058 = vmul.f32 %v3022, %v3048
      %v3059 = vmul.f32 %v3023, %v3048
      %v3060 = vmul.f32 %v3024, %v3048
      %v3061 = vmul.f32 %v3025, %v3048
      %v3062 = vmul.f32 %v3026, %v3048
      %v3063 = vmul.f32 %v3027, %v3048
      %v3064 = vmul.f32 %v3028, %v3048
      %v3065 = vmul.f32 %v3029, %v3048
      %v3066 = vmul.f32 %v3030, %v3048
      %v3067 = vmul.f32 %v3031, %v3048
      %v3068 = vmul.f32 %v3032, %v3048
      %v3069 = vmul.f32 %v3033, %v3048
      %v3070 = vmul.f32 %v3034, %v3048
      %v3071 = vmul.f32 %v3035, %v3048
      %v3072 = vmul.f32 %v3036, %v3048
      %v3073 = vmul.f32 %v3037, %v3048
      %v3074 = vmul.f32 %v3038, %v3048
      %v3075 = vmul.f32 %v3039, %v3048
      %v3076 = vmul.f32 %v3040, %v3048
      %v3077 = vmul.f32 %v3041, %v3048
      %v3078 = vmul.f32 %v3042, %v3048
      %v3079 = vmul.f32 %v3043, %v3048
      %v3080 = vmul.f32 %v3044, %v3048
      %v3081 = vmul.f32 %v3045, %v3048
      %v3082 = vld [vmem:[%s6] sm:$0x1]
      %v3084 = vperm.slane %v3082, 0
      %v3086 = vadd.f32 %v3050, %v3084
      %v3087 = vadd.f32 %v3051, %v3084
      %v3088 = vadd.f32 %v3052, %v3084
      %v3089 = vadd.f32 %v3053, %v3084
      %v3090 = vadd.f32 %v3054, %v3084
      %v3091 = vadd.f32 %v3055, %v3084
      %v3092 = vadd.f32 %v3056, %v3084
      %v3093 = vadd.f32 %v3057, %v3084
      %v3094 = vadd.f32 %v3058, %v3084
      %v3095 = vadd.f32 %v3059, %v3084
      %v3096 = vadd.f32 %v3060, %v3084
      %v3097 = vadd.f32 %v3061, %v3084
      %v3098 = vadd.f32 %v3062, %v3084
      %v3099 = vadd.f32 %v3063, %v3084
      %v3100 = vadd.f32 %v3064, %v3084
      %v3101 = vadd.f32 %v3065, %v3084
      %v3102 = vadd.f32 %v3066, %v3084
      %v3103 = vadd.f32 %v3067, %v3084
      %v3104 = vadd.f32 %v3068, %v3084
      %v3105 = vadd.f32 %v3069, %v3084
      %v3106 = vadd.f32 %v3070, %v3084
      %v3107 = vadd.f32 %v3071, %v3084
      %v3108 = vadd.f32 %v3072, %v3084
      %v3109 = vadd.f32 %v3073, %v3084
      %v3110 = vadd.f32 %v3074, %v3084
      %v3111 = vadd.f32 %v3075, %v3084
      %v3112 = vadd.f32 %v3076, %v3084
      %v3113 = vadd.f32 %v3077, %v3084
      %v3114 = vadd.f32 %v3078, %v3084
      %v3115 = vadd.f32 %v3079, %v3084
      %v3116 = vadd.f32 %v3080, %v3084
      %v3117 = vadd.f32 %v3081, %v3084
      %v3118 = vmax.f32 %v3086, 0.0
      %v3119 = vmax.f32 %v3087, 0.0
      %v3120 = vmax.f32 %v3088, 0.0
      %v3121 = vmax.f32 %v3089, 0.0
      %v3122 = vmax.f32 %v3090, 0.0
      %v3123 = vmax.f32 %v3091, 0.0
      %v3124 = vmax.f32 %v3092, 0.0
      %v3125 = vmax.f32 %v3093, 0.0
      %v3126 = vmax.f32 %v3094, 0.0
      %v3127 = vmax.f32 %v3095, 0.0
      %v3128 = vmax.f32 %v3096, 0.0
      %v3129 = vmax.f32 %v3097, 0.0
      %v3130 = vmax.f32 %v3098, 0.0
      %v3131 = vmax.f32 %v3099, 0.0
      %v3132 = vmax.f32 %v3100, 0.0
      %v3133 = vmax.f32 %v3101, 0.0
      %v3134 = vmax.f32 %v3102, 0.0
      %v3135 = vmax.f32 %v3103, 0.0
      %v3136 = vmax.f32 %v3104, 0.0
      %v3137 = vmax.f32 %v3105, 0.0
      %v3138 = vmax.f32 %v3106, 0.0
      %v3139 = vmax.f32 %v3107, 0.0
      %v3140 = vmax.f32 %v3108, 0.0
      %v3141 = vmax.f32 %v3109, 0.0
      %v3142 = vmax.f32 %v3110, 0.0
      %v3143 = vmax.f32 %v3111, 0.0
      %v3144 = vmax.f32 %v3112, 0.0
      %v3145 = vmax.f32 %v3113, 0.0
      %v3146 = vmax.f32 %v3114, 0.0
      %v3147 = vmax.f32 %v3115, 0.0
      %v3148 = vmax.f32 %v3116, 0.0
      %v3149 = vmax.f32 %v3117, 0.0
      %3150 = vst.msk [vmem:[#allocation3] sm:$0xff] %vm1350, %v3118
      %3151 = vst.msk [vmem:[#allocation3 + $0x8] sm:$0xff] %vm1350, %v3119
      %3152 = vst.msk [vmem:[#allocation3 + $0x10] sm:$0xff] %vm1350, %v3120
      %3153 = vst.msk [vmem:[#allocation3 + $0x18] sm:$0xff] %vm1350, %v3121
      %3154 = vst.msk [vmem:[#allocation3 + $0x20] sm:$0xff] %vm1350, %v3122
      %3155 = vst.msk [vmem:[#allocation3 + $0x28] sm:$0xff] %vm1350, %v3123
      %3156 = vst.msk [vmem:[#allocation3 + $0x30] sm:$0xff] %vm1350, %v3124
      %3157 = vst.msk [vmem:[#allocation3 + $0x38] sm:$0xff] %vm1350, %v3125
      %3158 = vst.msk [vmem:[#allocation3 + $0x40] sm:$0xff] %vm1350, %v3126
      %3159 = vst.msk [vmem:[#allocation3 + $0x48] sm:$0xff] %vm1350, %v3127
      %3160 = vst.msk [vmem:[#allocation3 + $0x50] sm:$0xff] %vm1350, %v3128
      %3161 = vst.msk [vmem:[#allocation3 + $0x58] sm:$0xff] %vm1350, %v3129
      %3162 = vst.msk [vmem:[#allocation3 + $0x60] sm:$0xff] %vm1350, %v3130
      %3163 = vst.msk [vmem:[#allocation3 + $0x68] sm:$0xff] %vm1350, %v3131
      %3164 = vst.msk [vmem:[#allocation3 + $0x70] sm:$0xff] %vm1350, %v3132
      %3165 = vst.msk [vmem:[#allocation3 + $0x78] sm:$0xff] %vm1350, %v3133
      %3166 = vst.msk [vmem:[#allocation3 + $0x80] sm:$0xff] %vm1350, %v3134
      %3167 = vst.msk [vmem:[#allocation3 + $0x88] sm:$0xff] %vm1350, %v3135
      %3168 = vst.msk [vmem:[#allocation3 + $0x90] sm:$0xff] %vm1350, %v3136
      %3169 = vst.msk [vmem:[#allocation3 + $0x98] sm:$0xff] %vm1350, %v3137
      %3170 = vst.msk [vmem:[#allocation3 + $0xa0] sm:$0xff] %vm1350, %v3138
      %3171 = vst.msk [vmem:[#allocation3 + $0xa8] sm:$0xff] %vm1350, %v3139
      %3172 = vst.msk [vmem:[#allocation3 + $0xb0] sm:$0xff] %vm1350, %v3140
      %3173 = vst.msk [vmem:[#allocation3 + $0xb8] sm:$0xff] %vm1350, %v3141
      %3174 = vst.msk [vmem:[#allocation3 + $0xc0] sm:$0xff] %vm1350, %v3142
      %3175 = vst.msk [vmem:[#allocation3 + $0xc8] sm:$0xff] %vm1350, %v3143
      %3176 = vst.msk [vmem:[#allocation3 + $0xd0] sm:$0xff] %vm1350, %v3144
      %3177 = vst.msk [vmem:[#allocation3 + $0xd8] sm:$0xff] %vm1350, %v3145
      %3178 = vst.msk [vmem:[#allocation3 + $0xe0] sm:$0xff] %vm1350, %v3146
      %3179 = vst.msk [vmem:[#allocation3 + $0xe8] sm:$0xff] %vm1350, %v3147
      %3180 = vst.msk [vmem:[#allocation3 + $0xf0] sm:$0xff] %vm1350, %v3148
      %3181 = vst.msk [vmem:[#allocation3 + $0xf8] sm:$0xff] %vm1350, %v3149
      %v3182 = vld [vmem:[#allocation3] ss:$2 sm:$0xff]
      %s3183 = scalar_lea.vmem [#allocation3], 16
      %v3184 = vld [vmem:[%s3183] ss:$2 sm:$0xff]
      %s3185 = scalar_lea.vmem [#allocation3], 32
      %v3186 = vld [vmem:[%s3185] ss:$2 sm:$0xff]
      %s3187 = scalar_lea.vmem [#allocation3], 48
      %v3188 = vld [vmem:[%s3187] ss:$2 sm:$0xff]
      %s3189 = scalar_lea.vmem [#allocation3], 64
      %v3190 = vld [vmem:[%s3189] ss:$2 sm:$0xff]
      %s3191 = scalar_lea.vmem [#allocation3], 80
      %v3192 = vld [vmem:[%s3191] ss:$2 sm:$0xff]
      %s3193 = scalar_lea.vmem [#allocation3], 96
      %v3194 = vld [vmem:[%s3193] ss:$2 sm:$0xff]
      %s3195 = scalar_lea.vmem [#allocation3], 112
      %v3196 = vld [vmem:[%s3195] ss:$2 sm:$0xff]
      %s3197 = scalar_lea.vmem [#allocation3], 128
      %v3198 = vld [vmem:[%s3197] ss:$2 sm:$0xff]
      %s3199 = scalar_lea.vmem [#allocation3], 144
      %v3200 = vld [vmem:[%s3199] ss:$2 sm:$0xff]
      %s3201 = scalar_lea.vmem [#allocation3], 160
      %v3202 = vld [vmem:[%s3201] ss:$2 sm:$0xff]
      %s3203 = scalar_lea.vmem [#allocation3], 176
      %v3204 = vld [vmem:[%s3203] ss:$2 sm:$0xff]
      %s3205 = scalar_lea.vmem [#allocation3], 192
      %v3206 = vld [vmem:[%s3205] ss:$2 sm:$0xff]
      %s3207 = scalar_lea.vmem [#allocation3], 208
      %v3208 = vld [vmem:[%s3207] ss:$2 sm:$0xff]
      %s3209 = scalar_lea.vmem [#allocation3], 224
      %v3210 = vld [vmem:[%s3209] ss:$2 sm:$0xff]
      %s3211 = scalar_lea.vmem [#allocation3], 240
      %v3212 = vld [vmem:[%s3211] ss:$2 sm:$0xff]
      %3213 = vst.msk [vmem:[#allocation6] sm:$0xff] %vm1350, %v3182
      %3214 = vst.msk [vmem:[#allocation6 + $0x8] sm:$0xff] %vm1350, %v3184
      %3215 = vst.msk [vmem:[#allocation6 + $0x10] sm:$0xff] %vm1350, %v3186
      %3216 = vst.msk [vmem:[#allocation6 + $0x18] sm:$0xff] %vm1350, %v3188
      %3217 = vst.msk [vmem:[#allocation6 + $0x20] sm:$0xff] %vm1350, %v3190
      %3218 = vst.msk [vmem:[#allocation6 + $0x28] sm:$0xff] %vm1350, %v3192
      %3219 = vst.msk [vmem:[#allocation6 + $0x30] sm:$0xff] %vm1350, %v3194
      %3220 = vst.msk [vmem:[#allocation6 + $0x38] sm:$0xff] %vm1350, %v3196
      %3221 = vst.msk [vmem:[#allocation6 + $0x40] sm:$0xff] %vm1350, %v3198
      %3222 = vst.msk [vmem:[#allocation6 + $0x48] sm:$0xff] %vm1350, %v3200
      %3223 = vst.msk [vmem:[#allocation6 + $0x50] sm:$0xff] %vm1350, %v3202
      %3224 = vst.msk [vmem:[#allocation6 + $0x58] sm:$0xff] %vm1350, %v3204
      %3225 = vst.msk [vmem:[#allocation6 + $0x60] sm:$0xff] %vm1350, %v3206
      %3226 = vst.msk [vmem:[#allocation6 + $0x68] sm:$0xff] %vm1350, %v3208
      %3227 = vst.msk [vmem:[#allocation6 + $0x70] sm:$0xff] %vm1350, %v3210
      %3228 = vst.msk [vmem:[#allocation6 + $0x78] sm:$0xff] %vm1350, %v3212
      %s3229 = scalar_lea.vmem [#allocation3], 1
      %v3230 = vld [vmem:[%s3229] ss:$2 sm:$0x7f]
      %s3231 = scalar_lea.vmem [#allocation3], 17
      %v3232 = vld [vmem:[%s3231] ss:$2 sm:$0x7f]
      %s3233 = scalar_lea.vmem [#allocation3], 33
      %v3234 = vld [vmem:[%s3233] ss:$2 sm:$0x7f]
      %s3235 = scalar_lea.vmem [#allocation3], 49
      %v3236 = vld [vmem:[%s3235] ss:$2 sm:$0x7f]
      %s3237 = scalar_lea.vmem [#allocation3], 65
      %v3238 = vld [vmem:[%s3237] ss:$2 sm:$0x7f]
      %s3239 = scalar_lea.vmem [#allocation3], 81
      %v3240 = vld [vmem:[%s3239] ss:$2 sm:$0x7f]
      %s3241 = scalar_lea.vmem [#allocation3], 97
      %v3242 = vld [vmem:[%s3241] ss:$2 sm:$0x7f]
      %s3243 = scalar_lea.vmem [#allocation3], 113
      %v3244 = vld [vmem:[%s3243] ss:$2 sm:$0x7f]
      %s3245 = scalar_lea.vmem [#allocation3], 129
      %v3246 = vld [vmem:[%s3245] ss:$2 sm:$0x7f]
      %s3247 = scalar_lea.vmem [#allocation3], 145
      %v3248 = vld [vmem:[%s3247] ss:$2 sm:$0x7f]
      %s3249 = scalar_lea.vmem [#allocation3], 161
      %v3250 = vld [vmem:[%s3249] ss:$2 sm:$0x7f]
      %s3251 = scalar_lea.vmem [#allocation3], 177
      %v3252 = vld [vmem:[%s3251] ss:$2 sm:$0x7f]
      %s3253 = scalar_lea.vmem [#allocation3], 193
      %v3254 = vld [vmem:[%s3253] ss:$2 sm:$0x7f]
      %s3255 = scalar_lea.vmem [#allocation3], 209
      %v3256 = vld [vmem:[%s3255] ss:$2 sm:$0x7f]
      %s3257 = scalar_lea.vmem [#allocation3], 225
      %v3258 = vld [vmem:[%s3257] ss:$2 sm:$0x7f]
      %s3259 = scalar_lea.vmem [#allocation3], 241
      %v3260 = vld [vmem:[%s3259] ss:$2 sm:$0x7f]
      %vm3261 = vcmask 522240
      %3262 = vst.msk [vmem:[#allocation7] sm:$0x7f] %vm3261, %v3230
      %3263 = vst.msk [vmem:[#allocation7 + $0x8] sm:$0x7f] %vm3261, %v3232
      %3264 = vst.msk [vmem:[#allocation7 + $0x10] sm:$0x7f] %vm3261, %v3234
      %3265 = vst.msk [vmem:[#allocation7 + $0x18] sm:$0x7f] %vm3261, %v3236
      %3266 = vst.msk [vmem:[#allocation7 + $0x20] sm:$0x7f] %vm3261, %v3238
      %3267 = vst.msk [vmem:[#allocation7 + $0x28] sm:$0x7f] %vm3261, %v3240
      %3268 = vst.msk [vmem:[#allocation7 + $0x30] sm:$0x7f] %vm3261, %v3242
      %3269 = vst.msk [vmem:[#allocation7 + $0x38] sm:$0x7f] %vm3261, %v3244
      %3270 = vst.msk [vmem:[#allocation7 + $0x40] sm:$0x7f] %vm3261, %v3246
      %3271 = vst.msk [vmem:[#allocation7 + $0x48] sm:$0x7f] %vm3261, %v3248
      %3272 = vst.msk [vmem:[#allocation7 + $0x50] sm:$0x7f] %vm3261, %v3250
      %3273 = vst.msk [vmem:[#allocation7 + $0x58] sm:$0x7f] %vm3261, %v3252
      %3274 = vst.msk [vmem:[#allocation7 + $0x60] sm:$0x7f] %vm3261, %v3254
      %3275 = vst.msk [vmem:[#allocation7 + $0x68] sm:$0x7f] %vm3261, %v3256
      %3276 = vst.msk [vmem:[#allocation7 + $0x70] sm:$0x7f] %vm3261, %v3258
      %3277 = vst.msk [vmem:[#allocation7 + $0x78] sm:$0x7f] %vm3261, %v3260
      %v3278 = vld [vmem:[#allocation4] sm:$0xff]
      %v3279 = vld [vmem:[#allocation4 + $0x10] sm:$0xff]
      %v3280 = vld [vmem:[#allocation4 + $0x20] sm:$0xff]
      %v3281 = vld [vmem:[#allocation4 + $0x30] sm:$0xff]
      %v3282 = vld [vmem:[#allocation4 + $0x40] sm:$0xff]
      %v3283 = vld [vmem:[#allocation4 + $0x50] sm:$0xff]
      %v3284 = vld [vmem:[#allocation4 + $0x60] sm:$0xff]
      %v3285 = vld [vmem:[#allocation5] sm:$0x7f]
      %v3286 = vld [vmem:[#allocation5 + $0x10] sm:$0x7f]
      %v3287 = vld [vmem:[#allocation5 + $0x20] sm:$0x7f]
      %v3288 = vld [vmem:[#allocation5 + $0x30] sm:$0x7f]
      %v3289 = vld [vmem:[#allocation5 + $0x40] sm:$0x7f]
      %v3290 = vld [vmem:[#allocation5 + $0x50] sm:$0x7f]
      %v3291 = vld [vmem:[#allocation5 + $0x60] sm:$0x7f]
      %v3292 = vmax.f32 %v3278, %v3285
      %v3293 = vmax.f32 %v3279, %v3286
      %v3294 = vmax.f32 %v3280, %v3287
      %v3295 = vmax.f32 %v3281, %v3288
      %v3296 = vmax.f32 %v3282, %v3289
      %v3297 = vmax.f32 %v3283, %v3290
      %v3298 = vmax.f32 %v3284, %v3291
      %v3306 = vrot.slane %v3278, 1
      %v3307 = vrot.slane %v3279, 1
      %v3308 = vrot.slane %v3280, 1
      %v3309 = vrot.slane %v3281, 1
      %v3310 = vrot.slane %v3282, 1
      %v3311 = vrot.slane %v3283, 1
      %v3312 = vrot.slane %v3284, 1
      %v3320 = vmax.f32 %v3292, %v3306
      %v3321 = vmax.f32 %v3293, %v3307
      %v3322 = vmax.f32 %v3294, %v3308
      %v3323 = vmax.f32 %v3295, %v3309
      %v3324 = vmax.f32 %v3296, %v3310
      %v3325 = vmax.f32 %v3297, %v3311
      %v3326 = vmax.f32 %v3298, %v3312
      %3334 = vrot.lane.b32.xlu0 %v3285, 4
      %v3335 = vpop.permute.xlu0 %3334
      %3336 = vrot.lane.b32.xlu0 %v3286, 4
      %v3337 = vpop.permute.xlu0 %3336
      %3338 = vrot.lane.b32.xlu0 %v3287, 4
      %v3339 = vpop.permute.xlu0 %3338
      %3340 = vrot.lane.b32.xlu0 %v3288, 4
      %v3341 = vpop.permute.xlu0 %3340
      %3342 = vrot.lane.b32.xlu0 %v3289, 4
      %v3343 = vpop.permute.xlu0 %3342
      %3344 = vrot.lane.b32.xlu0 %v3290, 4
      %v3345 = vpop.permute.xlu0 %3344
      %3346 = vrot.lane.b32.xlu0 %v3291, 4
      %v3347 = vpop.permute.xlu0 %3346
      %3355 = vrot.lane.b32.xlu0 %v3306, 8
      %v3356 = vpop.permute.xlu0 %3355
      %3357 = vrot.lane.b32.xlu0 %v3307, 8
      %v3358 = vpop.permute.xlu0 %3357
      %3359 = vrot.lane.b32.xlu0 %v3308, 8
      %v3360 = vpop.permute.xlu0 %3359
      %3361 = vrot.lane.b32.xlu0 %v3309, 8
      %v3362 = vpop.permute.xlu0 %3361
      %3363 = vrot.lane.b32.xlu0 %v3310, 8
      %v3364 = vpop.permute.xlu0 %3363
      %3365 = vrot.lane.b32.xlu0 %v3311, 8
      %v3366 = vpop.permute.xlu0 %3365
      %3367 = vrot.lane.b32.xlu0 %v3312, 8
      %v3368 = vpop.permute.xlu0 %3367
      %v3376 = vsel %vm419, %v3278, %v3335
      %v3377 = vsel %vm419, %v3279, %v3337
      %v3378 = vsel %vm419, %v3280, %v3339
      %v3379 = vsel %vm419, %v3281, %v3341
      %v3380 = vsel %vm419, %v3282, %v3343
      %v3381 = vsel %vm419, %v3283, %v3345
      %v3382 = vsel %vm419, %v3284, %v3347
      %vm3383 = vcmask 64512
      %v3384 = vsel %vm3383, %v3376, %v3356
      %v3385 = vsel %vm3383, %v3377, %v3358
      %v3386 = vsel %vm3383, %v3378, %v3360
      %v3387 = vsel %vm3383, %v3379, %v3362
      %v3388 = vsel %vm3383, %v3380, %v3364
      %v3389 = vsel %vm3383, %v3381, %v3366
      %v3390 = vsel %vm3383, %v3382, %v3368
      %v3391 = vsel %vm964, %v3384, 0.0
      %v3392 = vsel %vm964, %v3385, 0.0
      %v3393 = vsel %vm964, %v3386, 0.0
      %v3394 = vsel %vm964, %v3387, 0.0
      %v3395 = vsel %vm964, %v3388, 0.0
      %v3396 = vsel %vm964, %v3389, 0.0
      %v3397 = vsel %vm964, %v3390, 0.0
      %v3398 = vpack.c.bf16 %v3392, %v3391
      %v3399 = vpack.c.bf16 %v3394, %v3393
      %v3400 = vpack.c.bf16 %v3396, %v3395
      %v3401 = vpack.c.bf16 %v3397, %v3397
      %v3402 = vld [vmem:[%s7] sm:$0xf]
      %v3403 = vld [vmem:[%s7 + $0x4] sm:$0x3]
      %v3404 = vld [vmem:[#allocation6] sm:$0xff]
      %v3405 = vld [vmem:[#allocation6 + $0x10] sm:$0xff]
      %v3406 = vld [vmem:[#allocation6 + $0x20] sm:$0xff]
      %v3407 = vld [vmem:[#allocation6 + $0x30] sm:$0xff]
      %v3408 = vld [vmem:[#allocation6 + $0x40] sm:$0xff]
      %v3409 = vld [vmem:[#allocation6 + $0x50] sm:$0xff]
      %v3410 = vld [vmem:[#allocation6 + $0x60] sm:$0xff]
      %v3411 = vld [vmem:[#allocation7] sm:$0x7f]
      %v3412 = vld [vmem:[#allocation7 + $0x10] sm:$0x7f]
      %v3413 = vld [vmem:[#allocation7 + $0x20] sm:$0x7f]
      %v3414 = vld [vmem:[#allocation7 + $0x30] sm:$0x7f]
      %v3415 = vld [vmem:[#allocation7 + $0x40] sm:$0x7f]
      %v3416 = vld [vmem:[#allocation7 + $0x50] sm:$0x7f]
      %v3417 = vld [vmem:[#allocation7 + $0x60] sm:$0x7f]
      %3425 = vrot.lane.b32.xlu0 %v3411, 64
      %v3426 = vpop.permute.xlu0 %3425
      %3427 = vrot.lane.b32.xlu0 %v3412, 64
      %v3428 = vpop.permute.xlu0 %3427
      %3429 = vrot.lane.b32.xlu0 %v3413, 64
      %v3430 = vpop.permute.xlu0 %3429
      %3431 = vrot.lane.b32.xlu0 %v3414, 64
      %v3432 = vpop.permute.xlu0 %3431
      %3433 = vrot.lane.b32.xlu0 %v3415, 64
      %v3434 = vpop.permute.xlu0 %3433
      %3435 = vrot.lane.b32.xlu0 %v3416, 64
      %v3436 = vpop.permute.xlu0 %3435
      %3437 = vrot.lane.b32.xlu0 %v3417, 64
      %v3438 = vpop.permute.xlu0 %3437
      %v3453 = vrot.slane %v3404, 1
      %v3454 = vrot.slane %v3405, 1
      %v3455 = vrot.slane %v3406, 1
      %v3456 = vrot.slane %v3407, 1
      %v3457 = vrot.slane %v3408, 1
      %v3458 = vrot.slane %v3409, 1
      %v3459 = vrot.slane %v3410, 1
      %v3467 = vsel %vm1350, %v3404, %v3426
      %v3468 = vsel %vm1350, %v3405, %v3428
      %v3469 = vsel %vm1350, %v3406, %v3430
      %v3470 = vsel %vm1350, %v3407, %v3432
      %v3471 = vsel %vm1350, %v3408, %v3434
      %v3472 = vsel %vm1350, %v3409, %v3436
      %v3473 = vsel %vm1350, %v3410, %v3438
      %v3474 = vsel %vm964, %v3467, 0.0
      %v3475 = vsel %vm964, %v3453, 0.0
      %v3476 = vsel %vm964, %v3468, 0.0
      %v3477 = vsel %vm964, %v3454, 0.0
      %v3478 = vsel %vm964, %v3469, 0.0
      %v3479 = vsel %vm964, %v3455, 0.0
      %v3480 = vsel %vm964, %v3470, 0.0
      %v3481 = vsel %vm964, %v3456, 0.0
      %v3482 = vsel %vm964, %v3471, 0.0
      %v3483 = vsel %vm964, %v3457, 0.0
      %v3484 = vsel %vm964, %v3472, 0.0
      %v3485 = vsel %vm964, %v3458, 0.0
      %v3486 = vsel %vm964, %v3473, 0.0
      %v3487 = vsel %vm964, %v3459, 0.0
      %v3488 = vpack.c.bf16 %v3476, %v3474
      %v3489 = vpack.c.bf16 %v3477, %v3475
      %v3490 = vpack.c.bf16 %v3480, %v3478
      %v3491 = vpack.c.bf16 %v3481, %v3479
      %v3492 = vpack.c.bf16 %v3484, %v3482
      %v3493 = vpack.c.bf16 %v3485, %v3483
      %v3494 = vpack.c.bf16 %v3486, %v3486
      %v3495 = vpack.c.bf16 %v3487, %v3487
      %v3496 = vld [vmem:[%s8] sm:$0xf]
      %v3497 = vld [vmem:[%s8 + $0x4] sm:$0xf]
      %v3498 = vld [vmem:[%s8 + $0x8] sm:$0xf]
      %v3499 = vld [vmem:[%s8 + $0xc] sm:$0xf]
      %v3500 = vld [vmem:[%s8 + $0x10] sm:$0xf]
      %v3501 = vld [vmem:[%s8 + $0x14] sm:$0xf]
      %v3502 = vld [vmem:[%s8 + $0x18] sm:$0xf]
      %v3503 = vld [vmem:[%s8 + $0x1c] sm:$0xf]
      %v3504 = vld [vmem:[%s8 + $0x20] sm:$0xf]
      %v3505 = vld [vmem:[%s8 + $0x24] sm:$0xf]
      %v3506 = vld [vmem:[%s8 + $0x28] sm:$0xf]
      %v3507 = vld [vmem:[%s8 + $0x2c] sm:$0xf]
      %v3508 = vld [vmem:[%s8 + $0x30] sm:$0xf]
      %v3509 = vld [vmem:[%s8 + $0x34] sm:$0xf]
      %v3510 = vld [vmem:[%s8 + $0x38] sm:$0xf]
      %v3511 = vld [vmem:[%s8 + $0x3c] sm:$0xf]
      %v3512 = vld [vmem:[%s8 + $0x40] sm:$0xf]
      %v3513 = vld [vmem:[%s8 + $0x44] sm:$0xf]
      %v3514 = vld [vmem:[%s8 + $0x48] sm:$0xf]
      %v3515 = vld [vmem:[%s8 + $0x4c] sm:$0xf]
      %v3516 = vld [vmem:[%s8 + $0x50] sm:$0xf]
      %v3517 = vld [vmem:[%s8 + $0x54] sm:$0xf]
      %v3518 = vld [vmem:[%s8 + $0x58] sm:$0xf]
      %v3519 = vld [vmem:[%s8 + $0x5c] sm:$0xf]
      %v3544 = vunpack.c.l.b16 %v3496
      %v3545 = vunpack.c.l.b16 %v3497
      %v3546 = vunpack.c.l.b16 %v3498
      %v3547 = vunpack.c.l.b16 %v3499
      %v3548 = vunpack.c.l.b16 %v3500
      %v3549 = vunpack.c.l.b16 %v3501
      %v3550 = vunpack.c.l.b16 %v3502
      %v3551 = vunpack.c.l.b16 %v3503
      %v3552 = vunpack.c.l.b16 %v3504
      %v3553 = vunpack.c.l.b16 %v3505
      %v3554 = vunpack.c.l.b16 %v3506
      %v3555 = vunpack.c.l.b16 %v3507
      %v3556 = vunpack.c.l.b16 %v3508
      %v3557 = vunpack.c.l.b16 %v3509
      %v3558 = vunpack.c.l.b16 %v3510
      %v3559 = vunpack.c.l.b16 %v3511
      %v3560 = vunpack.c.l.b16 %v3512
      %v3561 = vunpack.c.l.b16 %v3513
      %v3562 = vunpack.c.l.b16 %v3514
      %v3563 = vunpack.c.l.b16 %v3515
      %v3564 = vunpack.c.l.b16 %v3516
      %v3565 = vunpack.c.l.b16 %v3517
      %v3566 = vunpack.c.l.b16 %v3518
      %v3567 = vunpack.c.l.b16 %v3519
      %v3568 = vpack.c.b16 %v3545, %v3544
      %v3569 = vpack.c.b16 %v3547, %v3546
      %v3570 = vpack.c.b16 %v3549, %v3548
      %v3571 = vpack.c.b16 %v3551, %v3550
      %v3572 = vpack.c.b16 %v3553, %v3552
      %v3573 = vpack.c.b16 %v3555, %v3554
      %v3574 = vpack.c.b16 %v3557, %v3556
      %v3575 = vpack.c.b16 %v3559, %v3558
      %v3576 = vpack.c.b16 %v3561, %v3560
      %v3577 = vpack.c.b16 %v3563, %v3562
      %v3578 = vpack.c.b16 %v3565, %v3564
      %v3579 = vpack.c.b16 %v3567, %v3566
      %v3593 = vsel %vm1350, %v3489, 0
      %v3596 = vsel %vm1350, %v3491, 0
      %v3599 = vsel %vm1350, %v3493, 0
      %v3602 = vsel %vm1350, %v3495, 0
      %3604 = vmatpush.bf16.msra.mxu0 %v3575
      %3605 = vmatpush.bf16.msra.mxu0 %v3574
      %3606 = vmatpush.bf16.msra.mxu0 %v3573
      %3607 = vmatpush.bf16.msra.mxu0 %v3572
      %3608 = vmatpush.bf16.msra.mxu0 %v3571
      %3609 = vmatpush.bf16.msra.mxu0 %v3570
      %3610 = vmatpush.bf16.msra.mxu0 %v3569
      %3611 = vmatpush.bf16.msra.mxu0 %v3568
      %3612 = vmatmul.bf16.gmra.mxu0 %v3488
      %v3613 = vpop.f32.mrf.mxu0
      %v3614 = vadd.f32 0.0, %v3613
      %v3615 = vpop.f32.mrf.mxu0
      %v3616 = vadd.f32 0.0, %v3615
      %3617 = vmatmul.bf16.gmra.mxu0 %v3490
      %v3618 = vpop.f32.mrf.mxu0
      %v3619 = vadd.f32 0.0, %v3618
      %v3620 = vpop.f32.mrf.mxu0
      %v3621 = vadd.f32 0.0, %v3620
      %3622 = vmatmul.bf16.gmra.mxu0 %v3492
      %v3623 = vpop.f32.mrf.mxu0
      %v3624 = vadd.f32 0.0, %v3623
      %v3625 = vpop.f32.mrf.mxu0
      %v3626 = vadd.f32 0.0, %v3625
      %3627 = vmatmul.bf16.gmra.mxu0 %v3494
      %v3628 = vpop.f32.mrf.mxu0
      %v3629 = vadd.f32 0.0, %v3628
      %v3630 = vpop.f32.mrf.mxu0
      %3631 = vdwg.mxu0
      %3632 = vmatpush.bf16.msra.mxu0 0
      %3633 = vmatpush.bf16.msra.mxu0 0
      %3634 = vmatpush.bf16.msra.mxu0 0
      %3635 = vmatpush.bf16.msra.mxu0 0
      %3636 = vmatpush.bf16.msra.mxu0 %v3579
      %3637 = vmatpush.bf16.msra.mxu0 %v3578
      %3638 = vmatpush.bf16.msra.mxu0 %v3577
      %3639 = vmatpush.bf16.msra.mxu0 %v3576
      %3640 = vmatmul.bf16.gmra.mxu0 %v3593
      %v3641 = vpop.f32.mrf.mxu0
      %v3642 = vadd.f32 %v3614, %v3641
      %v3643 = vpop.f32.mrf.mxu0
      %v3644 = vadd.f32 %v3616, %v3643
      %3645 = vmatmul.bf16.gmra.mxu0 %v3596
      %v3646 = vpop.f32.mrf.mxu0
      %v3647 = vadd.f32 %v3619, %v3646
      %v3648 = vpop.f32.mrf.mxu0
      %v3649 = vadd.f32 %v3621, %v3648
      %3650 = vmatmul.bf16.gmra.mxu0 %v3599
      %v3651 = vpop.f32.mrf.mxu0
      %v3652 = vadd.f32 %v3624, %v3651
      %v3653 = vpop.f32.mrf.mxu0
      %v3654 = vadd.f32 %v3626, %v3653
      %3655 = vmatmul.bf16.gmra.mxu0 %v3602
      %v3656 = vpop.f32.mrf.mxu0
      %v3657 = vadd.f32 %v3629, %v3656
      %v3658 = vpop.f32.mrf.mxu0
      %3659 = vdwg.mxu0
      %v3662 = vunpack.c.l.b16 %v3402
      %v3663 = vunpack.c.l.b16 %v3403
      %v3664 = vpack.c.b16 %v3663, %v3662
      %vm3665 = vcmask 97280
      %v3667 = vsel %vm3665, %v3398, 0
      %v3670 = vsel %vm3665, %v3399, 0
      %v3673 = vsel %vm3665, %v3400, 0
      %v3676 = vsel %vm3665, %v3401, 0
      %v3679 = vsel %vm1141, %v3664, 0
      %3681 = vmatpush.bf16.msra.mxu0 0
      %3682 = vmatpush.bf16.msra.mxu0 0
      %3683 = vmatpush.bf16.msra.mxu0 0
      %3684 = vmatpush.bf16.msra.mxu0 0
      %3685 = vmatpush.bf16.msra.mxu0 0
      %3686 = vmatpush.bf16.msra.mxu0 0
      %3687 = vmatpush.bf16.msra.mxu0 0
      %3688 = vmatpush.bf16.msra.mxu0 %v3679
      %3689 = vmatmul.bf16.gmra.mxu0 %v3667
      %v3690 = vpop.f32.mrf.mxu0
      %v3691 = vadd.f32 %v3642, %v3690
      %v3692 = vpop.f32.mrf.mxu0
      %v3693 = vadd.f32 %v3644, %v3692
      %3694 = vmatmul.bf16.gmra.mxu0 %v3670
      %v3695 = vpop.f32.mrf.mxu0
      %v3696 = vadd.f32 %v3647, %v3695
      %v3697 = vpop.f32.mrf.mxu0
      %v3698 = vadd.f32 %v3649, %v3697
      %3699 = vmatmul.bf16.gmra.mxu0 %v3673
      %v3700 = vpop.f32.mrf.mxu0
      %v3701 = vadd.f32 %v3652, %v3700
      %v3702 = vpop.f32.mrf.mxu0
      %v3703 = vadd.f32 %v3654, %v3702
      %3704 = vmatmul.bf16.gmra.mxu0 %v3676
      %v3705 = vpop.f32.mrf.mxu0
      %v3706 = vadd.f32 %v3657, %v3705
      %v3707 = vpop.f32.mrf.mxu0
      %3708 = vdwg.mxu0
      %s3709 = scalar_lea.vmem [#allocation4], 8
      %v3710 = vld [vmem:[%s3709] sm:$0xff]
      %v3711 = vld [vmem:[%s3709 + $0x10] sm:$0xff]
      %v3712 = vld [vmem:[%s3709 + $0x20] sm:$0xff]
      %v3713 = vld [vmem:[%s3709 + $0x30] sm:$0xff]
      %v3714 = vld [vmem:[%s3709 + $0x40] sm:$0xff]
      %v3715 = vld [vmem:[%s3709 + $0x50] sm:$0xff]
      %v3716 = vld [vmem:[%s3709 + $0x60] sm:$0xff]
      %s3717 = scalar_lea.vmem [#allocation5], 8
      %v3718 = vld [vmem:[%s3717] sm:$0x7f]
      %v3719 = vld [vmem:[%s3717 + $0x10] sm:$0x7f]
      %v3720 = vld [vmem:[%s3717 + $0x20] sm:$0x7f]
      %v3721 = vld [vmem:[%s3717 + $0x30] sm:$0x7f]
      %v3722 = vld [vmem:[%s3717 + $0x40] sm:$0x7f]
      %v3723 = vld [vmem:[%s3717 + $0x50] sm:$0x7f]
      %v3724 = vld [vmem:[%s3717 + $0x60] sm:$0x7f]
      %v3725 = vmax.f32 %v3710, %v3718
      %v3726 = vmax.f32 %v3711, %v3719
      %v3727 = vmax.f32 %v3712, %v3720
      %v3728 = vmax.f32 %v3713, %v3721
      %v3729 = vmax.f32 %v3714, %v3722
      %v3730 = vmax.f32 %v3715, %v3723
      %v3731 = vmax.f32 %v3716, %v3724
      %v3739 = vrot.slane %v3710, 1
      %v3740 = vrot.slane %v3711, 1
      %v3741 = vrot.slane %v3712, 1
      %v3742 = vrot.slane %v3713, 1
      %v3743 = vrot.slane %v3714, 1
      %v3744 = vrot.slane %v3715, 1
      %v3745 = vrot.slane %v3716, 1
      %v3753 = vmax.f32 %v3725, %v3739
      %v3754 = vmax.f32 %v3726, %v3740
      %v3755 = vmax.f32 %v3727, %v3741
      %v3756 = vmax.f32 %v3728, %v3742
      %v3757 = vmax.f32 %v3729, %v3743
      %v3758 = vmax.f32 %v3730, %v3744
      %v3759 = vmax.f32 %v3731, %v3745
      %v3760 = vmax.f32 %v3320, %v3753
      %v3761 = vmax.f32 %v3321, %v3754
      %v3762 = vmax.f32 %v3322, %v3755
      %v3763 = vmax.f32 %v3323, %v3756
      %v3764 = vmax.f32 %v3324, %v3757
      %v3765 = vmax.f32 %v3325, %v3758
      %v3766 = vmax.f32 %v3326, %v3759
      %3774 = vrot.lane.b32.xlu0 %v3718, 4
      %v3775 = vpop.permute.xlu0 %3774
      %3776 = vrot.lane.b32.xlu0 %v3719, 4
      %v3777 = vpop.permute.xlu0 %3776
      %3778 = vrot.lane.b32.xlu0 %v3720, 4
      %v3779 = vpop.permute.xlu0 %3778
      %3780 = vrot.lane.b32.xlu0 %v3721, 4
      %v3781 = vpop.permute.xlu0 %3780
      %3782 = vrot.lane.b32.xlu0 %v3722, 4
      %v3783 = vpop.permute.xlu0 %3782
      %3784 = vrot.lane.b32.xlu0 %v3723, 4
      %v3785 = vpop.permute.xlu0 %3784
      %3786 = vrot.lane.b32.xlu0 %v3724, 4
      %v3787 = vpop.permute.xlu0 %3786
      %3795 = vrot.lane.b32.xlu0 %v3739, 8
      %v3796 = vpop.permute.xlu0 %3795
      %3797 = vrot.lane.b32.xlu0 %v3740, 8
      %v3798 = vpop.permute.xlu0 %3797
      %3799 = vrot.lane.b32.xlu0 %v3741, 8
      %v3800 = vpop.permute.xlu0 %3799
      %3801 = vrot.lane.b32.xlu0 %v3742, 8
      %v3802 = vpop.permute.xlu0 %3801
      %3803 = vrot.lane.b32.xlu0 %v3743, 8
      %v3804 = vpop.permute.xlu0 %3803
      %3805 = vrot.lane.b32.xlu0 %v3744, 8
      %v3806 = vpop.permute.xlu0 %3805
      %3807 = vrot.lane.b32.xlu0 %v3745, 8
      %v3808 = vpop.permute.xlu0 %3807
      %v3816 = vsel %vm419, %v3710, %v3775
      %v3817 = vsel %vm419, %v3711, %v3777
      %v3818 = vsel %vm419, %v3712, %v3779
      %v3819 = vsel %vm419, %v3713, %v3781
      %v3820 = vsel %vm419, %v3714, %v3783
      %v3821 = vsel %vm419, %v3715, %v3785
      %v3822 = vsel %vm419, %v3716, %v3787
      %v3823 = vsel %vm3383, %v3816, %v3796
      %v3824 = vsel %vm3383, %v3817, %v3798
      %v3825 = vsel %vm3383, %v3818, %v3800
      %v3826 = vsel %vm3383, %v3819, %v3802
      %v3827 = vsel %vm3383, %v3820, %v3804
      %v3828 = vsel %vm3383, %v3821, %v3806
      %v3829 = vsel %vm3383, %v3822, %v3808
      %v3830 = vsel %vm964, %v3823, 0.0
      %v3831 = vsel %vm964, %v3824, 0.0
      %v3832 = vsel %vm964, %v3825, 0.0
      %v3833 = vsel %vm964, %v3826, 0.0
      %v3834 = vsel %vm964, %v3827, 0.0
      %v3835 = vsel %vm964, %v3828, 0.0
      %v3836 = vsel %vm964, %v3829, 0.0
      %v3837 = vpack.c.bf16 %v3831, %v3830
      %v3838 = vpack.c.bf16 %v3833, %v3832
      %v3839 = vpack.c.bf16 %v3835, %v3834
      %v3840 = vpack.c.bf16 %v3836, %v3836
      %s3841 = scalar_lea.vmem %s7, 8
      %v3842 = vld [vmem:[%s3841] sm:$0xf]
      %v3843 = vld [vmem:[%s3841 + $0x4] sm:$0x3]
      %v3846 = vunpack.c.l.b16 %v3842
      %v3847 = vunpack.c.l.b16 %v3843
      %v3848 = vpack.c.b16 %v3847, %v3846
      %v3850 = vsel %vm3665, %v3837, 0
      %v3853 = vsel %vm3665, %v3838, 0
      %v3856 = vsel %vm3665, %v3839, 0
      %v3859 = vsel %vm3665, %v3840, 0
      %v3862 = vsel %vm1141, %v3848, 0
      %3864 = vmatpush.bf16.msra.mxu0 0
      %3865 = vmatpush.bf16.msra.mxu0 0
      %3866 = vmatpush.bf16.msra.mxu0 0
      %3867 = vmatpush.bf16.msra.mxu0 0
      %3868 = vmatpush.bf16.msra.mxu0 0
      %3869 = vmatpush.bf16.msra.mxu0 0
      %3870 = vmatpush.bf16.msra.mxu0 0
      %3871 = vmatpush.bf16.msra.mxu0 %v3862
      %3872 = vmatmul.bf16.gmra.mxu0 %v3850
      %v3873 = vpop.f32.mrf.mxu0
      %v3874 = vadd.f32 0.0, %v3873
      %v3875 = vpop.f32.mrf.mxu0
      %v3876 = vadd.f32 0.0, %v3875
      %3877 = vmatmul.bf16.gmra.mxu0 %v3853
      %v3878 = vpop.f32.mrf.mxu0
      %v3879 = vadd.f32 0.0, %v3878
      %v3880 = vpop.f32.mrf.mxu0
      %v3881 = vadd.f32 0.0, %v3880
      %3882 = vmatmul.bf16.gmra.mxu0 %v3856
      %v3883 = vpop.f32.mrf.mxu0
      %v3884 = vadd.f32 0.0, %v3883
      %v3885 = vpop.f32.mrf.mxu0
      %v3886 = vadd.f32 0.0, %v3885
      %3887 = vmatmul.bf16.gmra.mxu0 %v3859
      %v3888 = vpop.f32.mrf.mxu0
      %v3889 = vadd.f32 0.0, %v3888
      %v3890 = vpop.f32.mrf.mxu0
      %3891 = vdwg.mxu0
      %v3892 = vadd.f32 %v3691, %v3874
      %v3893 = vadd.f32 %v3693, %v3876
      %v3894 = vadd.f32 %v3696, %v3879
      %v3895 = vadd.f32 %v3698, %v3881
      %v3896 = vadd.f32 %v3701, %v3884
      %v3897 = vadd.f32 %v3703, %v3886
      %v3898 = vadd.f32 %v3706, %v3889
      %s3899 = scalar_lea.vmem [#allocation6], 8
      %v3900 = vld [vmem:[%s3899] sm:$0xff]
      %v3901 = vld [vmem:[%s3899 + $0x10] sm:$0xff]
      %v3902 = vld [vmem:[%s3899 + $0x20] sm:$0xff]
      %v3903 = vld [vmem:[%s3899 + $0x30] sm:$0xff]
      %v3904 = vld [vmem:[%s3899 + $0x40] sm:$0xff]
      %v3905 = vld [vmem:[%s3899 + $0x50] sm:$0xff]
      %v3906 = vld [vmem:[%s3899 + $0x60] sm:$0xff]
      %s3907 = scalar_lea.vmem [#allocation7], 8
      %v3908 = vld [vmem:[%s3907] sm:$0x7f]
      %v3909 = vld [vmem:[%s3907 + $0x10] sm:$0x7f]
      %v3910 = vld [vmem:[%s3907 + $0x20] sm:$0x7f]
      %v3911 = vld [vmem:[%s3907 + $0x30] sm:$0x7f]
      %v3912 = vld [vmem:[%s3907 + $0x40] sm:$0x7f]
      %v3913 = vld [vmem:[%s3907 + $0x50] sm:$0x7f]
      %v3914 = vld [vmem:[%s3907 + $0x60] sm:$0x7f]
      %3922 = vrot.lane.b32.xlu0 %v3908, 64
      %v3923 = vpop.permute.xlu0 %3922
      %3924 = vrot.lane.b32.xlu0 %v3909, 64
      %v3925 = vpop.permute.xlu0 %3924
      %3926 = vrot.lane.b32.xlu0 %v3910, 64
      %v3927 = vpop.permute.xlu0 %3926
      %3928 = vrot.lane.b32.xlu0 %v3911, 64
      %v3929 = vpop.permute.xlu0 %3928
      %3930 = vrot.lane.b32.xlu0 %v3912, 64
      %v3931 = vpop.permute.xlu0 %3930
      %3932 = vrot.lane.b32.xlu0 %v3913, 64
      %v3933 = vpop.permute.xlu0 %3932
      %3934 = vrot.lane.b32.xlu0 %v3914, 64
      %v3935 = vpop.permute.xlu0 %3934
      %v3950 = vrot.slane %v3900, 1
      %v3951 = vrot.slane %v3901, 1
      %v3952 = vrot.slane %v3902, 1
      %v3953 = vrot.slane %v3903, 1
      %v3954 = vrot.slane %v3904, 1
      %v3955 = vrot.slane %v3905, 1
      %v3956 = vrot.slane %v3906, 1
      %v3964 = vsel %vm1350, %v3900, %v3923
      %v3965 = vsel %vm1350, %v3901, %v3925
      %v3966 = vsel %vm1350, %v3902, %v3927
      %v3967 = vsel %vm1350, %v3903, %v3929
      %v3968 = vsel %vm1350, %v3904, %v3931
      %v3969 = vsel %vm1350, %v3905, %v3933
      %v3970 = vsel %vm1350, %v3906, %v3935
      %v3971 = vsel %vm964, %v3964, 0.0
      %v3972 = vsel %vm964, %v3950, 0.0
      %v3973 = vsel %vm964, %v3965, 0.0
      %v3974 = vsel %vm964, %v3951, 0.0
      %v3975 = vsel %vm964, %v3966, 0.0
      %v3976 = vsel %vm964, %v3952, 0.0
      %v3977 = vsel %vm964, %v3967, 0.0
      %v3978 = vsel %vm964, %v3953, 0.0
      %v3979 = vsel %vm964, %v3968, 0.0
      %v3980 = vsel %vm964, %v3954, 0.0
      %v3981 = vsel %vm964, %v3969, 0.0
      %v3982 = vsel %vm964, %v3955, 0.0
      %v3983 = vsel %vm964, %v3970, 0.0
      %v3984 = vsel %vm964, %v3956, 0.0
      %v3985 = vpack.c.bf16 %v3973, %v3971
      %v3986 = vpack.c.bf16 %v3974, %v3972
      %v3987 = vpack.c.bf16 %v3977, %v3975
      %v3988 = vpack.c.bf16 %v3978, %v3976
      %v3989 = vpack.c.bf16 %v3981, %v3979
      %v3990 = vpack.c.bf16 %v3982, %v3980
      %v3991 = vpack.c.bf16 %v3983, %v3983
      %v3992 = vpack.c.bf16 %v3984, %v3984
      %s3993 = scalar_lea.vmem %s8, 96
      %v3994 = vld [vmem:[%s3993] sm:$0xf]
      %v3995 = vld [vmem:[%s3993 + $0x4] sm:$0xf]
      %v3996 = vld [vmem:[%s3993 + $0x8] sm:$0xf]
      %v3997 = vld [vmem:[%s3993 + $0xc] sm:$0xf]
      %v3998 = vld [vmem:[%s3993 + $0x10] sm:$0xf]
      %v3999 = vld [vmem:[%s3993 + $0x14] sm:$0xf]
      %v4000 = vld [vmem:[%s3993 + $0x18] sm:$0xf]
      %v4001 = vld [vmem:[%s3993 + $0x1c] sm:$0xf]
      %v4002 = vld [vmem:[%s3993 + $0x20] sm:$0xf]
      %v4003 = vld [vmem:[%s3993 + $0x24] sm:$0xf]
      %v4004 = vld [vmem:[%s3993 + $0x28] sm:$0xf]
      %v4005 = vld [vmem:[%s3993 + $0x2c] sm:$0xf]
      %v4006 = vld [vmem:[%s3993 + $0x30] sm:$0xf]
      %v4007 = vld [vmem:[%s3993 + $0x34] sm:$0xf]
      %v4008 = vld [vmem:[%s3993 + $0x38] sm:$0xf]
      %v4009 = vld [vmem:[%s3993 + $0x3c] sm:$0xf]
      %v4010 = vld [vmem:[%s3993 + $0x40] sm:$0xf]
      %v4011 = vld [vmem:[%s3993 + $0x44] sm:$0xf]
      %v4012 = vld [vmem:[%s3993 + $0x48] sm:$0xf]
      %v4013 = vld [vmem:[%s3993 + $0x4c] sm:$0xf]
      %v4014 = vld [vmem:[%s3993 + $0x50] sm:$0xf]
      %v4015 = vld [vmem:[%s3993 + $0x54] sm:$0xf]
      %v4016 = vld [vmem:[%s3993 + $0x58] sm:$0xf]
      %v4017 = vld [vmem:[%s3993 + $0x5c] sm:$0xf]
      %v4042 = vunpack.c.l.b16 %v3994
      %v4043 = vunpack.c.l.b16 %v3995
      %v4044 = vunpack.c.l.b16 %v3996
      %v4045 = vunpack.c.l.b16 %v3997
      %v4046 = vunpack.c.l.b16 %v3998
      %v4047 = vunpack.c.l.b16 %v3999
      %v4048 = vunpack.c.l.b16 %v4000
      %v4049 = vunpack.c.l.b16 %v4001
      %v4050 = vunpack.c.l.b16 %v4002
      %v4051 = vunpack.c.l.b16 %v4003
      %v4052 = vunpack.c.l.b16 %v4004
      %v4053 = vunpack.c.l.b16 %v4005
      %v4054 = vunpack.c.l.b16 %v4006
      %v4055 = vunpack.c.l.b16 %v4007
      %v4056 = vunpack.c.l.b16 %v4008
      %v4057 = vunpack.c.l.b16 %v4009
      %v4058 = vunpack.c.l.b16 %v4010
      %v4059 = vunpack.c.l.b16 %v4011
      %v4060 = vunpack.c.l.b16 %v4012
      %v4061 = vunpack.c.l.b16 %v4013
      %v4062 = vunpack.c.l.b16 %v4014
      %v4063 = vunpack.c.l.b16 %v4015
      %v4064 = vunpack.c.l.b16 %v4016
      %v4065 = vunpack.c.l.b16 %v4017
      %v4066 = vpack.c.b16 %v4043, %v4042
      %v4067 = vpack.c.b16 %v4045, %v4044
      %v4068 = vpack.c.b16 %v4047, %v4046
      %v4069 = vpack.c.b16 %v4049, %v4048
      %v4070 = vpack.c.b16 %v4051, %v4050
      %v4071 = vpack.c.b16 %v4053, %v4052
      %v4072 = vpack.c.b16 %v4055, %v4054
      %v4073 = vpack.c.b16 %v4057, %v4056
      %v4074 = vpack.c.b16 %v4059, %v4058
      %v4075 = vpack.c.b16 %v4061, %v4060
      %v4076 = vpack.c.b16 %v4063, %v4062
      %v4077 = vpack.c.b16 %v4065, %v4064
      %v4091 = vsel %vm1350, %v3986, 0
      %v4094 = vsel %vm1350, %v3988, 0
      %v4097 = vsel %vm1350, %v3990, 0
      %v4100 = vsel %vm1350, %v3992, 0
      %4102 = vmatpush.bf16.msra.mxu0 %v4073
      %4103 = vmatpush.bf16.msra.mxu0 %v4072
      %4104 = vmatpush.bf16.msra.mxu0 %v4071
      %4105 = vmatpush.bf16.msra.mxu0 %v4070
      %4106 = vmatpush.bf16.msra.mxu0 %v4069
      %4107 = vmatpush.bf16.msra.mxu0 %v4068
      %4108 = vmatpush.bf16.msra.mxu0 %v4067
      %4109 = vmatpush.bf16.msra.mxu0 %v4066
      %4110 = vmatmul.bf16.gmra.mxu0 %v3985
      %v4111 = vpop.f32.mrf.mxu0
      %v4112 = vadd.f32 0.0, %v4111
      %v4113 = vpop.f32.mrf.mxu0
      %v4114 = vadd.f32 0.0, %v4113
      %4115 = vmatmul.bf16.gmra.mxu0 %v3987
      %v4116 = vpop.f32.mrf.mxu0
      %v4117 = vadd.f32 0.0, %v4116
      %v4118 = vpop.f32.mrf.mxu0
      %v4119 = vadd.f32 0.0, %v4118
      %4120 = vmatmul.bf16.gmra.mxu0 %v3989
      %v4121 = vpop.f32.mrf.mxu0
      %v4122 = vadd.f32 0.0, %v4121
      %v4123 = vpop.f32.mrf.mxu0
      %v4124 = vadd.f32 0.0, %v4123
      %4125 = vmatmul.bf16.gmra.mxu0 %v3991
      %v4126 = vpop.f32.mrf.mxu0
      %v4127 = vadd.f32 0.0, %v4126
      %v4128 = vpop.f32.mrf.mxu0
      %4129 = vdwg.mxu0
      %4130 = vmatpush.bf16.msra.mxu0 0
      %4131 = vmatpush.bf16.msra.mxu0 0
      %4132 = vmatpush.bf16.msra.mxu0 0
      %4133 = vmatpush.bf16.msra.mxu0 0
      %4134 = vmatpush.bf16.msra.mxu0 %v4077
      %4135 = vmatpush.bf16.msra.mxu0 %v4076
      %4136 = vmatpush.bf16.msra.mxu0 %v4075
      %4137 = vmatpush.bf16.msra.mxu0 %v4074
      %4138 = vmatmul.bf16.gmra.mxu0 %v4091
      %v4139 = vpop.f32.mrf.mxu0
      %v4140 = vadd.f32 %v4112, %v4139
      %v4141 = vpop.f32.mrf.mxu0
      %v4142 = vadd.f32 %v4114, %v4141
      %4143 = vmatmul.bf16.gmra.mxu0 %v4094
      %v4144 = vpop.f32.mrf.mxu0
      %v4145 = vadd.f32 %v4117, %v4144
      %v4146 = vpop.f32.mrf.mxu0
      %v4147 = vadd.f32 %v4119, %v4146
      %4148 = vmatmul.bf16.gmra.mxu0 %v4097
      %v4149 = vpop.f32.mrf.mxu0
      %v4150 = vadd.f32 %v4122, %v4149
      %v4151 = vpop.f32.mrf.mxu0
      %v4152 = vadd.f32 %v4124, %v4151
      %4153 = vmatmul.bf16.gmra.mxu0 %v4100
      %v4154 = vpop.f32.mrf.mxu0
      %v4155 = vadd.f32 %v4127, %v4154
      %v4156 = vpop.f32.mrf.mxu0
      %4157 = vdwg.mxu0
      %v4158 = vadd.f32 %v3892, %v4140
      %v4159 = vadd.f32 %v3893, %v4142
      %v4160 = vadd.f32 %v3894, %v4145
      %v4161 = vadd.f32 %v3895, %v4147
      %v4162 = vadd.f32 %v3896, %v4150
      %v4163 = vadd.f32 %v3897, %v4152
      %v4164 = vadd.f32 %v3898, %v4155
      %s4165 = scalar_lea.vmem [#allocation4], 16
      %v4166 = vld [vmem:[%s4165] sm:$0xff]
      %v4167 = vld [vmem:[%s4165 + $0x10] sm:$0xff]
      %v4168 = vld [vmem:[%s4165 + $0x20] sm:$0xff]
      %v4169 = vld [vmem:[%s4165 + $0x30] sm:$0xff]
      %v4170 = vld [vmem:[%s4165 + $0x40] sm:$0xff]
      %v4171 = vld [vmem:[%s4165 + $0x50] sm:$0xff]
      %v4172 = vld [vmem:[%s4165 + $0x60] sm:$0xff]
      %s4173 = scalar_lea.vmem [#allocation5], 16
      %v4174 = vld [vmem:[%s4173] sm:$0x7f]
      %v4175 = vld [vmem:[%s4173 + $0x10] sm:$0x7f]
      %v4176 = vld [vmem:[%s4173 + $0x20] sm:$0x7f]
      %v4177 = vld [vmem:[%s4173 + $0x30] sm:$0x7f]
      %v4178 = vld [vmem:[%s4173 + $0x40] sm:$0x7f]
      %v4179 = vld [vmem:[%s4173 + $0x50] sm:$0x7f]
      %v4180 = vld [vmem:[%s4173 + $0x60] sm:$0x7f]
      %v4181 = vmax.f32 %v4166, %v4174
      %v4182 = vmax.f32 %v4167, %v4175
      %v4183 = vmax.f32 %v4168, %v4176
      %v4184 = vmax.f32 %v4169, %v4177
      %v4185 = vmax.f32 %v4170, %v4178
      %v4186 = vmax.f32 %v4171, %v4179
      %v4187 = vmax.f32 %v4172, %v4180
      %v4195 = vrot.slane %v4166, 1
      %v4196 = vrot.slane %v4167, 1
      %v4197 = vrot.slane %v4168, 1
      %v4198 = vrot.slane %v4169, 1
      %v4199 = vrot.slane %v4170, 1
      %v4200 = vrot.slane %v4171, 1
      %v4201 = vrot.slane %v4172, 1
      %v4209 = vmax.f32 %v4181, %v4195
      %v4210 = vmax.f32 %v4182, %v4196
      %v4211 = vmax.f32 %v4183, %v4197
      %v4212 = vmax.f32 %v4184, %v4198
      %v4213 = vmax.f32 %v4185, %v4199
      %v4214 = vmax.f32 %v4186, %v4200
      %v4215 = vmax.f32 %v4187, %v4201
      %v4216 = vmax.f32 %v3760, %v4209
      %v4217 = vmax.f32 %v3761, %v4210
      %v4218 = vmax.f32 %v3762, %v4211
      %v4219 = vmax.f32 %v3763, %v4212
      %v4220 = vmax.f32 %v3764, %v4213
      %v4221 = vmax.f32 %v3765, %v4214
      %v4222 = vmax.f32 %v3766, %v4215
      %4230 = vrot.lane.b32.xlu0 %v4174, 4
      %v4231 = vpop.permute.xlu0 %4230
      %4232 = vrot.lane.b32.xlu0 %v4175, 4
      %v4233 = vpop.permute.xlu0 %4232
      %4234 = vrot.lane.b32.xlu0 %v4176, 4
      %v4235 = vpop.permute.xlu0 %4234
      %4236 = vrot.lane.b32.xlu0 %v4177, 4
      %v4237 = vpop.permute.xlu0 %4236
      %4238 = vrot.lane.b32.xlu0 %v4178, 4
      %v4239 = vpop.permute.xlu0 %4238
      %4240 = vrot.lane.b32.xlu0 %v4179, 4
      %v4241 = vpop.permute.xlu0 %4240
      %4242 = vrot.lane.b32.xlu0 %v4180, 4
      %v4243 = vpop.permute.xlu0 %4242
      %4251 = vrot.lane.b32.xlu0 %v4195, 8
      %v4252 = vpop.permute.xlu0 %4251
      %4253 = vrot.lane.b32.xlu0 %v4196, 8
      %v4254 = vpop.permute.xlu0 %4253
      %4255 = vrot.lane.b32.xlu0 %v4197, 8
      %v4256 = vpop.permute.xlu0 %4255
      %4257 = vrot.lane.b32.xlu0 %v4198, 8
      %v4258 = vpop.permute.xlu0 %4257
      %4259 = vrot.lane.b32.xlu0 %v4199, 8
      %v4260 = vpop.permute.xlu0 %4259
      %4261 = vrot.lane.b32.xlu0 %v4200, 8
      %v4262 = vpop.permute.xlu0 %4261
      %4263 = vrot.lane.b32.xlu0 %v4201, 8
      %v4264 = vpop.permute.xlu0 %4263
      %v4272 = vsel %vm419, %v4166, %v4231
      %v4273 = vsel %vm419, %v4167, %v4233
      %v4274 = vsel %vm419, %v4168, %v4235
      %v4275 = vsel %vm419, %v4169, %v4237
      %v4276 = vsel %vm419, %v4170, %v4239
      %v4277 = vsel %vm419, %v4171, %v4241
      %v4278 = vsel %vm419, %v4172, %v4243
      %v4279 = vsel %vm3383, %v4272, %v4252
      %v4280 = vsel %vm3383, %v4273, %v4254
      %v4281 = vsel %vm3383, %v4274, %v4256
      %v4282 = vsel %vm3383, %v4275, %v4258
      %v4283 = vsel %vm3383, %v4276, %v4260
      %v4284 = vsel %vm3383, %v4277, %v4262
      %v4285 = vsel %vm3383, %v4278, %v4264
      %v4286 = vsel %vm964, %v4279, 0.0
      %v4287 = vsel %vm964, %v4280, 0.0
      %v4288 = vsel %vm964, %v4281, 0.0
      %v4289 = vsel %vm964, %v4282, 0.0
      %v4290 = vsel %vm964, %v4283, 0.0
      %v4291 = vsel %vm964, %v4284, 0.0
      %v4292 = vsel %vm964, %v4285, 0.0
      %v4293 = vpack.c.bf16 %v4287, %v4286
      %v4294 = vpack.c.bf16 %v4289, %v4288
      %v4295 = vpack.c.bf16 %v4291, %v4290
      %v4296 = vpack.c.bf16 %v4292, %v4292
      %s4297 = scalar_lea.vmem %s7, 16
      %v4298 = vld [vmem:[%s4297] sm:$0xf]
      %v4299 = vld [vmem:[%s4297 + $0x4] sm:$0x3]
      %v4302 = vunpack.c.l.b16 %v4298
      %v4303 = vunpack.c.l.b16 %v4299
      %v4304 = vpack.c.b16 %v4303, %v4302
      %v4306 = vsel %vm3665, %v4293, 0
      %v4309 = vsel %vm3665, %v4294, 0
      %v4312 = vsel %vm3665, %v4295, 0
      %v4315 = vsel %vm3665, %v4296, 0
      %v4318 = vsel %vm1141, %v4304, 0
      %4320 = vmatpush.bf16.msra.mxu0 0
      %4321 = vmatpush.bf16.msra.mxu0 0
      %4322 = vmatpush.bf16.msra.mxu0 0
      %4323 = vmatpush.bf16.msra.mxu0 0
      %4324 = vmatpush.bf16.msra.mxu0 0
      %4325 = vmatpush.bf16.msra.mxu0 0
      %4326 = vmatpush.bf16.msra.mxu0 0
      %4327 = vmatpush.bf16.msra.mxu0 %v4318
      %4328 = vmatmul.bf16.gmra.mxu0 %v4306
      %v4329 = vpop.f32.mrf.mxu0
      %v4330 = vadd.f32 0.0, %v4329
      %v4331 = vpop.f32.mrf.mxu0
      %v4332 = vadd.f32 0.0, %v4331
      %4333 = vmatmul.bf16.gmra.mxu0 %v4309
      %v4334 = vpop.f32.mrf.mxu0
      %v4335 = vadd.f32 0.0, %v4334
      %v4336 = vpop.f32.mrf.mxu0
      %v4337 = vadd.f32 0.0, %v4336
      %4338 = vmatmul.bf16.gmra.mxu0 %v4312
      %v4339 = vpop.f32.mrf.mxu0
      %v4340 = vadd.f32 0.0, %v4339
      %v4341 = vpop.f32.mrf.mxu0
      %v4342 = vadd.f32 0.0, %v4341
      %4343 = vmatmul.bf16.gmra.mxu0 %v4315
      %v4344 = vpop.f32.mrf.mxu0
      %v4345 = vadd.f32 0.0, %v4344
      %v4346 = vpop.f32.mrf.mxu0
      %4347 = vdwg.mxu0
      %v4348 = vadd.f32 %v4158, %v4330
      %v4349 = vadd.f32 %v4159, %v4332
      %v4350 = vadd.f32 %v4160, %v4335
      %v4351 = vadd.f32 %v4161, %v4337
      %v4352 = vadd.f32 %v4162, %v4340
      %v4353 = vadd.f32 %v4163, %v4342
      %v4354 = vadd.f32 %v4164, %v4345
      %s4355 = scalar_lea.vmem [#allocation6], 16
      %v4356 = vld [vmem:[%s4355] sm:$0xff]
      %v4357 = vld [vmem:[%s4355 + $0x10] sm:$0xff]
      %v4358 = vld [vmem:[%s4355 + $0x20] sm:$0xff]
      %v4359 = vld [vmem:[%s4355 + $0x30] sm:$0xff]
      %v4360 = vld [vmem:[%s4355 + $0x40] sm:$0xff]
      %v4361 = vld [vmem:[%s4355 + $0x50] sm:$0xff]
      %v4362 = vld [vmem:[%s4355 + $0x60] sm:$0xff]
      %s4363 = scalar_lea.vmem [#allocation7], 16
      %v4364 = vld [vmem:[%s4363] sm:$0x7f]
      %v4365 = vld [vmem:[%s4363 + $0x10] sm:$0x7f]
      %v4366 = vld [vmem:[%s4363 + $0x20] sm:$0x7f]
      %v4367 = vld [vmem:[%s4363 + $0x30] sm:$0x7f]
      %v4368 = vld [vmem:[%s4363 + $0x40] sm:$0x7f]
      %v4369 = vld [vmem:[%s4363 + $0x50] sm:$0x7f]
      %v4370 = vld [vmem:[%s4363 + $0x60] sm:$0x7f]
      %4378 = vrot.lane.b32.xlu0 %v4364, 64
      %v4379 = vpop.permute.xlu0 %4378
      %4380 = vrot.lane.b32.xlu0 %v4365, 64
      %v4381 = vpop.permute.xlu0 %4380
      %4382 = vrot.lane.b32.xlu0 %v4366, 64
      %v4383 = vpop.permute.xlu0 %4382
      %4384 = vrot.lane.b32.xlu0 %v4367, 64
      %v4385 = vpop.permute.xlu0 %4384
      %4386 = vrot.lane.b32.xlu0 %v4368, 64
      %v4387 = vpop.permute.xlu0 %4386
      %4388 = vrot.lane.b32.xlu0 %v4369, 64
      %v4389 = vpop.permute.xlu0 %4388
      %4390 = vrot.lane.b32.xlu0 %v4370, 64
      %v4391 = vpop.permute.xlu0 %4390
      %v4406 = vrot.slane %v4356, 1
      %v4407 = vrot.slane %v4357, 1
      %v4408 = vrot.slane %v4358, 1
      %v4409 = vrot.slane %v4359, 1
      %v4410 = vrot.slane %v4360, 1
      %v4411 = vrot.slane %v4361, 1
      %v4412 = vrot.slane %v4362, 1
      %v4420 = vsel %vm1350, %v4356, %v4379
      %v4421 = vsel %vm1350, %v4357, %v4381
      %v4422 = vsel %vm1350, %v4358, %v4383
      %v4423 = vsel %vm1350, %v4359, %v4385
      %v4424 = vsel %vm1350, %v4360, %v4387
      %v4425 = vsel %vm1350, %v4361, %v4389
      %v4426 = vsel %vm1350, %v4362, %v4391
      %v4427 = vsel %vm964, %v4420, 0.0
      %v4428 = vsel %vm964, %v4406, 0.0
      %v4429 = vsel %vm964, %v4421, 0.0
      %v4430 = vsel %vm964, %v4407, 0.0
      %v4431 = vsel %vm964, %v4422, 0.0
      %v4432 = vsel %vm964, %v4408, 0.0
      %v4433 = vsel %vm964, %v4423, 0.0
      %v4434 = vsel %vm964, %v4409, 0.0
      %v4435 = vsel %vm964, %v4424, 0.0
      %v4436 = vsel %vm964, %v4410, 0.0
      %v4437 = vsel %vm964, %v4425, 0.0
      %v4438 = vsel %vm964, %v4411, 0.0
      %v4439 = vsel %vm964, %v4426, 0.0
      %v4440 = vsel %vm964, %v4412, 0.0
      %v4441 = vpack.c.bf16 %v4429, %v4427
      %v4442 = vpack.c.bf16 %v4430, %v4428
      %v4443 = vpack.c.bf16 %v4433, %v4431
      %v4444 = vpack.c.bf16 %v4434, %v4432
      %v4445 = vpack.c.bf16 %v4437, %v4435
      %v4446 = vpack.c.bf16 %v4438, %v4436
      %v4447 = vpack.c.bf16 %v4439, %v4439
      %v4448 = vpack.c.bf16 %v4440, %v4440
      %s4449 = scalar_lea.vmem %s8, 192
      %v4450 = vld [vmem:[%s4449] sm:$0xf]
      %v4451 = vld [vmem:[%s4449 + $0x4] sm:$0xf]
      %v4452 = vld [vmem:[%s4449 + $0x8] sm:$0xf]
      %v4453 = vld [vmem:[%s4449 + $0xc] sm:$0xf]
      %v4454 = vld [vmem:[%s4449 + $0x10] sm:$0xf]
      %v4455 = vld [vmem:[%s4449 + $0x14] sm:$0xf]
      %v4456 = vld [vmem:[%s4449 + $0x18] sm:$0xf]
      %v4457 = vld [vmem:[%s4449 + $0x1c] sm:$0xf]
      %v4458 = vld [vmem:[%s4449 + $0x20] sm:$0xf]
      %v4459 = vld [vmem:[%s4449 + $0x24] sm:$0xf]
      %v4460 = vld [vmem:[%s4449 + $0x28] sm:$0xf]
      %v4461 = vld [vmem:[%s4449 + $0x2c] sm:$0xf]
      %v4462 = vld [vmem:[%s4449 + $0x30] sm:$0xf]
      %v4463 = vld [vmem:[%s4449 + $0x34] sm:$0xf]
      %v4464 = vld [vmem:[%s4449 + $0x38] sm:$0xf]
      %v4465 = vld [vmem:[%s4449 + $0x3c] sm:$0xf]
      %v4466 = vld [vmem:[%s4449 + $0x40] sm:$0xf]
      %v4467 = vld [vmem:[%s4449 + $0x44] sm:$0xf]
      %v4468 = vld [vmem:[%s4449 + $0x48] sm:$0xf]
      %v4469 = vld [vmem:[%s4449 + $0x4c] sm:$0xf]
      %v4470 = vld [vmem:[%s4449 + $0x50] sm:$0xf]
      %v4471 = vld [vmem:[%s4449 + $0x54] sm:$0xf]
      %v4472 = vld [vmem:[%s4449 + $0x58] sm:$0xf]
      %v4473 = vld [vmem:[%s4449 + $0x5c] sm:$0xf]
      %v4498 = vunpack.c.l.b16 %v4450
      %v4499 = vunpack.c.l.b16 %v4451
      %v4500 = vunpack.c.l.b16 %v4452
      %v4501 = vunpack.c.l.b16 %v4453
      %v4502 = vunpack.c.l.b16 %v4454
      %v4503 = vunpack.c.l.b16 %v4455
      %v4504 = vunpack.c.l.b16 %v4456
      %v4505 = vunpack.c.l.b16 %v4457
      %v4506 = vunpack.c.l.b16 %v4458
      %v4507 = vunpack.c.l.b16 %v4459
      %v4508 = vunpack.c.l.b16 %v4460
      %v4509 = vunpack.c.l.b16 %v4461
      %v4510 = vunpack.c.l.b16 %v4462
      %v4511 = vunpack.c.l.b16 %v4463
      %v4512 = vunpack.c.l.b16 %v4464
      %v4513 = vunpack.c.l.b16 %v4465
      %v4514 = vunpack.c.l.b16 %v4466
      %v4515 = vunpack.c.l.b16 %v4467
      %v4516 = vunpack.c.l.b16 %v4468
      %v4517 = vunpack.c.l.b16 %v4469
      %v4518 = vunpack.c.l.b16 %v4470
      %v4519 = vunpack.c.l.b16 %v4471
      %v4520 = vunpack.c.l.b16 %v4472
      %v4521 = vunpack.c.l.b16 %v4473
      %v4522 = vpack.c.b16 %v4499, %v4498
      %v4523 = vpack.c.b16 %v4501, %v4500
      %v4524 = vpack.c.b16 %v4503, %v4502
      %v4525 = vpack.c.b16 %v4505, %v4504
      %v4526 = vpack.c.b16 %v4507, %v4506
      %v4527 = vpack.c.b16 %v4509, %v4508
      %v4528 = vpack.c.b16 %v4511, %v4510
      %v4529 = vpack.c.b16 %v4513, %v4512
      %v4530 = vpack.c.b16 %v4515, %v4514
      %v4531 = vpack.c.b16 %v4517, %v4516
      %v4532 = vpack.c.b16 %v4519, %v4518
      %v4533 = vpack.c.b16 %v4521, %v4520
      %v4547 = vsel %vm1350, %v4442, 0
      %v4550 = vsel %vm1350, %v4444, 0
      %v4553 = vsel %vm1350, %v4446, 0
      %v4556 = vsel %vm1350, %v4448, 0
      %4558 = vmatpush.bf16.msra.mxu0 %v4529
      %4559 = vmatpush.bf16.msra.mxu0 %v4528
      %4560 = vmatpush.bf16.msra.mxu0 %v4527
      %4561 = vmatpush.bf16.msra.mxu0 %v4526
      %4562 = vmatpush.bf16.msra.mxu0 %v4525
      %4563 = vmatpush.bf16.msra.mxu0 %v4524
      %4564 = vmatpush.bf16.msra.mxu0 %v4523
      %4565 = vmatpush.bf16.msra.mxu0 %v4522
      %4566 = vmatmul.bf16.gmra.mxu0 %v4441
      %v4567 = vpop.f32.mrf.mxu0
      %v4568 = vadd.f32 0.0, %v4567
      %v4569 = vpop.f32.mrf.mxu0
      %v4570 = vadd.f32 0.0, %v4569
      %4571 = vmatmul.bf16.gmra.mxu0 %v4443
      %v4572 = vpop.f32.mrf.mxu0
      %v4573 = vadd.f32 0.0, %v4572
      %v4574 = vpop.f32.mrf.mxu0
      %v4575 = vadd.f32 0.0, %v4574
      %4576 = vmatmul.bf16.gmra.mxu0 %v4445
      %v4577 = vpop.f32.mrf.mxu0
      %v4578 = vadd.f32 0.0, %v4577
      %v4579 = vpop.f32.mrf.mxu0
      %v4580 = vadd.f32 0.0, %v4579
      %4581 = vmatmul.bf16.gmra.mxu0 %v4447
      %v4582 = vpop.f32.mrf.mxu0
      %v4583 = vadd.f32 0.0, %v4582
      %v4584 = vpop.f32.mrf.mxu0
      %4585 = vdwg.mxu0
      %4586 = vmatpush.bf16.msra.mxu0 0
      %4587 = vmatpush.bf16.msra.mxu0 0
      %4588 = vmatpush.bf16.msra.mxu0 0
      %4589 = vmatpush.bf16.msra.mxu0 0
      %4590 = vmatpush.bf16.msra.mxu0 %v4533
      %4591 = vmatpush.bf16.msra.mxu0 %v4532
      %4592 = vmatpush.bf16.msra.mxu0 %v4531
      %4593 = vmatpush.bf16.msra.mxu0 %v4530
      %4594 = vmatmul.bf16.gmra.mxu0 %v4547
      %v4595 = vpop.f32.mrf.mxu0
      %v4596 = vadd.f32 %v4568, %v4595
      %v4597 = vpop.f32.mrf.mxu0
      %v4598 = vadd.f32 %v4570, %v4597
      %4599 = vmatmul.bf16.gmra.mxu0 %v4550
      %v4600 = vpop.f32.mrf.mxu0
      %v4601 = vadd.f32 %v4573, %v4600
      %v4602 = vpop.f32.mrf.mxu0
      %v4603 = vadd.f32 %v4575, %v4602
      %4604 = vmatmul.bf16.gmra.mxu0 %v4553
      %v4605 = vpop.f32.mrf.mxu0
      %v4606 = vadd.f32 %v4578, %v4605
      %v4607 = vpop.f32.mrf.mxu0
      %v4608 = vadd.f32 %v4580, %v4607
      %4609 = vmatmul.bf16.gmra.mxu0 %v4556
      %v4610 = vpop.f32.mrf.mxu0
      %v4611 = vadd.f32 %v4583, %v4610
      %v4612 = vpop.f32.mrf.mxu0
      %4613 = vdwg.mxu0
      %v4614 = vadd.f32 %v4348, %v4596
      %v4615 = vadd.f32 %v4349, %v4598
      %v4616 = vadd.f32 %v4350, %v4601
      %v4617 = vadd.f32 %v4351, %v4603
      %v4618 = vadd.f32 %v4352, %v4606
      %v4619 = vadd.f32 %v4353, %v4608
      %v4620 = vadd.f32 %v4354, %v4611
      %v4621 = vld [vmem:[%s9] sm:$0x1]
      %v4623 = vperm.slane %v4621, 0
      %v4625 = vmul.f32 %v4614, %v4623
      %v4626 = vmul.f32 %v4615, %v4623
      %v4627 = vmul.f32 %v4616, %v4623
      %v4628 = vmul.f32 %v4617, %v4623
      %v4629 = vmul.f32 %v4618, %v4623
      %v4630 = vmul.f32 %v4619, %v4623
      %v4631 = vmul.f32 %v4620, %v4623
      %v4632 = vld [vmem:[%s10] sm:$0x1]
      %v4634 = vperm.slane %v4632, 0
      %v4636 = vadd.f32 %v4625, %v4634
      %v4637 = vadd.f32 %v4626, %v4634
      %v4638 = vadd.f32 %v4627, %v4634
      %v4639 = vadd.f32 %v4628, %v4634
      %v4640 = vadd.f32 %v4629, %v4634
      %v4641 = vadd.f32 %v4630, %v4634
      %v4642 = vadd.f32 %v4631, %v4634
      %v4643 = vmax.f32 %v4636, 0.0
      %v4644 = vmax.f32 %v4637, 0.0
      %v4645 = vmax.f32 %v4638, 0.0
      %v4646 = vmax.f32 %v4639, 0.0
      %v4647 = vmax.f32 %v4640, 0.0
      %v4648 = vmax.f32 %v4641, 0.0
      %v4649 = vmax.f32 %v4642, 0.0
      %4650 = vst [vmem:[%s386] sm:$0x7f] %v4643
      %4651 = vst [vmem:[%s386 + $0x10] sm:$0x7f] %v4644
      %4652 = vst [vmem:[%s386 + $0x20] sm:$0x7f] %v4645
      %4653 = vst [vmem:[%s386 + $0x30] sm:$0x7f] %v4646
      %4654 = vst [vmem:[%s386 + $0x40] sm:$0x7f] %v4647
      %4655 = vst [vmem:[%s386 + $0x50] sm:$0x7f] %v4648
      %4656 = vst [vmem:[%s386 + $0x60] sm:$0x7f] %v4649
      %4657 = vst.msk [vmem:[%s386 + $0x8] sm:$0x7f] %vm468, %v4216
      %4658 = vst.msk [vmem:[%s386 + $0x18] sm:$0x7f] %vm468, %v4217
      %4659 = vst.msk [vmem:[%s386 + $0x28] sm:$0x7f] %vm468, %v4218
      %4660 = vst.msk [vmem:[%s386 + $0x38] sm:$0x7f] %vm468, %v4219
      %4661 = vst.msk [vmem:[%s386 + $0x48] sm:$0x7f] %vm468, %v4220
      %4662 = vst.msk [vmem:[%s386 + $0x58] sm:$0x7f] %vm468, %v4221
      %4663 = vst.msk [vmem:[%s386 + $0x68] sm:$0x7f] %vm468, %v4222
      %p4664 = scmp.lt.s32.totalorder %s22, 1
      %s4665 = scalar_select %p4664, %s22, 1
      %s4666 = smul.addr %s4665, 14
      %s4667 = smul.addr %s4666, 8
      %s4668 = scalar_lea.vmem %s11, %s4667
      // Predicated region
      $region65: #{inception_b_forward.1} parent=63 // pred_check
        %p4669 = pneg %p276
      $region66: #{inception_b_forward.1} parent=63 // pred_check_branch
        %4671 = sbr.rel (%p4669) target = $region68
      $region67: #{inception_b_forward.1} parent=63 // pred_region
        _
      $region68: #{inception_b_forward.1} parent=63 // pred_fallthru
        _
    $region64: #{inception_b_forward.1} parent=5 // pred_fallthru
      _
    %p4672 = scmp.le.s32.totalorder 2, %s17
    // Predicated region
    $region69: #{inception_b_forward.1} parent=5 // pred_check
      %p4673 = pneg %p4672
    $region70: #{inception_b_forward.1} parent=5 // pred_check_branch
      %4675 = sbr.rel (%p4673) target = $region72
    $region71: #{inception_b_forward.1} parent=5 // pred_region
      %s4676 = ssub.s32 %s17, 2
      // Predicated region
      $region73: #{inception_b_forward.1} parent=71 // pred_check
        %p4677 = pneg %p282
      $region74: #{inception_b_forward.1} parent=71 // pred_check_branch
        %4679 = sbr.rel (%p4677) target = $region76
      $region75: #{inception_b_forward.1} parent=71 // pred_region
        %p4680 = scmp.lt.s32.totalorder %s23, 1
        %s4681 = scalar_select %p4680, %s23, 1
        %s4682 = smul.addr %s4681, 14
        %s4683 = smul.addr %s4682, 8
        %s4684 = scalar_lea.vmem %s11, %s4683
      $region76: #{inception_b_forward.1} parent=71 // pred_fallthru
        _
    $region72: #{inception_b_forward.1} parent=5 // pred_fallthru
      _
  $region6: #{inception_b_forward.1} parent=0 // loop_footer
    %s21 = sadd.s32 1, %s17
  $region7: #{inception_b_forward.1} parent=0 // loop_footer_branch
    %16 = sbr.rel target = $region3
  $region8: #{inception_b_forward.1} parent=0 // loop_exit
    _

</llo_original>
